<compile_context>
chip_gen: v6e
topology: v6e:2x2x1
jax: 0.10.0
libtpu: 0.0.40
codegen_flags: <defaults>
</compile_context>

<pallas_src>
import math
from functools import partial

import jax
import jax.numpy as jnp
from jax import lax
from jax.experimental import pallas as pl
from jax.experimental.pallas import tpu as pltpu  # noqa: F401  (TPU backend assumed)

F32 = jnp.float32

# packed parameter-row indices (rows of the (9, E) `vecs` input)
_C1B, _C2B, _TOG, _TOB, _LNG, _LNB, _FFB2, _LN2G, _LN2B = range(9)


# ----------------------------- in-kernel helpers -----------------------------

def _erf(x):
    # Abramowitz & Stegun 7.1.26 polynomial erf (|err| < 1.5e-7) so the exact
    # (erf-based) torch.nn.GELU semantics are reproduced with ops guaranteed to
    # lower on the TPU VPU/EUP.
    a1, a2, a3, a4, a5 = 0.254829592, -0.284496736, 1.421413741, -1.453152027, 1.061405429
    p = 0.3275911
    sgn = jnp.where(x >= 0.0, 1.0, -1.0)
    ax = jnp.abs(x)
    t = 1.0 / (1.0 + p * ax)
    poly = ((((a5 * t + a4) * t + a3) * t + a2) * t + a1) * t
    return sgn * (1.0 - poly * jnp.exp(-ax * ax))


def _gelu(x):
    return 0.5 * x * (1.0 + _erf(x * (1.0 / math.sqrt(2.0))))


def _layernorm(x, gamma_row, beta_row, eps=1e-5):
    mu = jnp.mean(x, axis=-1, keepdims=True)
    var = jnp.mean(jnp.square(x - mu), axis=-1, keepdims=True)
    return (x - mu) * lax.rsqrt(var + eps) * gamma_row + beta_row


# ------------------------------- fused kernel --------------------------------

def _fused_kernel(x_ref, shifts_ref, w1_ref, w2_ref, wqkv_ref, pe_ref,
                  premask_ref, postbias_ref, hm_big_ref, expand_ref, collapse_ref,
                  vecs_ref, ffw1_ref, ffb1_ref, ffw2_ref, gapmat_ref, outw_ref, outb_ref,
                  out_ref, gap_ref, logits_ref):
    vecs = vecs_ref[...]                                    # (9, E) packed rows
    vrow = lambda i: vecs[i:i + 1, :]                       # (1, E)
    sdown = shifts_ref[0]                                   # (BS, BS)
    sup = shifts_ref[1]                                     # (BS, BS)

    # ---- Conv1d(k=3, pad=1) + folded BatchNorm + GELU, sequence-major layout --
    def conv_bn_gelu(inp, w_ref, bias_row):
        # shift matrices provide the zero padding AND keep batch elements isolated
        t0 = jnp.dot(inp, w_ref[0], preferred_element_type=F32)   # tap x[s-1]
        t1 = jnp.dot(inp, w_ref[1], preferred_element_type=F32)   # tap x[s]
        t2 = jnp.dot(inp, w_ref[2], preferred_element_type=F32)   # tap x[s+1]
        y = (jnp.dot(sdown, t0, preferred_element_type=F32) + t1
             + jnp.dot(sup, t2, preferred_element_type=F32) + bias_row)
        return _gelu(y)

    h1 = conv_bn_gelu(x_ref[...], w1_ref, vrow(_C1B))       # (BS, E)
    x_src = conv_bn_gelu(h1, w2_ref, vrow(_C2B))            # (BS, E)

    # ---- tAPE ('Sin') + Attention_Rel_Scl (head-batched, block-diagonal) ------
    xpe = x_src + pe_ref[...]
    q = jnp.dot(xpe, wqkv_ref[0], preferred_element_type=F32)   # scale folded into Wq
    k = jnp.dot(xpe, wqkv_ref[1], preferred_element_type=F32)
    v = jnp.dot(xpe, wqkv_ref[2], preferred_element_type=F32)

    hm_big = hm_big_ref[...]                                 # (H*BS, E) head channel mask
    qbd = jnp.dot(expand_ref[...], q, preferred_element_type=F32) * hm_big   # (H*BS, E)
    scores = lax.dot_general(qbd, k, dimension_numbers=(((1,), (1,)), ((), ())),
                             preferred_element_type=F32)     # (H*BS, BS)
    scores = scores + premask_ref[...]                       # -1e9 across batch boundaries
    m = jnp.max(scores, axis=-1, keepdims=True)
    p = jnp.exp(scores - m)
    attn = p * pl.reciprocal(jnp.sum(p, axis=-1, keepdims=True), approx=True)
    attn = attn + postbias_ref[...]                          # eRPE bias (added AFTER softmax)
    out_big = jnp.dot(attn, v, preferred_element_type=F32)   # (H*BS, E)
    att_out = jnp.dot(collapse_ref[...], out_big * hm_big,
                      preferred_element_type=F32)            # (BS, E) merged heads

    att_out = _layernorm(att_out, vrow(_TOG), vrow(_TOB))    # attention to_out LayerNorm
    att = _layernorm(x_src + att_out, vrow(_LNG), vrow(_LNB))  # residual + LayerNorm

    # ---- FeedForward + residual + LayerNorm2 ---------------------------------
    h = jnp.dot(att, ffw1_ref[...], preferred_element_type=F32) + ffb1_ref[...]
    h = jnp.maximum(h, 0.0)                                  # ReLU
    y = jnp.dot(h, ffw2_ref[...], preferred_element_type=F32) + vrow(_FFB2)
    out = _layernorm(att + y, vrow(_LN2G), vrow(_LN2B))
    out_ref[...] = out                                       # (BS, E)

    # ---- GAP (AdaptiveAvgPool1d(1)) + output Linear --------------------------
    gap = jnp.dot(gapmat_ref[...], out, preferred_element_type=F32)    # (B, E)
    gap_ref[...] = gap
    logits_ref[...] = jnp.dot(gap, outw_ref[...], preferred_element_type=F32) + outb_ref[...]


# -------------------------------- full forward --------------------------------

def casual_convtran_forward(x, p, *, num_heads):
    """x: (B, seq_len, channel_size) — same tensor the PyTorch forward receives."""
    B, S, C = x.shape
    E = p['conv1_w'].shape[0]
    H = num_heads
    d = E // H
    BS = B * S
    DFF = p['ff_w1'].shape[0]
    NC = p['out_w'].shape[0]
    f32 = lambda a: a.astype(F32)

    # --- fold BatchNorm (eval mode) into conv weights / bias (host glue) ---
    def fold_conv(w, b, g, be, m, v):
        s = g * lax.rsqrt(v + 1e-5)
        w_taps = jnp.transpose(f32(w), (2, 1, 0)) * s[None, None, :]   # (3, Cin, Cout)
        return f32(w_taps), f32((b - m) * s + be)

    w1_t, b1_f = fold_conv(p['conv1_w'], p['conv1_b'], p['bn1_g'], p['bn1_b'], p['bn1_m'], p['bn1_v'])
    w2_t, b2_f = fold_conv(p['conv2_w'], p['conv2_b'], p['bn2_g'], p['bn2_b'], p['bn2_m'], p['bn2_v'])

    idx = jnp.arange(BS)
    within = idx % S
    batch_of = idx // S

    # conv tap shift matrices: zero pad at sequence edges, block-diag over batch
    sdown = ((idx[:, None] == idx[None, :] + 1) & (within[:, None] != 0)).astype(F32)
    sup = ((idx[:, None] == idx[None, :] - 1) & (within[:, None] != S - 1)).astype(F32)
    shifts = jnp.stack([sdown, sup])                         # (2, BS, BS)

    # tAPE ('Sin') positional-encoding table, tiled over batch (construction = glue)
    pos = jnp.arange(S, dtype=F32)[:, None]
    div = jnp.exp(jnp.arange(0, E, 2, dtype=F32) * (-math.log(10000.0) / E))
    ang = pos * div[None, :] * (E / S)
    pe = jnp.zeros((S, E), F32).at[:, 0::2].set(jnp.sin(ang)).at[:, 1::2].set(jnp.cos(ang))
    pe_full = jnp.tile(pe, (B, 1))                           # (BS, E)

    # eRPE relative bias (post-softmax), block-diagonal over batch, plus the
    # pre-softmax -1e9 mask that keeps folded batch elements independent.
    same = batch_of[:, None] == batch_of[None, :]
    rel_idx = within[:, None] - within[None, :] + (S - 1)
    bias_hij = jnp.transpose(f32(p['rel_table'])[rel_idx], (2, 0, 1))   # (H, BS, BS)
    postbias = jnp.where(same[None], bias_hij, 0.0).reshape(H * BS, BS)
    premask = jnp.tile(jnp.where(same, 0.0, -1e9).astype(F32), (H, 1))  # (H*BS, BS)

    # block-diagonal head helpers (heads batched onto sublanes, all 2-D)
    hm = (jnp.arange(H)[:, None] == (jnp.arange(E) // d)[None, :]).astype(F32)  # (H, E)
    hm_big = jnp.repeat(hm, BS, axis=0)                                         # (H*BS, E)
    expand = (jnp.tile(idx, (H,))[:, None] == idx[None, :]).astype(F32)         # (H*BS, BS)
    collapse = expand.T                                                         # (BS, H*BS)

    scale = float(E) ** (-0.5)                               # reference uses emb_size**-0.5
    wqkv = jnp.stack([f32(p['wq']).T * scale, f32(p['wk']).T, f32(p['wv']).T])  # (3, E, E)
    vecs = jnp.stack([b1_f, b2_f, f32(p['to_g']), f32(p['to_b']),
                      f32(p['ln_g']), f32(p['ln_b']), f32(p['ff_b2']),
                      f32(p['ln2_g']), f32(p['ln2_b'])])                        # (9, E)
    gapmat = jnp.where(jnp.arange(B)[:, None] == batch_of[None, :], 1.0 / S, 0.0).astype(F32)

    out_flat, gap, logits = pl.pallas_call(
        _fused_kernel,
        out_shape=(jax.ShapeDtypeStruct((BS, E), F32),
                   jax.ShapeDtypeStruct((B, E), F32),
                   jax.ShapeDtypeStruct((B, NC), F32)),
    )(f32(x).reshape(BS, C), shifts, w1_t, w2_t, wqkv, pe_full,
      premask, postbias, hm_big, expand, collapse, vecs,
      f32(p['ff_w1']).T, f32(p['ff_b1']).reshape(1, DFF), f32(p['ff_w2']).T,
      gapmat, f32(p['out_w']).T, f32(p['out_b']).reshape(1, NC))

    # role == 'inv': return (out, outa, out_p1)
    outa = jnp.transpose(out_flat.reshape(B, S, E), (0, 2, 1)).reshape(B, E * S)
    # TODO(synk): the optional attention `mask` branch and the unused causal_Conv3
    # block are not exercised by this forward pass (mask=None, causal_Conv3 never called).
    return logits, outa, gap


# ----------------------------------- main --------------------------------------

if __name__ == "__main__":
    B, C, S = 2, 4, 8              # batch, channel_size, seq_len
    E, H, DFF, NC = 32, 8, 64, 3   # emb_size, num_heads (eRPE hardcodes 8), dim_ff, num_classes

    key = jax.random.PRNGKey(0)
    ks = list(jax.random.split(key, 32))
    rnd = lambda k, shape, s=0.1: s * jax.random.normal(k, shape, dtype=F32)

    params = dict(
        conv1_w=rnd(ks[0], (E, C, 3)), conv1_b=rnd(ks[1], (E,)),
        bn1_g=1.0 + rnd(ks[2], (E,)), bn1_b=rnd(ks[3], (E,)),
        bn1_m=rnd(ks[4], (E,)), bn1_v=1.0 + 0.1 * jax.random.uniform(ks[5], (E,), dtype=F32),
        conv2_w=rnd(ks[6], (E, E, 3)), conv2_b=rnd(ks[7], (E,)),
        bn2_g=1.0 + rnd(ks[8], (E,)), bn2_b=rnd(ks[9], (E,)),
        bn2_m=rnd(ks[10], (E,)), bn2_v=1.0 + 0.1 * jax.random.uniform(ks[11], (E,), dtype=F32),
        wq=rnd(ks[12], (E, E)), wk=rnd(ks[13], (E, E)), wv=rnd(ks[14], (E, E)),
        rel_table=rnd(ks[15], (2 * S - 1, H)),
        to_g=1.0 + rnd(ks[16], (E,)), to_b=rnd(ks[17], (E,)),
        ln_g=1.0 + rnd(ks[18], (E,)), ln_b=rnd(ks[19], (E,)),
        ff_w1=rnd(ks[20], (DFF, E)), ff_b1=rnd(ks[21], (DFF,)),
        ff_w2=rnd(ks[22], (E, DFF)), ff_b2=rnd(ks[23], (E,)),
        ln2_g=1.0 + rnd(ks[24], (E,)), ln2_b=rnd(ks[25], (E,)),
        out_w=rnd(ks[26], (NC, E)), out_b=rnd(ks[27], (NC,)),
    )

    x = jax.random.normal(ks[28], (B, S, C), dtype=F32)

    fwd = jax.jit(partial(casual_convtran_forward, num_heads=H))
    out, outa, out_p1 = jax.block_until_ready(fwd(x, params))

    assert out.shape == (B, NC) and outa.shape == (B, E * S) and out_p1.shape == (B, E)
    assert bool(jnp.all(jnp.isfinite(out)) & jnp.all(jnp.isfinite(outa)) & jnp.all(jnp.isfinite(out_p1)))
    print("KERNEL_OK")
</pallas_src>

<mosaic_0001>
module attributes {stable_mosaic.version = 11 : i64} {
  func.func @_fused_kernel(%arg0: memref<16x4xf32, #tpu.memory_space<vmem>>, %arg1: memref<2x16x16xf32, #tpu.memory_space<vmem>>, %arg2: memref<3x4x32xf32, #tpu.memory_space<vmem>>, %arg3: memref<3x32x32xf32, #tpu.memory_space<vmem>>, %arg4: memref<3x32x32xf32, #tpu.memory_space<vmem>>, %arg5: memref<16x32xf32, #tpu.memory_space<vmem>>, %arg6: memref<128x16xf32, #tpu.memory_space<vmem>>, %arg7: memref<128x16xf32, #tpu.memory_space<vmem>>, %arg8: memref<128x32xf32, #tpu.memory_space<vmem>>, %arg9: memref<128x16xf32, #tpu.memory_space<vmem>>, %arg10: memref<16x128xf32, #tpu.memory_space<vmem>>, %arg11: memref<9x32xf32, #tpu.memory_space<vmem>>, %arg12: memref<32x64xf32, #tpu.memory_space<vmem>>, %arg13: memref<1x64xf32, #tpu.memory_space<vmem>>, %arg14: memref<64x32xf32, #tpu.memory_space<vmem>>, %arg15: memref<2x16xf32, #tpu.memory_space<vmem>>, %arg16: memref<32x3xf32, #tpu.memory_space<vmem>>, %arg17: memref<1x3xf32, #tpu.memory_space<vmem>>, %arg18: memref<16x32xf32, #tpu.memory_space<vmem>>, %arg19: memref<2x32xf32, #tpu.memory_space<vmem>>, %arg20: memref<2x3xf32, #tpu.memory_space<vmem>>) attributes {dimension_semantics = [], scalar_prefetch = 0 : i64, scratch_operands = 0 : i64, tpu.core_type = #tpu.core_type<tc>} {
    %c0 = arith.constant 0 : index
    %c0_0 = arith.constant 0 : index
    %0 = vector.load %arg11[%c0, %c0_0] : memref<9x32xf32, #tpu.memory_space<vmem>>, vector<9x32xf32>
    %c0_1 = arith.constant 0 : index
    %c0_2 = arith.constant 0 : index
    %c0_3 = arith.constant 0 : index
    %1 = vector.load %arg1[%c0_1, %c0_2, %c0_3] : memref<2x16x16xf32, #tpu.memory_space<vmem>>, vector<1x16x16xf32>
    %2 = vector.shape_cast %1 : vector<1x16x16xf32> to vector<16x16xf32>
    %c1 = arith.constant 1 : index
    %c0_4 = arith.constant 0 : index
    %c0_5 = arith.constant 0 : index
    %3 = vector.load %arg1[%c1, %c0_4, %c0_5] : memref<2x16x16xf32, #tpu.memory_space<vmem>>, vector<1x16x16xf32>
    %4 = vector.shape_cast %3 : vector<1x16x16xf32> to vector<16x16xf32>
    %c0_6 = arith.constant 0 : index
    %c0_7 = arith.constant 0 : index
    %5 = vector.load %arg0[%c0_6, %c0_7] : memref<16x4xf32, #tpu.memory_space<vmem>>, vector<16x4xf32>
    %6 = vector.extract_strided_slice %0 {offsets = [0, 0], sizes = [1, 32], strides = [1, 1]} : vector<9x32xf32> to vector<1x32xf32>
    %c0_8 = arith.constant 0 : index
    %c0_9 = arith.constant 0 : index
    %c0_10 = arith.constant 0 : index
    %7 = vector.load %arg2[%c0_8, %c0_9, %c0_10] : memref<3x4x32xf32, #tpu.memory_space<vmem>>, vector<1x4x32xf32>
    %8 = vector.shape_cast %7 : vector<1x4x32xf32> to vector<4x32xf32>
    %cst = arith.constant dense<0.000000e+00> : vector<16x32xf32>
    %9 = tpu.matmul %5, %8, %cst {dimension_numbers = #tpu.dot_dimension_numbers<[1], [0], [0], [1], [0, 0, 1, 1], [], []>} : vector<16x4xf32>, vector<4x32xf32>, vector<16x32xf32> -> vector<16x32xf32>
    %c1_11 = arith.constant 1 : index
    %c0_12 = arith.constant 0 : index
    %c0_13 = arith.constant 0 : index
    %10 = vector.load %arg2[%c1_11, %c0_12, %c0_13] : memref<3x4x32xf32, #tpu.memory_space<vmem>>, vector<1x4x32xf32>
    %11 = vector.shape_cast %10 : vector<1x4x32xf32> to vector<4x32xf32>
    %cst_14 = arith.constant dense<0.000000e+00> : vector<16x32xf32>
    %12 = tpu.matmul %5, %11, %cst_14 {dimension_numbers = #tpu.dot_dimension_numbers<[1], [0], [0], [1], [0, 0, 1, 1], [], []>} : vector<16x4xf32>, vector<4x32xf32>, vector<16x32xf32> -> vector<16x32xf32>
    %c2 = arith.constant 2 : index
    %c0_15 = arith.constant 0 : index
    %c0_16 = arith.constant 0 : index
    %13 = vector.load %arg2[%c2, %c0_15, %c0_16] : memref<3x4x32xf32, #tpu.memory_space<vmem>>, vector<1x4x32xf32>
    %14 = vector.shape_cast %13 : vector<1x4x32xf32> to vector<4x32xf32>
    %cst_17 = arith.constant dense<0.000000e+00> : vector<16x32xf32>
    %15 = tpu.matmul %5, %14, %cst_17 {dimension_numbers = #tpu.dot_dimension_numbers<[1], [0], [0], [1], [0, 0, 1, 1], [], []>} : vector<16x4xf32>, vector<4x32xf32>, vector<16x32xf32> -> vector<16x32xf32>
    %cst_18 = arith.constant dense<0.000000e+00> : vector<16x32xf32>
    %16 = tpu.matmul %2, %9, %cst_18 {dimension_numbers = #tpu.dot_dimension_numbers<[1], [0], [0], [1], [0, 0, 1, 1], [], []>} : vector<16x16xf32>, vector<16x32xf32>, vector<16x32xf32> -> vector<16x32xf32>
    %17 = arith.addf %16, %12 : vector<16x32xf32>
    %cst_19 = arith.constant dense<0.000000e+00> : vector<16x32xf32>
    %18 = tpu.matmul %4, %15, %cst_19 {dimension_numbers = #tpu.dot_dimension_numbers<[1], [0], [0], [1], [0, 0, 1, 1], [], []>} : vector<16x16xf32>, vector<16x32xf32>, vector<16x32xf32> -> vector<16x32xf32>
    %19 = arith.addf %17, %18 : vector<16x32xf32>
    %20 = vector.broadcast %6 : vector<1x32xf32> to vector<16x32xf32>
    %21 = arith.addf %19, %20 : vector<16x32xf32>
    %cst_20 = arith.constant 5.000000e-01 : f32
    %22 = vector.broadcast %cst_20 : f32 to vector<16x32xf32>
    %23 = arith.mulf %22, %21 : vector<16x32xf32>
    %cst_21 = arith.constant 0.707106769 : f32
    %24 = vector.broadcast %cst_21 : f32 to vector<16x32xf32>
    %25 = arith.mulf %21, %24 : vector<16x32xf32>
    %cst_22 = arith.constant 0.000000e+00 : f32
    %26 = vector.broadcast %cst_22 : f32 to vector<16x32xf32>
    %27 = arith.cmpf oge, %25, %26 : vector<16x32xf32>
    %cst_23 = arith.constant 1.000000e+00 : f32
    %cst_24 = arith.constant -1.000000e+00 : f32
    %28 = vector.broadcast %cst_23 : f32 to vector<16x32xf32>
    %29 = vector.broadcast %cst_24 : f32 to vector<16x32xf32>
    %30 = arith.select %27, %28, %29 : vector<16x32xi1>, vector<16x32xf32>
    %31 = math.absf %25 : vector<16x32xf32>
    %cst_25 = arith.constant 0.327591091 : f32
    %32 = vector.broadcast %cst_25 : f32 to vector<16x32xf32>
    %33 = arith.mulf %32, %31 : vector<16x32xf32>
    %cst_26 = arith.constant 1.000000e+00 : f32
    %34 = vector.broadcast %cst_26 : f32 to vector<16x32xf32>
    %35 = arith.addf %34, %33 : vector<16x32xf32>
    %cst_27 = arith.constant 1.000000e+00 : f32
    %36 = vector.broadcast %cst_27 : f32 to vector<16x32xf32>
    %37 = arith.divf %36, %35 : vector<16x32xf32>
    %cst_28 = arith.constant 1.06140542 : f32
    %38 = vector.broadcast %cst_28 : f32 to vector<16x32xf32>
    %39 = arith.mulf %38, %37 : vector<16x32xf32>
    %cst_29 = arith.constant -1.45315206 : f32
    %40 = vector.broadcast %cst_29 : f32 to vector<16x32xf32>
    %41 = arith.addf %39, %40 : vector<16x32xf32>
    %42 = arith.mulf %41, %37 : vector<16x32xf32>
    %cst_30 = arith.constant 1.42141378 : f32
    %43 = vector.broadcast %cst_30 : f32 to vector<16x32xf32>
    %44 = arith.addf %42, %43 : vector<16x32xf32>
    %45 = arith.mulf %44, %37 : vector<16x32xf32>
    %cst_31 = arith.constant -0.284496725 : f32
    %46 = vector.broadcast %cst_31 : f32 to vector<16x32xf32>
    %47 = arith.addf %45, %46 : vector<16x32xf32>
    %48 = arith.mulf %47, %37 : vector<16x32xf32>
    %cst_32 = arith.constant 0.254829586 : f32
    %49 = vector.broadcast %cst_32 : f32 to vector<16x32xf32>
    %50 = arith.addf %48, %49 : vector<16x32xf32>
    %51 = arith.mulf %50, %37 : vector<16x32xf32>
    %cst_33 = arith.constant 0.000000e+00 : f32
    %52 = vector.broadcast %cst_33 : f32 to vector<16x32xf32>
    %53 = arith.subf %52, %31 : vector<16x32xf32>
    %54 = arith.mulf %53, %31 : vector<16x32xf32>
    %55 = math.exp %54 : vector<16x32xf32>
    %56 = arith.mulf %51, %55 : vector<16x32xf32>
    %cst_34 = arith.constant 1.000000e+00 : f32
    %57 = vector.broadcast %cst_34 : f32 to vector<16x32xf32>
    %58 = arith.subf %57, %56 : vector<16x32xf32>
    %59 = arith.mulf %30, %58 : vector<16x32xf32>
    %cst_35 = arith.constant 1.000000e+00 : f32
    %60 = vector.broadcast %cst_35 : f32 to vector<16x32xf32>
    %61 = arith.addf %60, %59 : vector<16x32xf32>
    %62 = arith.mulf %23, %61 : vector<16x32xf32>
    %63 = vector.extract_strided_slice %0 {offsets = [1, 0], sizes = [1, 32], strides = [1, 1]} : vector<9x32xf32> to vector<1x32xf32>
    %c0_36 = arith.constant 0 : index
    %c0_37 = arith.constant 0 : index
    %c0_38 = arith.constant 0 : index
    %64 = vector.load %arg3[%c0_36, %c0_37, %c0_38] : memref<3x32x32xf32, #tpu.memory_space<vmem>>, vector<1x32x32xf32>
    %65 = vector.shape_cast %64 : vector<1x32x32xf32> to vector<32x32xf32>
    %cst_39 = arith.constant dense<0.000000e+00> : vector<16x32xf32>
    %66 = tpu.matmul %62, %65, %cst_39 {dimension_numbers = #tpu.dot_dimension_numbers<[1], [0], [0], [1], [0, 0, 1, 1], [], []>} : vector<16x32xf32>, vector<32x32xf32>, vector<16x32xf32> -> vector<16x32xf32>
    %c1_40 = arith.constant 1 : index
    %c0_41 = arith.constant 0 : index
    %c0_42 = arith.constant 0 : index
    %67 = vector.load %arg3[%c1_40, %c0_41, %c0_42] : memref<3x32x32xf32, #tpu.memory_space<vmem>>, vector<1x32x32xf32>
    %68 = vector.shape_cast %67 : vector<1x32x32xf32> to vector<32x32xf32>
    %cst_43 = arith.constant dense<0.000000e+00> : vector<16x32xf32>
    %69 = tpu.matmul %62, %68, %cst_43 {dimension_numbers = #tpu.dot_dimension_numbers<[1], [0], [0], [1], [0, 0, 1, 1], [], []>} : vector<16x32xf32>, vector<32x32xf32>, vector<16x32xf32> -> vector<16x32xf32>
    %c2_44 = arith.constant 2 : index
    %c0_45 = arith.constant 0 : index
    %c0_46 = arith.constant 0 : index
    %70 = vector.load %arg3[%c2_44, %c0_45, %c0_46] : memref<3x32x32xf32, #tpu.memory_space<vmem>>, vector<1x32x32xf32>
    %71 = vector.shape_cast %70 : vector<1x32x32xf32> to vector<32x32xf32>
    %cst_47 = arith.constant dense<0.000000e+00> : vector<16x32xf32>
    %72 = tpu.matmul %62, %71, %cst_47 {dimension_numbers = #tpu.dot_dimension_numbers<[1], [0], [0], [1], [0, 0, 1, 1], [], []>} : vector<16x32xf32>, vector<32x32xf32>, vector<16x32xf32> -> vector<16x32xf32>
    %cst_48 = arith.constant dense<0.000000e+00> : vector<16x32xf32>
    %73 = tpu.matmul %2, %66, %cst_48 {dimension_numbers = #tpu.dot_dimension_numbers<[1], [0], [0], [1], [0, 0, 1, 1], [], []>} : vector<16x16xf32>, vector<16x32xf32>, vector<16x32xf32> -> vector<16x32xf32>
    %74 = arith.addf %73, %69 : vector<16x32xf32>
    %cst_49 = arith.constant dense<0.000000e+00> : vector<16x32xf32>
    %75 = tpu.matmul %4, %72, %cst_49 {dimension_numbers = #tpu.dot_dimension_numbers<[1], [0], [0], [1], [0, 0, 1, 1], [], []>} : vector<16x16xf32>, vector<16x32xf32>, vector<16x32xf32> -> vector<16x32xf32>
    %76 = arith.addf %74, %75 : vector<16x32xf32>
    %77 = vector.broadcast %63 : vector<1x32xf32> to vector<16x32xf32>
    %78 = arith.addf %76, %77 : vector<16x32xf32>
    %cst_50 = arith.constant 5.000000e-01 : f32
    %79 = vector.broadcast %cst_50 : f32 to vector<16x32xf32>
    %80 = arith.mulf %79, %78 : vector<16x32xf32>
    %cst_51 = arith.constant 0.707106769 : f32
    %81 = vector.broadcast %cst_51 : f32 to vector<16x32xf32>
    %82 = arith.mulf %78, %81 : vector<16x32xf32>
    %cst_52 = arith.constant 0.000000e+00 : f32
    %83 = vector.broadcast %cst_52 : f32 to vector<16x32xf32>
    %84 = arith.cmpf oge, %82, %83 : vector<16x32xf32>
    %cst_53 = arith.constant 1.000000e+00 : f32
    %cst_54 = arith.constant -1.000000e+00 : f32
    %85 = vector.broadcast %cst_53 : f32 to vector<16x32xf32>
    %86 = vector.broadcast %cst_54 : f32 to vector<16x32xf32>
    %87 = arith.select %84, %85, %86 : vector<16x32xi1>, vector<16x32xf32>
    %88 = math.absf %82 : vector<16x32xf32>
    %cst_55 = arith.constant 0.327591091 : f32
    %89 = vector.broadcast %cst_55 : f32 to vector<16x32xf32>
    %90 = arith.mulf %89, %88 : vector<16x32xf32>
    %cst_56 = arith.constant 1.000000e+00 : f32
    %91 = vector.broadcast %cst_56 : f32 to vector<16x32xf32>
    %92 = arith.addf %91, %90 : vector<16x32xf32>
    %cst_57 = arith.constant 1.000000e+00 : f32
    %93 = vector.broadcast %cst_57 : f32 to vector<16x32xf32>
    %94 = arith.divf %93, %92 : vector<16x32xf32>
    %cst_58 = arith.constant 1.06140542 : f32
    %95 = vector.broadcast %cst_58 : f32 to vector<16x32xf32>
    %96 = arith.mulf %95, %94 : vector<16x32xf32>
    %cst_59 = arith.constant -1.45315206 : f32
    %97 = vector.broadcast %cst_59 : f32 to vector<16x32xf32>
    %98 = arith.addf %96, %97 : vector<16x32xf32>
    %99 = arith.mulf %98, %94 : vector<16x32xf32>
    %cst_60 = arith.constant 1.42141378 : f32
    %100 = vector.broadcast %cst_60 : f32 to vector<16x32xf32>
    %101 = arith.addf %99, %100 : vector<16x32xf32>
    %102 = arith.mulf %101, %94 : vector<16x32xf32>
    %cst_61 = arith.constant -0.284496725 : f32
    %103 = vector.broadcast %cst_61 : f32 to vector<16x32xf32>
    %104 = arith.addf %102, %103 : vector<16x32xf32>
    %105 = arith.mulf %104, %94 : vector<16x32xf32>
    %cst_62 = arith.constant 0.254829586 : f32
    %106 = vector.broadcast %cst_62 : f32 to vector<16x32xf32>
    %107 = arith.addf %105, %106 : vector<16x32xf32>
    %108 = arith.mulf %107, %94 : vector<16x32xf32>
    %cst_63 = arith.constant 0.000000e+00 : f32
    %109 = vector.broadcast %cst_63 : f32 to vector<16x32xf32>
    %110 = arith.subf %109, %88 : vector<16x32xf32>
    %111 = arith.mulf %110, %88 : vector<16x32xf32>
    %112 = math.exp %111 : vector<16x32xf32>
    %113 = arith.mulf %108, %112 : vector<16x32xf32>
    %cst_64 = arith.constant 1.000000e+00 : f32
    %114 = vector.broadcast %cst_64 : f32 to vector<16x32xf32>
    %115 = arith.subf %114, %113 : vector<16x32xf32>
    %116 = arith.mulf %87, %115 : vector<16x32xf32>
    %cst_65 = arith.constant 1.000000e+00 : f32
    %117 = vector.broadcast %cst_65 : f32 to vector<16x32xf32>
    %118 = arith.addf %117, %116 : vector<16x32xf32>
    %119 = arith.mulf %80, %118 : vector<16x32xf32>
    %c0_66 = arith.constant 0 : index
    %c0_67 = arith.constant 0 : index
    %120 = vector.load %arg5[%c0_66, %c0_67] : memref<16x32xf32, #tpu.memory_space<vmem>>, vector<16x32xf32>
    %121 = arith.addf %119, %120 : vector<16x32xf32>
    %c0_68 = arith.constant 0 : index
    %c0_69 = arith.constant 0 : index
    %c0_70 = arith.constant 0 : index
    %122 = vector.load %arg4[%c0_68, %c0_69, %c0_70] : memref<3x32x32xf32, #tpu.memory_space<vmem>>, vector<1x32x32xf32>
    %123 = vector.shape_cast %122 : vector<1x32x32xf32> to vector<32x32xf32>
    %cst_71 = arith.constant dense<0.000000e+00> : vector<16x32xf32>
    %124 = tpu.matmul %121, %123, %cst_71 {dimension_numbers = #tpu.dot_dimension_numbers<[1], [0], [0], [1], [0, 0, 1, 1], [], []>} : vector<16x32xf32>, vector<32x32xf32>, vector<16x32xf32> -> vector<16x32xf32>
    %c1_72 = arith.constant 1 : index
    %c0_73 = arith.constant 0 : index
    %c0_74 = arith.constant 0 : index
    %125 = vector.load %arg4[%c1_72, %c0_73, %c0_74] : memref<3x32x32xf32, #tpu.memory_space<vmem>>, vector<1x32x32xf32>
    %126 = vector.shape_cast %125 : vector<1x32x32xf32> to vector<32x32xf32>
    %cst_75 = arith.constant dense<0.000000e+00> : vector<16x32xf32>
    %127 = tpu.matmul %121, %126, %cst_75 {dimension_numbers = #tpu.dot_dimension_numbers<[1], [0], [0], [1], [0, 0, 1, 1], [], []>} : vector<16x32xf32>, vector<32x32xf32>, vector<16x32xf32> -> vector<16x32xf32>
    %c2_76 = arith.constant 2 : index
    %c0_77 = arith.constant 0 : index
    %c0_78 = arith.constant 0 : index
    %128 = vector.load %arg4[%c2_76, %c0_77, %c0_78] : memref<3x32x32xf32, #tpu.memory_space<vmem>>, vector<1x32x32xf32>
    %129 = vector.shape_cast %128 : vector<1x32x32xf32> to vector<32x32xf32>
    %cst_79 = arith.constant dense<0.000000e+00> : vector<16x32xf32>
    %130 = tpu.matmul %121, %129, %cst_79 {dimension_numbers = #tpu.dot_dimension_numbers<[1], [0], [0], [1], [0, 0, 1, 1], [], []>} : vector<16x32xf32>, vector<32x32xf32>, vector<16x32xf32> -> vector<16x32xf32>
    %c0_80 = arith.constant 0 : index
    %c0_81 = arith.constant 0 : index
    %131 = vector.load %arg8[%c0_80, %c0_81] : memref<128x32xf32, #tpu.memory_space<vmem>>, vector<128x32xf32>
    %c0_82 = arith.constant 0 : index
    %c0_83 = arith.constant 0 : index
    %132 = vector.load %arg9[%c0_82, %c0_83] : memref<128x16xf32, #tpu.memory_space<vmem>>, vector<128x16xf32>
    %cst_84 = arith.constant dense<0.000000e+00> : vector<128x32xf32>
    %133 = tpu.matmul %132, %124, %cst_84 {dimension_numbers = #tpu.dot_dimension_numbers<[1], [0], [0], [1], [0, 0, 1, 1], [], []>} : vector<128x16xf32>, vector<16x32xf32>, vector<128x32xf32> -> vector<128x32xf32>
    %134 = arith.mulf %133, %131 : vector<128x32xf32>
    %cst_85 = arith.constant dense<0.000000e+00> : vector<128x16xf32>
    %135 = tpu.matmul %134, %127, %cst_85 {dimension_numbers = #tpu.dot_dimension_numbers<[1], [1], [0], [0], [0, 0, 1, 0], [], []>} : vector<128x32xf32>, vector<16x32xf32>, vector<128x16xf32> -> vector<128x16xf32>
    %c0_86 = arith.constant 0 : index
    %c0_87 = arith.constant 0 : index
    %136 = vector.load %arg6[%c0_86, %c0_87] : memref<128x16xf32, #tpu.memory_space<vmem>>, vector<128x16xf32>
    %137 = arith.addf %135, %136 : vector<128x16xf32>
    %cst_88 = arith.constant dense<0xFF800000> : vector<128xf32>
    %138 = vector.multi_reduction <maximumf>, %137, %cst_88 [1] : vector<128x16xf32> to vector<128xf32>
    %139 = vector.shape_cast %138 : vector<128xf32> to vector<128x1xf32>
    %140 = vector.broadcast %139 : vector<128x1xf32> to vector<128x16xf32>
    %141 = arith.subf %137, %140 : vector<128x16xf32>
    %142 = math.exp %141 : vector<128x16xf32>
    %cst_89 = arith.constant dense<0.000000e+00> : vector<128xf32>
    %143 = vector.multi_reduction <add>, %142, %cst_89 [1] : vector<128x16xf32> to vector<128xf32>
    %144 = vector.shape_cast %143 : vector<128xf32> to vector<128x1xf32>
    %145 = tpu.reciprocal %144 {approx = true} : vector<128x1xf32> -> vector<128x1xf32>
    %146 = vector.broadcast %145 : vector<128x1xf32> to vector<128x16xf32>
    %147 = arith.mulf %142, %146 : vector<128x16xf32>
    %c0_90 = arith.constant 0 : index
    %c0_91 = arith.constant 0 : index
    %148 = vector.load %arg7[%c0_90, %c0_91] : memref<128x16xf32, #tpu.memory_space<vmem>>, vector<128x16xf32>
    %149 = arith.addf %147, %148 : vector<128x16xf32>
    %cst_92 = arith.constant dense<0.000000e+00> : vector<128x32xf32>
    %150 = tpu.matmul %149, %130, %cst_92 {dimension_numbers = #tpu.dot_dimension_numbers<[1], [0], [0], [1], [0, 0, 1, 1], [], []>} : vector<128x16xf32>, vector<16x32xf32>, vector<128x32xf32> -> vector<128x32xf32>
    %c0_93 = arith.constant 0 : index
    %c0_94 = arith.constant 0 : index
    %151 = vector.load %arg10[%c0_93, %c0_94] : memref<16x128xf32, #tpu.memory_space<vmem>>, vector<16x128xf32>
    %152 = arith.mulf %150, %131 : vector<128x32xf32>
    %cst_95 = arith.constant dense<0.000000e+00> : vector<16x32xf32>
    %153 = tpu.matmul %151, %152, %cst_95 {dimension_numbers = #tpu.dot_dimension_numbers<[1], [0], [0], [1], [0, 0, 1, 1], [], []>} : vector<16x128xf32>, vector<128x32xf32>, vector<16x32xf32> -> vector<16x32xf32>
    %154 = vector.extract_strided_slice %0 {offsets = [2, 0], sizes = [1, 32], strides = [1, 1]} : vector<9x32xf32> to vector<1x32xf32>
    %155 = vector.extract_strided_slice %0 {offsets = [3, 0], sizes = [1, 32], strides = [1, 1]} : vector<9x32xf32> to vector<1x32xf32>
    %cst_96 = arith.constant dense<0.000000e+00> : vector<16xf32>
    %156 = vector.multi_reduction <add>, %153, %cst_96 [1] : vector<16x32xf32> to vector<16xf32>
    %157 = vector.shape_cast %156 : vector<16xf32> to vector<16x1xf32>
    %cst_97 = arith.constant 3.200000e+01 : f32
    %158 = vector.broadcast %cst_97 : f32 to vector<16x1xf32>
    %159 = arith.divf %157, %158 : vector<16x1xf32>
    %160 = vector.broadcast %159 : vector<16x1xf32> to vector<16x32xf32>
    %161 = arith.subf %153, %160 : vector<16x32xf32>
    %162 = arith.mulf %161, %161 : vector<16x32xf32>
    %cst_98 = arith.constant dense<0.000000e+00> : vector<16xf32>
    %163 = vector.multi_reduction <add>, %162, %cst_98 [1] : vector<16x32xf32> to vector<16xf32>
    %164 = vector.shape_cast %163 : vector<16xf32> to vector<16x1xf32>
    %cst_99 = arith.constant 3.200000e+01 : f32
    %165 = vector.broadcast %cst_99 : f32 to vector<16x1xf32>
    %166 = arith.divf %164, %165 : vector<16x1xf32>
    %167 = vector.broadcast %159 : vector<16x1xf32> to vector<16x32xf32>
    %168 = arith.subf %153, %167 : vector<16x32xf32>
    %cst_100 = arith.constant 9.99999974E-6 : f32
    %169 = vector.broadcast %cst_100 : f32 to vector<16x1xf32>
    %170 = arith.addf %166, %169 : vector<16x1xf32>
    %171 = math.rsqrt %170 : vector<16x1xf32>
    %172 = vector.broadcast %171 : vector<16x1xf32> to vector<16x32xf32>
    %173 = arith.mulf %168, %172 : vector<16x32xf32>
    %174 = vector.broadcast %154 : vector<1x32xf32> to vector<16x32xf32>
    %175 = arith.mulf %173, %174 : vector<16x32xf32>
    %176 = vector.broadcast %155 : vector<1x32xf32> to vector<16x32xf32>
    %177 = arith.addf %175, %176 : vector<16x32xf32>
    %178 = arith.addf %119, %177 : vector<16x32xf32>
    %179 = vector.extract_strided_slice %0 {offsets = [4, 0], sizes = [1, 32], strides = [1, 1]} : vector<9x32xf32> to vector<1x32xf32>
    %180 = vector.extract_strided_slice %0 {offsets = [5, 0], sizes = [1, 32], strides = [1, 1]} : vector<9x32xf32> to vector<1x32xf32>
    %cst_101 = arith.constant dense<0.000000e+00> : vector<16xf32>
    %181 = vector.multi_reduction <add>, %178, %cst_101 [1] : vector<16x32xf32> to vector<16xf32>
    %182 = vector.shape_cast %181 : vector<16xf32> to vector<16x1xf32>
    %cst_102 = arith.constant 3.200000e+01 : f32
    %183 = vector.broadcast %cst_102 : f32 to vector<16x1xf32>
    %184 = arith.divf %182, %183 : vector<16x1xf32>
    %185 = vector.broadcast %184 : vector<16x1xf32> to vector<16x32xf32>
    %186 = arith.subf %178, %185 : vector<16x32xf32>
    %187 = arith.mulf %186, %186 : vector<16x32xf32>
    %cst_103 = arith.constant dense<0.000000e+00> : vector<16xf32>
    %188 = vector.multi_reduction <add>, %187, %cst_103 [1] : vector<16x32xf32> to vector<16xf32>
    %189 = vector.shape_cast %188 : vector<16xf32> to vector<16x1xf32>
    %cst_104 = arith.constant 3.200000e+01 : f32
    %190 = vector.broadcast %cst_104 : f32 to vector<16x1xf32>
    %191 = arith.divf %189, %190 : vector<16x1xf32>
    %192 = vector.broadcast %184 : vector<16x1xf32> to vector<16x32xf32>
    %193 = arith.subf %178, %192 : vector<16x32xf32>
    %cst_105 = arith.constant 9.99999974E-6 : f32
    %194 = vector.broadcast %cst_105 : f32 to vector<16x1xf32>
    %195 = arith.addf %191, %194 : vector<16x1xf32>
    %196 = math.rsqrt %195 : vector<16x1xf32>
    %197 = vector.broadcast %196 : vector<16x1xf32> to vector<16x32xf32>
    %198 = arith.mulf %193, %197 : vector<16x32xf32>
    %199 = vector.broadcast %179 : vector<1x32xf32> to vector<16x32xf32>
    %200 = arith.mulf %198, %199 : vector<16x32xf32>
    %201 = vector.broadcast %180 : vector<1x32xf32> to vector<16x32xf32>
    %202 = arith.addf %200, %201 : vector<16x32xf32>
    %c0_106 = arith.constant 0 : index
    %c0_107 = arith.constant 0 : index
    %203 = vector.load %arg12[%c0_106, %c0_107] : memref<32x64xf32, #tpu.memory_space<vmem>>, vector<32x64xf32>
    %cst_108 = arith.constant dense<0.000000e+00> : vector<16x64xf32>
    %204 = tpu.matmul %202, %203, %cst_108 {dimension_numbers = #tpu.dot_dimension_numbers<[1], [0], [0], [1], [0, 0, 1, 1], [], []>} : vector<16x32xf32>, vector<32x64xf32>, vector<16x64xf32> -> vector<16x64xf32>
    %c0_109 = arith.constant 0 : index
    %c0_110 = arith.constant 0 : index
    %205 = vector.load %arg13[%c0_109, %c0_110] : memref<1x64xf32, #tpu.memory_space<vmem>>, vector<1x64xf32>
    %206 = vector.broadcast %205 : vector<1x64xf32> to vector<16x64xf32>
    %207 = arith.addf %204, %206 : vector<16x64xf32>
    %cst_111 = arith.constant 0.000000e+00 : f32
    %208 = vector.broadcast %cst_111 : f32 to vector<16x64xf32>
    %209 = arith.maximumf %207, %208 : vector<16x64xf32>
    %c0_112 = arith.constant 0 : index
    %c0_113 = arith.constant 0 : index
    %210 = vector.load %arg14[%c0_112, %c0_113] : memref<64x32xf32, #tpu.memory_space<vmem>>, vector<64x32xf32>
    %cst_114 = arith.constant dense<0.000000e+00> : vector<16x32xf32>
    %211 = tpu.matmul %209, %210, %cst_114 {dimension_numbers = #tpu.dot_dimension_numbers<[1], [0], [0], [1], [0, 0, 1, 1], [], []>} : vector<16x64xf32>, vector<64x32xf32>, vector<16x32xf32> -> vector<16x32xf32>
    %212 = vector.extract_strided_slice %0 {offsets = [6, 0], sizes = [1, 32], strides = [1, 1]} : vector<9x32xf32> to vector<1x32xf32>
    %213 = vector.broadcast %212 : vector<1x32xf32> to vector<16x32xf32>
    %214 = arith.addf %211, %213 : vector<16x32xf32>
    %215 = arith.addf %202, %214 : vector<16x32xf32>
    %216 = vector.extract_strided_slice %0 {offsets = [7, 0], sizes = [1, 32], strides = [1, 1]} : vector<9x32xf32> to vector<1x32xf32>
    %217 = vector.extract_strided_slice %0 {offsets = [8, 0], sizes = [1, 32], strides = [1, 1]} : vector<9x32xf32> to vector<1x32xf32>
    %cst_115 = arith.constant dense<0.000000e+00> : vector<16xf32>
    %218 = vector.multi_reduction <add>, %215, %cst_115 [1] : vector<16x32xf32> to vector<16xf32>
    %219 = vector.shape_cast %218 : vector<16xf32> to vector<16x1xf32>
    %cst_116 = arith.constant 3.200000e+01 : f32
    %220 = vector.broadcast %cst_116 : f32 to vector<16x1xf32>
    %221 = arith.divf %219, %220 : vector<16x1xf32>
    %222 = vector.broadcast %221 : vector<16x1xf32> to vector<16x32xf32>
    %223 = arith.subf %215, %222 : vector<16x32xf32>
    %224 = arith.mulf %223, %223 : vector<16x32xf32>
    %cst_117 = arith.constant dense<0.000000e+00> : vector<16xf32>
    %225 = vector.multi_reduction <add>, %224, %cst_117 [1] : vector<16x32xf32> to vector<16xf32>
    %226 = vector.shape_cast %225 : vector<16xf32> to vector<16x1xf32>
    %cst_118 = arith.constant 3.200000e+01 : f32
    %227 = vector.broadcast %cst_118 : f32 to vector<16x1xf32>
    %228 = arith.divf %226, %227 : vector<16x1xf32>
    %229 = vector.broadcast %221 : vector<16x1xf32> to vector<16x32xf32>
    %230 = arith.subf %215, %229 : vector<16x32xf32>
    %cst_119 = arith.constant 9.99999974E-6 : f32
    %231 = vector.broadcast %cst_119 : f32 to vector<16x1xf32>
    %232 = arith.addf %228, %231 : vector<16x1xf32>
    %233 = math.rsqrt %232 : vector<16x1xf32>
    %234 = vector.broadcast %233 : vector<16x1xf32> to vector<16x32xf32>
    %235 = arith.mulf %230, %234 : vector<16x32xf32>
    %236 = vector.broadcast %216 : vector<1x32xf32> to vector<16x32xf32>
    %237 = arith.mulf %235, %236 : vector<16x32xf32>
    %238 = vector.broadcast %217 : vector<1x32xf32> to vector<16x32xf32>
    %239 = arith.addf %237, %238 : vector<16x32xf32>
    %c0_120 = arith.constant 0 : index
    %c0_121 = arith.constant 0 : index
    %240 = vector.load %arg18[%c0_120, %c0_121] : memref<16x32xf32, #tpu.memory_space<vmem>>, vector<16x32xf32>
    tpu.vector_store %arg18[%c0_120, %c0_121], %239 {strides = array<i32>} : memref<16x32xf32, #tpu.memory_space<vmem>>, vector<16x32xf32>,
    %c0_122 = arith.constant 0 : index
    %c0_123 = arith.constant 0 : index
    %241 = vector.load %arg15[%c0_122, %c0_123] : memref<2x16xf32, #tpu.memory_space<vmem>>, vector<2x16xf32>
    %cst_124 = arith.constant dense<0.000000e+00> : vector<2x32xf32>
    %242 = tpu.matmul %241, %239, %cst_124 {dimension_numbers = #tpu.dot_dimension_numbers<[1], [0], [0], [1], [0, 0, 1, 1], [], []>} : vector<2x16xf32>, vector<16x32xf32>, vector<2x32xf32> -> vector<2x32xf32>
    %c0_125 = arith.constant 0 : index
    %c0_126 = arith.constant 0 : index
    %243 = vector.load %arg19[%c0_125, %c0_126] : memref<2x32xf32, #tpu.memory_space<vmem>>, vector<2x32xf32>
    tpu.vector_store %arg19[%c0_125, %c0_126], %242 {strides = array<i32>} : memref<2x32xf32, #tpu.memory_space<vmem>>, vector<2x32xf32>,
    %c0_127 = arith.constant 0 : index
    %c0_128 = arith.constant 0 : index
    %244 = vector.load %arg16[%c0_127, %c0_128] : memref<32x3xf32, #tpu.memory_space<vmem>>, vector<32x3xf32>
    %cst_129 = arith.constant dense<0.000000e+00> : vector<2x3xf32>
    %245 = tpu.matmul %242, %244, %cst_129 {dimension_numbers = #tpu.dot_dimension_numbers<[1], [0], [0], [1], [0, 0, 1, 1], [], []>} : vector<2x32xf32>, vector<32x3xf32>, vector<2x3xf32> -> vector<2x3xf32>
    %c0_130 = arith.constant 0 : index
    %c0_131 = arith.constant 0 : index
    %246 = vector.load %arg17[%c0_130, %c0_131] : memref<1x3xf32, #tpu.memory_space<vmem>>, vector<1x3xf32>
    %247 = vector.broadcast %246 : vector<1x3xf32> to vector<2x3xf32>
    %248 = arith.addf %245, %247 : vector<2x3xf32>
    %c0_132 = arith.constant 0 : index
    %c0_133 = arith.constant 0 : index
    %249 = vector.load %arg20[%c0_132, %c0_133] : memref<2x3xf32, #tpu.memory_space<vmem>>, vector<2x3xf32>
    tpu.vector_store %arg20[%c0_132, %c0_133], %248 {strides = array<i32>} : memref<2x3xf32, #tpu.memory_space<vmem>>, vector<2x3xf32>,
    return
  }
}

</mosaic_0001>

<llo_original>
// kernel: eq.73
$region0: #{eq.73}
  %s0 = inlined_call_operand.vmem [shape: s32[8,16], index: 0, kind: input, shape index: {}]
  %s1 = inlined_call_operand.vmem [shape: s32[128], index: 1, kind: output, shape index: {}]
  $region1: #{eq.73} parent=0
    #allocation0 [shape = 'u8[4096]{0}', space=vmem, size = 0x1000, scoped, tag = 'scoped mem for output reshape']
    %v2 = vld [vmem:[%s0] sm:$0x1]
    %vm3 = vcmask 130048
    %4 = vst.msk [vmem:[#allocation0] sm:$0x1] %vm3, %v2
    %s5 = scalar_lea.vmem %s0, 7
    %v6 = vld [vmem:[%s5] sm:$0x1]
    %7 = vrot.lane.b32.xlu0 %v6, 112
    %v8 = vpop.permute.xlu0 %7
    %vm9 = vcmask 1048448
    %10 = vst.msk [vmem:[#allocation0] sm:$0x1] %vm9, %v8
    %s11 = scalar_lea.vmem %s0, 6
    %v12 = vld [vmem:[%s11] sm:$0x1]
    %13 = vrot.lane.b32.xlu0 %v12, 96
    %v14 = vpop.permute.xlu0 %13
    %vm15 = vcmask 917248
    %16 = vst.msk [vmem:[#allocation0] sm:$0x1] %vm15, %v14
    %s17 = scalar_lea.vmem %s0, 5
    %v18 = vld [vmem:[%s17] sm:$0x1]
    %19 = vrot.lane.b32.xlu0 %v18, 80
    %v20 = vpop.permute.xlu0 %19
    %vm21 = vcmask 786048
    %22 = vst.msk [vmem:[#allocation0] sm:$0x1] %vm21, %v20
    %s23 = scalar_lea.vmem %s0, 4
    %v24 = vld [vmem:[%s23] sm:$0x1]
    %25 = vrot.lane.b32.xlu0 %v24, 64
    %v26 = vpop.permute.xlu0 %25
    %vm27 = vcmask 654848
    %28 = vst.msk [vmem:[#allocation0] sm:$0x1] %vm27, %v26
    %s29 = scalar_lea.vmem %s0, 3
    %v30 = vld [vmem:[%s29] sm:$0x1]
    %31 = vrot.lane.b32.xlu0 %v30, 48
    %v32 = vpop.permute.xlu0 %31
    %vm33 = vcmask 523648
    %34 = vst.msk [vmem:[#allocation0] sm:$0x1] %vm33, %v32
    %s35 = scalar_lea.vmem %s0, 2
    %v36 = vld [vmem:[%s35] sm:$0x1]
    %37 = vrot.lane.b32.xlu0 %v36, 32
    %v38 = vpop.permute.xlu0 %37
    %vm39 = vcmask 392448
    %40 = vst.msk [vmem:[#allocation0] sm:$0x1] %vm39, %v38
    %s41 = scalar_lea.vmem %s0, 1
    %v42 = vld [vmem:[%s41] sm:$0x1]
    %43 = vrot.lane.b32.xlu0 %v42, 16
    %v44 = vpop.permute.xlu0 %43
    %vm45 = vcmask 261248
    %46 = vst.msk [vmem:[#allocation0] sm:$0x1] %vm45, %v44
    %s48 = sshll.u32 1, 1
    %s49 = ssub.s32 %s48, 1
    %v51 = vld [vmem:[#allocation0] sm:%s49]
    %s52 = sshll.u32 1, 1
    %s53 = ssub.s32 %s52, 1
    %54 = vst [vmem:[%s1] sm:%s53] %v51

// kernel: casual_convtran_forward.1
$region0: #{casual_convtran_forward.1}
  #allocation0 [shape = 'u32[]', space=smem, size = 0x4, offset = 0x4, fixed_abs, tag = 'smem constant byte address 0x4 - core index']
  #allocation1 [shape = 'u32[144,128]{1,0:T(1,128)}', space=vmem, size = 0x12000, scoped, tag = 'internal scratch']
  %s0 = inlined_call_operand.vmem [shape: f32[16,4], index: 0, kind: input, shape index: {}]
  %s1 = inlined_call_operand.vmem [shape: f32[2,16,16], index: 1, kind: input, shape index: {}]
  %s2 = inlined_call_operand.vmem [shape: f32[3,4,32], index: 2, kind: input, shape index: {}]
  %s3 = inlined_call_operand.vmem [shape: f32[3,32,32], index: 3, kind: input, shape index: {}]
  %s4 = inlined_call_operand.vmem [shape: f32[3,32,32], index: 4, kind: input, shape index: {}]
  %s5 = inlined_call_operand.vmem [shape: f32[16,32], index: 5, kind: input, shape index: {}]
  %s6 = inlined_call_operand.vmem [shape: f32[128,16], index: 6, kind: input, shape index: {}]
  %s7 = inlined_call_operand.vmem [shape: f32[128,16], index: 7, kind: input, shape index: {}]
  %s8 = inlined_call_operand.vmem [shape: f32[128,32], index: 8, kind: input, shape index: {}]
  %s9 = inlined_call_operand.vmem [shape: f32[128,16], index: 9, kind: input, shape index: {}]
  %s10 = inlined_call_operand.vmem [shape: f32[16,128], index: 10, kind: input, shape index: {}]
  %s11 = inlined_call_operand.vmem [shape: f32[9,32], index: 11, kind: input, shape index: {}]
  %s12 = inlined_call_operand.vmem [shape: f32[32,64], index: 12, kind: input, shape index: {}]
  %s13 = inlined_call_operand.vmem [shape: f32[1,64], index: 13, kind: input, shape index: {}]
  %s14 = inlined_call_operand.vmem [shape: f32[64,32], index: 14, kind: input, shape index: {}]
  %s15 = inlined_call_operand.vmem [shape: f32[2,16], index: 15, kind: input, shape index: {}]
  %s16 = inlined_call_operand.vmem [shape: f32[32,3], index: 16, kind: input, shape index: {}]
  %s17 = inlined_call_operand.vmem [shape: f32[1,3], index: 17, kind: input, shape index: {}]
  %s18 = inlined_call_operand.vmem [shape: f32[16,32], index: 18, kind: output, shape index: {0}]
  %s19 = inlined_call_operand.hbm [shape: f32[2,32], index: 19, kind: output, shape index: {1}]
  %s20 = inlined_call_operand.hbm [shape: f32[2,3], index: 20, kind: output, shape index: {2}]
  %21 = xla_tuple %s18, %s19, %s20
  %s22 = sld [smem:[#allocation0]]
  $region98: #{casual_convtran_forward.1} parent=0
    _
  %s24 = ssub.s32 1, %s22
  %s25 = scalar_select 0, %s24, %s22
  $region1: #{casual_convtran_forward.1} parent=0
    #allocation2 [shape = 'u8[1024]{0}', space=vmem, size = 0x400, scoped, tag = 'output window, operand 1, single buffered']
    #allocation3 [shape = 's32[1]{0}', space=sflag, size = 0x4, scoped, tag = 'scoped memory for casual_convtran_forward.1']
    #allocation4 [shape = 'u8[1024]{0}', space=vmem, size = 0x400, scoped, tag = 'output window, operand 2, single buffered']
    #allocation5 [shape = 's32[1]{0}', space=sflag, size = 0x4, scoped, tag = 'scoped memory for casual_convtran_forward.1']
    %26 = vsyncpa [#allocation3], 0
    %27 = vsyncpa [#allocation5], 0
    // Predicated region
    $region2: #{casual_convtran_forward.1} parent=1 // pred_check
      _
    $region3: #{casual_convtran_forward.1} parent=1 // pred_check_branch
      %29 = sbr.rel (0) target = $region5
    $region4: #{casual_convtran_forward.1} parent=1 // pred_region
      _
    $region5: #{casual_convtran_forward.1} parent=1 // pred_fallthru
      _
    // Predicated region
    $region6: #{casual_convtran_forward.1} parent=1 // pred_check
      _
    $region7: #{casual_convtran_forward.1} parent=1 // pred_check_branch
      %31 = sbr.rel (0) target = $region9
    $region8: #{casual_convtran_forward.1} parent=1 // pred_region
      _
    $region9: #{casual_convtran_forward.1} parent=1 // pred_fallthru
      _
    // Predicated region
    $region10: #{casual_convtran_forward.1} parent=1 // pred_check
      _
    $region11: #{casual_convtran_forward.1} parent=1 // pred_check_branch
      %33 = sbr.rel (0) target = $region13
    $region12: #{casual_convtran_forward.1} parent=1 // pred_region
      _
    $region13: #{casual_convtran_forward.1} parent=1 // pred_fallthru
      _
    // Predicated region
    $region14: #{casual_convtran_forward.1} parent=1 // pred_check
      _
    $region15: #{casual_convtran_forward.1} parent=1 // pred_check_branch
      %35 = sbr.rel (0) target = $region17
    $region16: #{casual_convtran_forward.1} parent=1 // pred_region
      _
    $region17: #{casual_convtran_forward.1} parent=1 // pred_fallthru
      _
    // Predicated region
    $region18: #{casual_convtran_forward.1} parent=1 // pred_check
      _
    $region19: #{casual_convtran_forward.1} parent=1 // pred_check_branch
      %37 = sbr.rel (0) target = $region21
    $region20: #{casual_convtran_forward.1} parent=1 // pred_region
      _
    $region21: #{casual_convtran_forward.1} parent=1 // pred_fallthru
      _
    // Predicated region
    $region22: #{casual_convtran_forward.1} parent=1 // pred_check
      _
    $region23: #{casual_convtran_forward.1} parent=1 // pred_check_branch
      %39 = sbr.rel (0) target = $region25
    $region24: #{casual_convtran_forward.1} parent=1 // pred_region
      _
    $region25: #{casual_convtran_forward.1} parent=1 // pred_fallthru
      _
    // Predicated region
    $region26: #{casual_convtran_forward.1} parent=1 // pred_check
      _
    $region27: #{casual_convtran_forward.1} parent=1 // pred_check_branch
      %41 = sbr.rel (0) target = $region29
    $region28: #{casual_convtran_forward.1} parent=1 // pred_region
      _
    $region29: #{casual_convtran_forward.1} parent=1 // pred_fallthru
      _
    // Predicated region
    $region30: #{casual_convtran_forward.1} parent=1 // pred_check
      _
    $region31: #{casual_convtran_forward.1} parent=1 // pred_check_branch
      %43 = sbr.rel (0) target = $region33
    $region32: #{casual_convtran_forward.1} parent=1 // pred_region
      _
    $region33: #{casual_convtran_forward.1} parent=1 // pred_fallthru
      _
    // Predicated region
    $region34: #{casual_convtran_forward.1} parent=1 // pred_check
      _
    $region35: #{casual_convtran_forward.1} parent=1 // pred_check_branch
      %45 = sbr.rel (0) target = $region37
    $region36: #{casual_convtran_forward.1} parent=1 // pred_region
      _
    $region37: #{casual_convtran_forward.1} parent=1 // pred_fallthru
      _
    // Predicated region
    $region38: #{casual_convtran_forward.1} parent=1 // pred_check
      _
    $region39: #{casual_convtran_forward.1} parent=1 // pred_check_branch
      %47 = sbr.rel (0) target = $region41
    $region40: #{casual_convtran_forward.1} parent=1 // pred_region
      _
    $region41: #{casual_convtran_forward.1} parent=1 // pred_fallthru
      _
    // Predicated region
    $region42: #{casual_convtran_forward.1} parent=1 // pred_check
      _
    $region43: #{casual_convtran_forward.1} parent=1 // pred_check_branch
      %49 = sbr.rel (0) target = $region45
    $region44: #{casual_convtran_forward.1} parent=1 // pred_region
      _
    $region45: #{casual_convtran_forward.1} parent=1 // pred_fallthru
      _
    // Predicated region
    $region46: #{casual_convtran_forward.1} parent=1 // pred_check
      _
    $region47: #{casual_convtran_forward.1} parent=1 // pred_check_branch
      %51 = sbr.rel (0) target = $region49
    $region48: #{casual_convtran_forward.1} parent=1 // pred_region
      _
    $region49: #{casual_convtran_forward.1} parent=1 // pred_fallthru
      _
    // Predicated region
    $region50: #{casual_convtran_forward.1} parent=1 // pred_check
      _
    $region51: #{casual_convtran_forward.1} parent=1 // pred_check_branch
      %53 = sbr.rel (0) target = $region53
    $region52: #{casual_convtran_forward.1} parent=1 // pred_region
      _
    $region53: #{casual_convtran_forward.1} parent=1 // pred_fallthru
      _
    // Predicated region
    $region54: #{casual_convtran_forward.1} parent=1 // pred_check
      _
    $region55: #{casual_convtran_forward.1} parent=1 // pred_check_branch
      %55 = sbr.rel (0) target = $region57
    $region56: #{casual_convtran_forward.1} parent=1 // pred_region
      _
    $region57: #{casual_convtran_forward.1} parent=1 // pred_fallthru
      _
    // Predicated region
    $region58: #{casual_convtran_forward.1} parent=1 // pred_check
      _
    $region59: #{casual_convtran_forward.1} parent=1 // pred_check_branch
      %57 = sbr.rel (0) target = $region61
    $region60: #{casual_convtran_forward.1} parent=1 // pred_region
      _
    $region61: #{casual_convtran_forward.1} parent=1 // pred_fallthru
      _
    // Predicated region
    $region62: #{casual_convtran_forward.1} parent=1 // pred_check
      _
    $region63: #{casual_convtran_forward.1} parent=1 // pred_check_branch
      %59 = sbr.rel (0) target = $region65
    $region64: #{casual_convtran_forward.1} parent=1 // pred_region
      _
    $region65: #{casual_convtran_forward.1} parent=1 // pred_fallthru
      _
    // Predicated region
    $region66: #{casual_convtran_forward.1} parent=1 // pred_check
      _
    $region67: #{casual_convtran_forward.1} parent=1 // pred_check_branch
      %61 = sbr.rel (0) target = $region69
    $region68: #{casual_convtran_forward.1} parent=1 // pred_region
      _
    $region69: #{casual_convtran_forward.1} parent=1 // pred_fallthru
      _
    // Predicated region
    $region70: #{casual_convtran_forward.1} parent=1 // pred_check
      _
    $region71: #{casual_convtran_forward.1} parent=1 // pred_check_branch
      %63 = sbr.rel (0) target = $region73
    $region72: #{casual_convtran_forward.1} parent=1 // pred_region
      _
    $region73: #{casual_convtran_forward.1} parent=1 // pred_fallthru
      _
    %v64 = vld [vmem:[%s11] sm:$0xff]
    %v65 = vld [vmem:[%s11 + $0x8] sm:$0x1]
    %v66 = vld [vmem:[%s1] sm:$0xff]
    %v67 = vld [vmem:[%s1 + $0x8] sm:$0xff]
    %s68 = scalar_lea.vmem %s1, 16
    %v69 = vld [vmem:[%s68] sm:$0xff]
    %v70 = vld [vmem:[%s68 + $0x8] sm:$0xff]
    %v71 = vld [vmem:[%s0] sm:$0xff]
    %v72 = vld [vmem:[%s0 + $0x8] sm:$0xff]
    %v73 = vld [vmem:[%s2] sm:$0xf]
    %vm74 = vcmask 31744
    %v76 = vsel %vm74, %v71, 0
    %v79 = vsel %vm74, %v72, 0
    %vm81 = vcmask 1043456
    %v83 = vsel %vm81, %v73, 0
    %85 = vmatprep.subr.mxu0 0.0
    %86 = vmatpush1.msra.mxu0 0.0
    %87 = vmatprep.subr.mxu0 0.0
    %88 = vmatpush1.msra.mxu0 0.0
    %89 = vmatprep.subr.mxu0 0.0
    %90 = vmatpush1.msra.mxu0 0.0
    %91 = vmatprep.subr.mxu0 0.0
    %92 = vmatpush1.msra.mxu0 0.0
    %93 = vmatprep.subr.mxu0 0.0
    %94 = vmatpush1.msra.mxu0 0.0
    %95 = vmatprep.subr.mxu0 0.0
    %96 = vmatpush1.msra.mxu0 0.0
    %97 = vmatprep.subr.mxu0 0.0
    %98 = vmatpush1.msra.mxu0 0.0
    %99 = vmatprep.subr.mxu0 0.0
    %100 = vmatpush1.msra.mxu0 0.0
    %101 = vmatprep.subr.mxu0 0.0
    %102 = vmatpush1.msra.mxu0 0.0
    %103 = vmatprep.subr.mxu0 0.0
    %104 = vmatpush1.msra.mxu0 0.0
    %105 = vmatprep.subr.mxu0 0.0
    %106 = vmatpush1.msra.mxu0 0.0
    %107 = vmatprep.subr.mxu0 0.0
    %108 = vmatpush1.msra.mxu0 0.0
    %109 = vmatprep.subr.mxu0 0.0
    %110 = vmatpush1.msra.mxu0 0.0
    %111 = vmatprep.subr.mxu0 0.0
    %112 = vmatpush1.msra.mxu0 0.0
    %113 = vmatprep.subr.mxu0 0.0
    %114 = vmatpush1.msra.mxu0 0.0
    %115 = vmatprep.subr.mxu0 0.0
    %116 = vmatpush1.msra.mxu0 %v83
    %117 = vmatprep.subr.mxu0 0.0
    %118 = vmatpush2.msra.mxu0 0.0
    %119 = vmatprep.subr.mxu0 0.0
    %120 = vmatpush2.msra.mxu0 0.0
    %121 = vmatprep.subr.mxu0 0.0
    %122 = vmatpush2.msra.mxu0 0.0
    %123 = vmatprep.subr.mxu0 0.0
    %124 = vmatpush2.msra.mxu0 0.0
    %125 = vmatprep.subr.mxu0 0.0
    %126 = vmatpush2.msra.mxu0 0.0
    %127 = vmatprep.subr.mxu0 0.0
    %128 = vmatpush2.msra.mxu0 0.0
    %129 = vmatprep.subr.mxu0 0.0
    %130 = vmatpush2.msra.mxu0 0.0
    %131 = vmatprep.subr.mxu0 0.0
    %132 = vmatpush2.msra.mxu0 0.0
    %133 = vmatprep.subr.mxu0 0.0
    %134 = vmatpush2.msra.mxu0 0.0
    %135 = vmatprep.subr.mxu0 0.0
    %136 = vmatpush2.msra.mxu0 0.0
    %137 = vmatprep.subr.mxu0 0.0
    %138 = vmatpush2.msra.mxu0 0.0
    %139 = vmatprep.subr.mxu0 0.0
    %140 = vmatpush2.msra.mxu0 0.0
    %141 = vmatprep.subr.mxu0 0.0
    %142 = vmatpush2.msra.mxu0 0.0
    %143 = vmatprep.subr.mxu0 0.0
    %144 = vmatpush2.msra.mxu0 0.0
    %145 = vmatprep.subr.mxu0 0.0
    %146 = vmatpush2.msra.mxu0 0.0
    %147 = vmatprep.subr.mxu0 0.0
    %148 = vmatpush2.msra.mxu0 0.0
    %149 = vmatprep.mubr.f32.mxu0 0.0
    %150 = vmatmul.mubr.f32.gmra.mxu0 %v76
    %v151 = vpop.f32.mrf.mxu0
    %v152 = vadd.f32 0.0, %v151
    %v153 = vpop.f32.mrf.mxu0
    %154 = vmatprep.mubr.f32.mxu0 0.0
    %155 = vmatmul.mubr.f32.gmra.mxu0 %v79
    %v156 = vpop.f32.mrf.mxu0
    %v157 = vadd.f32 0.0, %v156
    %v158 = vpop.f32.mrf.mxu0
    %159 = vdwg.mxu0
    %s160 = scalar_lea.vmem %s2, 4
    %v161 = vld [vmem:[%s160] sm:$0xf]
    %v163 = vsel %vm81, %v161, 0
    %165 = vmatprep.subr.mxu0 0.0
    %166 = vmatpush1.msra.mxu0 0.0
    %167 = vmatprep.subr.mxu0 0.0
    %168 = vmatpush1.msra.mxu0 0.0
    %169 = vmatprep.subr.mxu0 0.0
    %170 = vmatpush1.msra.mxu0 0.0
    %171 = vmatprep.subr.mxu0 0.0
    %172 = vmatpush1.msra.mxu0 0.0
    %173 = vmatprep.subr.mxu0 0.0
    %174 = vmatpush1.msra.mxu0 0.0
    %175 = vmatprep.subr.mxu0 0.0
    %176 = vmatpush1.msra.mxu0 0.0
    %177 = vmatprep.subr.mxu0 0.0
    %178 = vmatpush1.msra.mxu0 0.0
    %179 = vmatprep.subr.mxu0 0.0
    %180 = vmatpush1.msra.mxu0 0.0
    %181 = vmatprep.subr.mxu0 0.0
    %182 = vmatpush1.msra.mxu0 0.0
    %183 = vmatprep.subr.mxu0 0.0
    %184 = vmatpush1.msra.mxu0 0.0
    %185 = vmatprep.subr.mxu0 0.0
    %186 = vmatpush1.msra.mxu0 0.0
    %187 = vmatprep.subr.mxu0 0.0
    %188 = vmatpush1.msra.mxu0 0.0
    %189 = vmatprep.subr.mxu0 0.0
    %190 = vmatpush1.msra.mxu0 0.0
    %191 = vmatprep.subr.mxu0 0.0
    %192 = vmatpush1.msra.mxu0 0.0
    %193 = vmatprep.subr.mxu0 0.0
    %194 = vmatpush1.msra.mxu0 0.0
    %195 = vmatprep.subr.mxu0 0.0
    %196 = vmatpush1.msra.mxu0 %v163
    %197 = vmatprep.subr.mxu0 0.0
    %198 = vmatpush2.msra.mxu0 0.0
    %199 = vmatprep.subr.mxu0 0.0
    %200 = vmatpush2.msra.mxu0 0.0
    %201 = vmatprep.subr.mxu0 0.0
    %202 = vmatpush2.msra.mxu0 0.0
    %203 = vmatprep.subr.mxu0 0.0
    %204 = vmatpush2.msra.mxu0 0.0
    %205 = vmatprep.subr.mxu0 0.0
    %206 = vmatpush2.msra.mxu0 0.0
    %207 = vmatprep.subr.mxu0 0.0
    %208 = vmatpush2.msra.mxu0 0.0
    %209 = vmatprep.subr.mxu0 0.0
    %210 = vmatpush2.msra.mxu0 0.0
    %211 = vmatprep.subr.mxu0 0.0
    %212 = vmatpush2.msra.mxu0 0.0
    %213 = vmatprep.subr.mxu0 0.0
    %214 = vmatpush2.msra.mxu0 0.0
    %215 = vmatprep.subr.mxu0 0.0
    %216 = vmatpush2.msra.mxu0 0.0
    %217 = vmatprep.subr.mxu0 0.0
    %218 = vmatpush2.msra.mxu0 0.0
    %219 = vmatprep.subr.mxu0 0.0
    %220 = vmatpush2.msra.mxu0 0.0
    %221 = vmatprep.subr.mxu0 0.0
    %222 = vmatpush2.msra.mxu0 0.0
    %223 = vmatprep.subr.mxu0 0.0
    %224 = vmatpush2.msra.mxu0 0.0
    %225 = vmatprep.subr.mxu0 0.0
    %226 = vmatpush2.msra.mxu0 0.0
    %227 = vmatprep.subr.mxu0 0.0
    %228 = vmatpush2.msra.mxu0 0.0
    %229 = vmatprep.mubr.f32.mxu0 0.0
    %230 = vmatmul.mubr.f32.gmra.mxu0 %v76
    %v231 = vpop.f32.mrf.mxu0
    %v232 = vadd.f32 0.0, %v231
    %v233 = vpop.f32.mrf.mxu0
    %234 = vmatprep.mubr.f32.mxu0 0.0
    %235 = vmatmul.mubr.f32.gmra.mxu0 %v79
    %v236 = vpop.f32.mrf.mxu0
    %v237 = vadd.f32 0.0, %v236
    %v238 = vpop.f32.mrf.mxu0
    %239 = vdwg.mxu0
    %s240 = scalar_lea.vmem %s2, 8
    %v241 = vld [vmem:[%s240] sm:$0xf]
    %v243 = vsel %vm81, %v241, 0
    %245 = vmatprep.subr.mxu0 0.0
    %246 = vmatpush1.msra.mxu0 0.0
    %247 = vmatprep.subr.mxu0 0.0
    %248 = vmatpush1.msra.mxu0 0.0
    %249 = vmatprep.subr.mxu0 0.0
    %250 = vmatpush1.msra.mxu0 0.0
    %251 = vmatprep.subr.mxu0 0.0
    %252 = vmatpush1.msra.mxu0 0.0
    %253 = vmatprep.subr.mxu0 0.0
    %254 = vmatpush1.msra.mxu0 0.0
    %255 = vmatprep.subr.mxu0 0.0
    %256 = vmatpush1.msra.mxu0 0.0
    %257 = vmatprep.subr.mxu0 0.0
    %258 = vmatpush1.msra.mxu0 0.0
    %259 = vmatprep.subr.mxu0 0.0
    %260 = vmatpush1.msra.mxu0 0.0
    %261 = vmatprep.subr.mxu0 0.0
    %262 = vmatpush1.msra.mxu0 0.0
    %263 = vmatprep.subr.mxu0 0.0
    %264 = vmatpush1.msra.mxu0 0.0
    %265 = vmatprep.subr.mxu0 0.0
    %266 = vmatpush1.msra.mxu0 0.0
    %267 = vmatprep.subr.mxu0 0.0
    %268 = vmatpush1.msra.mxu0 0.0
    %269 = vmatprep.subr.mxu0 0.0
    %270 = vmatpush1.msra.mxu0 0.0
    %271 = vmatprep.subr.mxu0 0.0
    %272 = vmatpush1.msra.mxu0 0.0
    %273 = vmatprep.subr.mxu0 0.0
    %274 = vmatpush1.msra.mxu0 0.0
    %275 = vmatprep.subr.mxu0 0.0
    %276 = vmatpush1.msra.mxu0 %v243
    %277 = vmatprep.subr.mxu0 0.0
    %278 = vmatpush2.msra.mxu0 0.0
    %279 = vmatprep.subr.mxu0 0.0
    %280 = vmatpush2.msra.mxu0 0.0
    %281 = vmatprep.subr.mxu0 0.0
    %282 = vmatpush2.msra.mxu0 0.0
    %283 = vmatprep.subr.mxu0 0.0
    %284 = vmatpush2.msra.mxu0 0.0
    %285 = vmatprep.subr.mxu0 0.0
    %286 = vmatpush2.msra.mxu0 0.0
    %287 = vmatprep.subr.mxu0 0.0
    %288 = vmatpush2.msra.mxu0 0.0
    %289 = vmatprep.subr.mxu0 0.0
    %290 = vmatpush2.msra.mxu0 0.0
    %291 = vmatprep.subr.mxu0 0.0
    %292 = vmatpush2.msra.mxu0 0.0
    %293 = vmatprep.subr.mxu0 0.0
    %294 = vmatpush2.msra.mxu0 0.0
    %295 = vmatprep.subr.mxu0 0.0
    %296 = vmatpush2.msra.mxu0 0.0
    %297 = vmatprep.subr.mxu0 0.0
    %298 = vmatpush2.msra.mxu0 0.0
    %299 = vmatprep.subr.mxu0 0.0
    %300 = vmatpush2.msra.mxu0 0.0
    %301 = vmatprep.subr.mxu0 0.0
    %302 = vmatpush2.msra.mxu0 0.0
    %303 = vmatprep.subr.mxu0 0.0
    %304 = vmatpush2.msra.mxu0 0.0
    %305 = vmatprep.subr.mxu0 0.0
    %306 = vmatpush2.msra.mxu0 0.0
    %307 = vmatprep.subr.mxu0 0.0
    %308 = vmatpush2.msra.mxu0 0.0
    %309 = vmatprep.mubr.f32.mxu0 0.0
    %310 = vmatmul.mubr.f32.gmra.mxu0 %v76
    %v311 = vpop.f32.mrf.mxu0
    %v312 = vadd.f32 0.0, %v311
    %v313 = vpop.f32.mrf.mxu0
    %314 = vmatprep.mubr.f32.mxu0 0.0
    %315 = vmatmul.mubr.f32.gmra.mxu0 %v79
    %v316 = vpop.f32.mrf.mxu0
    %v317 = vadd.f32 0.0, %v316
    %v318 = vpop.f32.mrf.mxu0
    %319 = vdwg.mxu0
    %vm320 = vcmask 130048
    %v322 = vsel %vm320, %v66, 0
    %v325 = vsel %vm320, %v67, 0
    %327 = vmatprep.subr.mxu0 0.0
    %328 = vmatpush1.msra.mxu0 0.0
    %329 = vmatprep.subr.mxu0 0.0
    %330 = vmatpush1.msra.mxu0 0.0
    %331 = vmatprep.subr.mxu0 0.0
    %332 = vmatpush1.msra.mxu0 0.0
    %333 = vmatprep.subr.mxu0 0.0
    %334 = vmatpush1.msra.mxu0 0.0
    %335 = vmatprep.subr.mxu0 0.0
    %336 = vmatpush1.msra.mxu0 0.0
    %337 = vmatprep.subr.mxu0 0.0
    %338 = vmatpush1.msra.mxu0 0.0
    %339 = vmatprep.subr.mxu0 0.0
    %340 = vmatpush1.msra.mxu0 0.0
    %341 = vmatprep.subr.mxu0 0.0
    %342 = vmatpush1.msra.mxu0 0.0
    %343 = vmatprep.subr.mxu0 0.0
    %344 = vmatpush1.msra.mxu0 0.0
    %345 = vmatprep.subr.mxu0 0.0
    %346 = vmatpush1.msra.mxu0 0.0
    %347 = vmatprep.subr.mxu0 0.0
    %348 = vmatpush1.msra.mxu0 0.0
    %349 = vmatprep.subr.mxu0 0.0
    %350 = vmatpush1.msra.mxu0 0.0
    %351 = vmatprep.subr.mxu0 0.0
    %352 = vmatpush1.msra.mxu0 0.0
    %353 = vmatprep.subr.mxu0 0.0
    %354 = vmatpush1.msra.mxu0 0.0
    %355 = vmatprep.subr.mxu0 0.0
    %356 = vmatpush1.msra.mxu0 %v157
    %357 = vmatprep.subr.mxu0 0.0
    %358 = vmatpush1.msra.mxu0 %v152
    %359 = vmatprep.subr.mxu0 0.0
    %360 = vmatpush2.msra.mxu0 0.0
    %361 = vmatprep.subr.mxu0 0.0
    %362 = vmatpush2.msra.mxu0 0.0
    %363 = vmatprep.subr.mxu0 0.0
    %364 = vmatpush2.msra.mxu0 0.0
    %365 = vmatprep.subr.mxu0 0.0
    %366 = vmatpush2.msra.mxu0 0.0
    %367 = vmatprep.subr.mxu0 0.0
    %368 = vmatpush2.msra.mxu0 0.0
    %369 = vmatprep.subr.mxu0 0.0
    %370 = vmatpush2.msra.mxu0 0.0
    %371 = vmatprep.subr.mxu0 0.0
    %372 = vmatpush2.msra.mxu0 0.0
    %373 = vmatprep.subr.mxu0 0.0
    %374 = vmatpush2.msra.mxu0 0.0
    %375 = vmatprep.subr.mxu0 0.0
    %376 = vmatpush2.msra.mxu0 0.0
    %377 = vmatprep.subr.mxu0 0.0
    %378 = vmatpush2.msra.mxu0 0.0
    %379 = vmatprep.subr.mxu0 0.0
    %380 = vmatpush2.msra.mxu0 0.0
    %381 = vmatprep.subr.mxu0 0.0
    %382 = vmatpush2.msra.mxu0 0.0
    %383 = vmatprep.subr.mxu0 0.0
    %384 = vmatpush2.msra.mxu0 0.0
    %385 = vmatprep.subr.mxu0 0.0
    %386 = vmatpush2.msra.mxu0 0.0
    %387 = vmatprep.subr.mxu0 0.0
    %388 = vmatpush2.msra.mxu0 0.0
    %389 = vmatprep.subr.mxu0 0.0
    %390 = vmatpush2.msra.mxu0 0.0
    %391 = vmatprep.mubr.f32.mxu0 0.0
    %392 = vmatmul.mubr.f32.gmra.mxu0 %v322
    %v393 = vpop.f32.mrf.mxu0
    %v394 = vadd.f32 %v232, %v393
    %v395 = vpop.f32.mrf.mxu0
    %396 = vmatprep.mubr.f32.mxu0 0.0
    %397 = vmatmul.mubr.f32.gmra.mxu0 %v325
    %v398 = vpop.f32.mrf.mxu0
    %v399 = vadd.f32 %v237, %v398
    %v400 = vpop.f32.mrf.mxu0
    %401 = vdwg.mxu0
    %v403 = vsel %vm320, %v69, 0
    %v406 = vsel %vm320, %v70, 0
    %408 = vmatprep.subr.mxu0 0.0
    %409 = vmatpush1.msra.mxu0 0.0
    %410 = vmatprep.subr.mxu0 0.0
    %411 = vmatpush1.msra.mxu0 0.0
    %412 = vmatprep.subr.mxu0 0.0
    %413 = vmatpush1.msra.mxu0 0.0
    %414 = vmatprep.subr.mxu0 0.0
    %415 = vmatpush1.msra.mxu0 0.0
    %416 = vmatprep.subr.mxu0 0.0
    %417 = vmatpush1.msra.mxu0 0.0
    %418 = vmatprep.subr.mxu0 0.0
    %419 = vmatpush1.msra.mxu0 0.0
    %420 = vmatprep.subr.mxu0 0.0
    %421 = vmatpush1.msra.mxu0 0.0
    %422 = vmatprep.subr.mxu0 0.0
    %423 = vmatpush1.msra.mxu0 0.0
    %424 = vmatprep.subr.mxu0 0.0
    %425 = vmatpush1.msra.mxu0 0.0
    %426 = vmatprep.subr.mxu0 0.0
    %427 = vmatpush1.msra.mxu0 0.0
    %428 = vmatprep.subr.mxu0 0.0
    %429 = vmatpush1.msra.mxu0 0.0
    %430 = vmatprep.subr.mxu0 0.0
    %431 = vmatpush1.msra.mxu0 0.0
    %432 = vmatprep.subr.mxu0 0.0
    %433 = vmatpush1.msra.mxu0 0.0
    %434 = vmatprep.subr.mxu0 0.0
    %435 = vmatpush1.msra.mxu0 0.0
    %436 = vmatprep.subr.mxu0 0.0
    %437 = vmatpush1.msra.mxu0 %v317
    %438 = vmatprep.subr.mxu0 0.0
    %439 = vmatpush1.msra.mxu0 %v312
    %440 = vmatprep.subr.mxu0 0.0
    %441 = vmatpush2.msra.mxu0 0.0
    %442 = vmatprep.subr.mxu0 0.0
    %443 = vmatpush2.msra.mxu0 0.0
    %444 = vmatprep.subr.mxu0 0.0
    %445 = vmatpush2.msra.mxu0 0.0
    %446 = vmatprep.subr.mxu0 0.0
    %447 = vmatpush2.msra.mxu0 0.0
    %448 = vmatprep.subr.mxu0 0.0
    %449 = vmatpush2.msra.mxu0 0.0
    %450 = vmatprep.subr.mxu0 0.0
    %451 = vmatpush2.msra.mxu0 0.0
    %452 = vmatprep.subr.mxu0 0.0
    %453 = vmatpush2.msra.mxu0 0.0
    %454 = vmatprep.subr.mxu0 0.0
    %455 = vmatpush2.msra.mxu0 0.0
    %456 = vmatprep.subr.mxu0 0.0
    %457 = vmatpush2.msra.mxu0 0.0
    %458 = vmatprep.subr.mxu0 0.0
    %459 = vmatpush2.msra.mxu0 0.0
    %460 = vmatprep.subr.mxu0 0.0
    %461 = vmatpush2.msra.mxu0 0.0
    %462 = vmatprep.subr.mxu0 0.0
    %463 = vmatpush2.msra.mxu0 0.0
    %464 = vmatprep.subr.mxu0 0.0
    %465 = vmatpush2.msra.mxu0 0.0
    %466 = vmatprep.subr.mxu0 0.0
    %467 = vmatpush2.msra.mxu0 0.0
    %468 = vmatprep.subr.mxu0 0.0
    %469 = vmatpush2.msra.mxu0 0.0
    %470 = vmatprep.subr.mxu0 0.0
    %471 = vmatpush2.msra.mxu0 0.0
    %472 = vmatprep.mubr.f32.mxu0 0.0
    %473 = vmatmul.mubr.f32.gmra.mxu0 %v403
    %v474 = vpop.f32.mrf.mxu0
    %v475 = vadd.f32 0.0, %v474
    %v476 = vpop.f32.mrf.mxu0
    %477 = vmatprep.mubr.f32.mxu0 0.0
    %478 = vmatmul.mubr.f32.gmra.mxu0 %v406
    %v479 = vpop.f32.mrf.mxu0
    %v480 = vadd.f32 0.0, %v479
    %v481 = vpop.f32.mrf.mxu0
    %482 = vdwg.mxu0
    %v483 = vadd.f32 %v394, %v475
    %v484 = vadd.f32 %v399, %v480
    %v485 = vlaneseq
    %v486 = vshrl.u32 %v485, 7
    %v487 = vsub.s32 0, %v486
    %v488 = vrot.slane %v64, %v487
    %v489 = vadd.f32 %v483, %v488
    %v490 = vadd.f32 %v484, %v488
    %v491 = vmul.f32 %v489, 0.5
    %v492 = vmul.f32 %v490, 0.5
    %v493 = vmul.f32 %v489, 0.70710677
    %v494 = vmul.f32 %v490, 0.70710677
    %vm495 = vcmp.ge.f32.partialorder %v493, 0.0
    %vm496 = vcmp.ge.f32.partialorder %v494, 0.0
    %v497 = vsel %vm495, 1.0, -1.0
    %v498 = vsel %vm496, 1.0, -1.0
    %v499 = vand.u32 2147483647, %v493
    %v500 = vand.u32 2147483647, %v494
    %v501 = vmul.f32 %v499, 0.3275911
    %v502 = vmul.f32 %v500, 0.3275911
    %v503 = vadd.f32 %v501, 1.0
    %v504 = vadd.f32 %v502, 1.0
    %v505 = vrcp.pop %v503
    %v506 = vmul.f32 1.0, %v505
    %v507 = vrcp.pop %v504
    %v508 = vmul.f32 1.0, %v507
    %v509 = vmul.f32 %v506, 1.0614054
    %v510 = vmul.f32 %v508, 1.0614054
    %v511 = vadd.f32 %v509, -1.4531521
    %v512 = vadd.f32 %v510, -1.4531521
    %v513 = vmul.f32 %v511, %v506
    %v514 = vmul.f32 %v512, %v508
    %v515 = vadd.f32 %v513, 1.4214138
    %v516 = vadd.f32 %v514, 1.4214138
    %v517 = vmul.f32 %v515, %v506
    %v518 = vmul.f32 %v516, %v508
    %v519 = vadd.f32 %v517, -0.28449672
    %v520 = vadd.f32 %v518, -0.28449672
    %v521 = vmul.f32 %v519, %v506
    %v522 = vmul.f32 %v520, %v508
    %v523 = vadd.f32 %v521, 0.2548296
    %v524 = vadd.f32 %v522, 0.2548296
    %v525 = vmul.f32 %v523, %v506
    %v526 = vmul.f32 %v524, %v508
    %v527 = vsub.f32 0.0, %v499
    %v528 = vsub.f32 0.0, %v500
    %v529 = vmul.f32 %v527, %v499
    %v530 = vmul.f32 %v528, %v500
    %v531 = vmul.f32 %v529, 1.442695
    %v532 = vpow.pop %v531
    %v533 = vmul.f32 %v530, 1.442695
    %v534 = vpow.pop %v533
    %v535 = vmul.f32 %v525, %v532
    %v536 = vmul.f32 %v526, %v534
    %v537 = vsub.f32 1.0, %v535
    %v538 = vsub.f32 1.0, %v536
    %v539 = vmul.f32 %v497, %v537
    %v540 = vmul.f32 %v498, %v538
    %v541 = vadd.f32 %v539, 1.0
    %v542 = vadd.f32 %v540, 1.0
    %v543 = vmul.f32 %v491, %v541
    %v544 = vmul.f32 %v492, %v542
    %v545 = vld [vmem:[%s3] sm:$0xff]
    %v546 = vld [vmem:[%s3 + $0x8] sm:$0xff]
    %v547 = vld [vmem:[%s3 + $0x10] sm:$0xff]
    %v548 = vld [vmem:[%s3 + $0x18] sm:$0xff]
    %vm549 = vcmask 261120
    %v551 = vsel %vm549, %v543, 0
    %v554 = vsel %vm549, %v544, 0
    %556 = vmatprep.subr.mxu0 0.0
    %557 = vmatpush1.msra.mxu0 0.0
    %558 = vmatprep.subr.mxu0 0.0
    %559 = vmatpush1.msra.mxu0 0.0
    %560 = vmatprep.subr.mxu0 0.0
    %561 = vmatpush1.msra.mxu0 0.0
    %562 = vmatprep.subr.mxu0 0.0
    %563 = vmatpush1.msra.mxu0 0.0
    %564 = vmatprep.subr.mxu0 0.0
    %565 = vmatpush1.msra.mxu0 0.0
    %566 = vmatprep.subr.mxu0 0.0
    %567 = vmatpush1.msra.mxu0 0.0
    %568 = vmatprep.subr.mxu0 0.0
    %569 = vmatpush1.msra.mxu0 0.0
    %570 = vmatprep.subr.mxu0 0.0
    %571 = vmatpush1.msra.mxu0 0.0
    %572 = vmatprep.subr.mxu0 0.0
    %573 = vmatpush1.msra.mxu0 0.0
    %574 = vmatprep.subr.mxu0 0.0
    %575 = vmatpush1.msra.mxu0 0.0
    %576 = vmatprep.subr.mxu0 0.0
    %577 = vmatpush1.msra.mxu0 0.0
    %578 = vmatprep.subr.mxu0 0.0
    %579 = vmatpush1.msra.mxu0 0.0
    %580 = vmatprep.subr.mxu0 0.0
    %581 = vmatpush1.msra.mxu0 %v548
    %582 = vmatprep.subr.mxu0 0.0
    %583 = vmatpush1.msra.mxu0 %v547
    %584 = vmatprep.subr.mxu0 0.0
    %585 = vmatpush1.msra.mxu0 %v546
    %586 = vmatprep.subr.mxu0 0.0
    %587 = vmatpush1.msra.mxu0 %v545
    %588 = vmatprep.subr.mxu0 0.0
    %589 = vmatpush2.msra.mxu0 0.0
    %590 = vmatprep.subr.mxu0 0.0
    %591 = vmatpush2.msra.mxu0 0.0
    %592 = vmatprep.subr.mxu0 0.0
    %593 = vmatpush2.msra.mxu0 0.0
    %594 = vmatprep.subr.mxu0 0.0
    %595 = vmatpush2.msra.mxu0 0.0
    %596 = vmatprep.subr.mxu0 0.0
    %597 = vmatpush2.msra.mxu0 0.0
    %598 = vmatprep.subr.mxu0 0.0
    %599 = vmatpush2.msra.mxu0 0.0
    %600 = vmatprep.subr.mxu0 0.0
    %601 = vmatpush2.msra.mxu0 0.0
    %602 = vmatprep.subr.mxu0 0.0
    %603 = vmatpush2.msra.mxu0 0.0
    %604 = vmatprep.subr.mxu0 0.0
    %605 = vmatpush2.msra.mxu0 0.0
    %606 = vmatprep.subr.mxu0 0.0
    %607 = vmatpush2.msra.mxu0 0.0
    %608 = vmatprep.subr.mxu0 0.0
    %609 = vmatpush2.msra.mxu0 0.0
    %610 = vmatprep.subr.mxu0 0.0
    %611 = vmatpush2.msra.mxu0 0.0
    %612 = vmatprep.subr.mxu0 0.0
    %613 = vmatpush2.msra.mxu0 0.0
    %614 = vmatprep.subr.mxu0 0.0
    %615 = vmatpush2.msra.mxu0 0.0
    %616 = vmatprep.subr.mxu0 0.0
    %617 = vmatpush2.msra.mxu0 0.0
    %618 = vmatprep.subr.mxu0 0.0
    %619 = vmatpush2.msra.mxu0 0.0
    %620 = vmatprep.mubr.f32.mxu0 0.0
    %621 = vmatmul.mubr.f32.gmra.mxu0 %v551
    %v622 = vpop.f32.mrf.mxu0
    %v623 = vadd.f32 0.0, %v622
    %v624 = vpop.f32.mrf.mxu0
    %625 = vmatprep.mubr.f32.mxu0 0.0
    %626 = vmatmul.mubr.f32.gmra.mxu0 %v554
    %v627 = vpop.f32.mrf.mxu0
    %v628 = vadd.f32 0.0, %v627
    %v629 = vpop.f32.mrf.mxu0
    %630 = vdwg.mxu0
    %s631 = scalar_lea.vmem %s3, 32
    %v632 = vld [vmem:[%s631] sm:$0xff]
    %v633 = vld [vmem:[%s631 + $0x8] sm:$0xff]
    %v634 = vld [vmem:[%s631 + $0x10] sm:$0xff]
    %v635 = vld [vmem:[%s631 + $0x18] sm:$0xff]
    %636 = vmatprep.subr.mxu0 0.0
    %637 = vmatpush1.msra.mxu0 0.0
    %638 = vmatprep.subr.mxu0 0.0
    %639 = vmatpush1.msra.mxu0 0.0
    %640 = vmatprep.subr.mxu0 0.0
    %641 = vmatpush1.msra.mxu0 0.0
    %642 = vmatprep.subr.mxu0 0.0
    %643 = vmatpush1.msra.mxu0 0.0
    %644 = vmatprep.subr.mxu0 0.0
    %645 = vmatpush1.msra.mxu0 0.0
    %646 = vmatprep.subr.mxu0 0.0
    %647 = vmatpush1.msra.mxu0 0.0
    %648 = vmatprep.subr.mxu0 0.0
    %649 = vmatpush1.msra.mxu0 0.0
    %650 = vmatprep.subr.mxu0 0.0
    %651 = vmatpush1.msra.mxu0 0.0
    %652 = vmatprep.subr.mxu0 0.0
    %653 = vmatpush1.msra.mxu0 0.0
    %654 = vmatprep.subr.mxu0 0.0
    %655 = vmatpush1.msra.mxu0 0.0
    %656 = vmatprep.subr.mxu0 0.0
    %657 = vmatpush1.msra.mxu0 0.0
    %658 = vmatprep.subr.mxu0 0.0
    %659 = vmatpush1.msra.mxu0 0.0
    %660 = vmatprep.subr.mxu0 0.0
    %661 = vmatpush1.msra.mxu0 %v635
    %662 = vmatprep.subr.mxu0 0.0
    %663 = vmatpush1.msra.mxu0 %v634
    %664 = vmatprep.subr.mxu0 0.0
    %665 = vmatpush1.msra.mxu0 %v633
    %666 = vmatprep.subr.mxu0 0.0
    %667 = vmatpush1.msra.mxu0 %v632
    %668 = vmatprep.subr.mxu0 0.0
    %669 = vmatpush2.msra.mxu0 0.0
    %670 = vmatprep.subr.mxu0 0.0
    %671 = vmatpush2.msra.mxu0 0.0
    %672 = vmatprep.subr.mxu0 0.0
    %673 = vmatpush2.msra.mxu0 0.0
    %674 = vmatprep.subr.mxu0 0.0
    %675 = vmatpush2.msra.mxu0 0.0
    %676 = vmatprep.subr.mxu0 0.0
    %677 = vmatpush2.msra.mxu0 0.0
    %678 = vmatprep.subr.mxu0 0.0
    %679 = vmatpush2.msra.mxu0 0.0
    %680 = vmatprep.subr.mxu0 0.0
    %681 = vmatpush2.msra.mxu0 0.0
    %682 = vmatprep.subr.mxu0 0.0
    %683 = vmatpush2.msra.mxu0 0.0
    %684 = vmatprep.subr.mxu0 0.0
    %685 = vmatpush2.msra.mxu0 0.0
    %686 = vmatprep.subr.mxu0 0.0
    %687 = vmatpush2.msra.mxu0 0.0
    %688 = vmatprep.subr.mxu0 0.0
    %689 = vmatpush2.msra.mxu0 0.0
    %690 = vmatprep.subr.mxu0 0.0
    %691 = vmatpush2.msra.mxu0 0.0
    %692 = vmatprep.subr.mxu0 0.0
    %693 = vmatpush2.msra.mxu0 0.0
    %694 = vmatprep.subr.mxu0 0.0
    %695 = vmatpush2.msra.mxu0 0.0
    %696 = vmatprep.subr.mxu0 0.0
    %697 = vmatpush2.msra.mxu0 0.0
    %698 = vmatprep.subr.mxu0 0.0
    %699 = vmatpush2.msra.mxu0 0.0
    %700 = vmatprep.mubr.f32.mxu0 0.0
    %701 = vmatmul.mubr.f32.gmra.mxu0 %v551
    %v702 = vpop.f32.mrf.mxu0
    %v703 = vadd.f32 0.0, %v702
    %v704 = vpop.f32.mrf.mxu0
    %705 = vmatprep.mubr.f32.mxu0 0.0
    %706 = vmatmul.mubr.f32.gmra.mxu0 %v554
    %v707 = vpop.f32.mrf.mxu0
    %v708 = vadd.f32 0.0, %v707
    %v709 = vpop.f32.mrf.mxu0
    %710 = vdwg.mxu0
    %s711 = scalar_lea.vmem %s3, 64
    %v712 = vld [vmem:[%s711] sm:$0xff]
    %v713 = vld [vmem:[%s711 + $0x8] sm:$0xff]
    %v714 = vld [vmem:[%s711 + $0x10] sm:$0xff]
    %v715 = vld [vmem:[%s711 + $0x18] sm:$0xff]
    %716 = vmatprep.subr.mxu0 0.0
    %717 = vmatpush1.msra.mxu0 0.0
    %718 = vmatprep.subr.mxu0 0.0
    %719 = vmatpush1.msra.mxu0 0.0
    %720 = vmatprep.subr.mxu0 0.0
    %721 = vmatpush1.msra.mxu0 0.0
    %722 = vmatprep.subr.mxu0 0.0
    %723 = vmatpush1.msra.mxu0 0.0
    %724 = vmatprep.subr.mxu0 0.0
    %725 = vmatpush1.msra.mxu0 0.0
    %726 = vmatprep.subr.mxu0 0.0
    %727 = vmatpush1.msra.mxu0 0.0
    %728 = vmatprep.subr.mxu0 0.0
    %729 = vmatpush1.msra.mxu0 0.0
    %730 = vmatprep.subr.mxu0 0.0
    %731 = vmatpush1.msra.mxu0 0.0
    %732 = vmatprep.subr.mxu0 0.0
    %733 = vmatpush1.msra.mxu0 0.0
    %734 = vmatprep.subr.mxu0 0.0
    %735 = vmatpush1.msra.mxu0 0.0
    %736 = vmatprep.subr.mxu0 0.0
    %737 = vmatpush1.msra.mxu0 0.0
    %738 = vmatprep.subr.mxu0 0.0
    %739 = vmatpush1.msra.mxu0 0.0
    %740 = vmatprep.subr.mxu0 0.0
    %741 = vmatpush1.msra.mxu0 %v715
    %742 = vmatprep.subr.mxu0 0.0
    %743 = vmatpush1.msra.mxu0 %v714
    %744 = vmatprep.subr.mxu0 0.0
    %745 = vmatpush1.msra.mxu0 %v713
    %746 = vmatprep.subr.mxu0 0.0
    %747 = vmatpush1.msra.mxu0 %v712
    %748 = vmatprep.subr.mxu0 0.0
    %749 = vmatpush2.msra.mxu0 0.0
    %750 = vmatprep.subr.mxu0 0.0
    %751 = vmatpush2.msra.mxu0 0.0
    %752 = vmatprep.subr.mxu0 0.0
    %753 = vmatpush2.msra.mxu0 0.0
    %754 = vmatprep.subr.mxu0 0.0
    %755 = vmatpush2.msra.mxu0 0.0
    %756 = vmatprep.subr.mxu0 0.0
    %757 = vmatpush2.msra.mxu0 0.0
    %758 = vmatprep.subr.mxu0 0.0
    %759 = vmatpush2.msra.mxu0 0.0
    %760 = vmatprep.subr.mxu0 0.0
    %761 = vmatpush2.msra.mxu0 0.0
    %762 = vmatprep.subr.mxu0 0.0
    %763 = vmatpush2.msra.mxu0 0.0
    %764 = vmatprep.subr.mxu0 0.0
    %765 = vmatpush2.msra.mxu0 0.0
    %766 = vmatprep.subr.mxu0 0.0
    %767 = vmatpush2.msra.mxu0 0.0
    %768 = vmatprep.subr.mxu0 0.0
    %769 = vmatpush2.msra.mxu0 0.0
    %770 = vmatprep.subr.mxu0 0.0
    %771 = vmatpush2.msra.mxu0 0.0
    %772 = vmatprep.subr.mxu0 0.0
    %773 = vmatpush2.msra.mxu0 0.0
    %774 = vmatprep.subr.mxu0 0.0
    %775 = vmatpush2.msra.mxu0 0.0
    %776 = vmatprep.subr.mxu0 0.0
    %777 = vmatpush2.msra.mxu0 0.0
    %778 = vmatprep.subr.mxu0 0.0
    %779 = vmatpush2.msra.mxu0 0.0
    %780 = vmatprep.mubr.f32.mxu0 0.0
    %781 = vmatmul.mubr.f32.gmra.mxu0 %v551
    %v782 = vpop.f32.mrf.mxu0
    %v783 = vadd.f32 0.0, %v782
    %v784 = vpop.f32.mrf.mxu0
    %785 = vmatprep.mubr.f32.mxu0 0.0
    %786 = vmatmul.mubr.f32.gmra.mxu0 %v554
    %v787 = vpop.f32.mrf.mxu0
    %v788 = vadd.f32 0.0, %v787
    %v789 = vpop.f32.mrf.mxu0
    %790 = vdwg.mxu0
    %791 = vmatprep.subr.mxu0 0.0
    %792 = vmatpush1.msra.mxu0 0.0
    %793 = vmatprep.subr.mxu0 0.0
    %794 = vmatpush1.msra.mxu0 0.0
    %795 = vmatprep.subr.mxu0 0.0
    %796 = vmatpush1.msra.mxu0 0.0
    %797 = vmatprep.subr.mxu0 0.0
    %798 = vmatpush1.msra.mxu0 0.0
    %799 = vmatprep.subr.mxu0 0.0
    %800 = vmatpush1.msra.mxu0 0.0
    %801 = vmatprep.subr.mxu0 0.0
    %802 = vmatpush1.msra.mxu0 0.0
    %803 = vmatprep.subr.mxu0 0.0
    %804 = vmatpush1.msra.mxu0 0.0
    %805 = vmatprep.subr.mxu0 0.0
    %806 = vmatpush1.msra.mxu0 0.0
    %807 = vmatprep.subr.mxu0 0.0
    %808 = vmatpush1.msra.mxu0 0.0
    %809 = vmatprep.subr.mxu0 0.0
    %810 = vmatpush1.msra.mxu0 0.0
    %811 = vmatprep.subr.mxu0 0.0
    %812 = vmatpush1.msra.mxu0 0.0
    %813 = vmatprep.subr.mxu0 0.0
    %814 = vmatpush1.msra.mxu0 0.0
    %815 = vmatprep.subr.mxu0 0.0
    %816 = vmatpush1.msra.mxu0 0.0
    %817 = vmatprep.subr.mxu0 0.0
    %818 = vmatpush1.msra.mxu0 0.0
    %819 = vmatprep.subr.mxu0 0.0
    %820 = vmatpush1.msra.mxu0 %v628
    %821 = vmatprep.subr.mxu0 0.0
    %822 = vmatpush1.msra.mxu0 %v623
    %823 = vmatprep.subr.mxu0 0.0
    %824 = vmatpush2.msra.mxu0 0.0
    %825 = vmatprep.subr.mxu0 0.0
    %826 = vmatpush2.msra.mxu0 0.0
    %827 = vmatprep.subr.mxu0 0.0
    %828 = vmatpush2.msra.mxu0 0.0
    %829 = vmatprep.subr.mxu0 0.0
    %830 = vmatpush2.msra.mxu0 0.0
    %831 = vmatprep.subr.mxu0 0.0
    %832 = vmatpush2.msra.mxu0 0.0
    %833 = vmatprep.subr.mxu0 0.0
    %834 = vmatpush2.msra.mxu0 0.0
    %835 = vmatprep.subr.mxu0 0.0
    %836 = vmatpush2.msra.mxu0 0.0
    %837 = vmatprep.subr.mxu0 0.0
    %838 = vmatpush2.msra.mxu0 0.0
    %839 = vmatprep.subr.mxu0 0.0
    %840 = vmatpush2.msra.mxu0 0.0
    %841 = vmatprep.subr.mxu0 0.0
    %842 = vmatpush2.msra.mxu0 0.0
    %843 = vmatprep.subr.mxu0 0.0
    %844 = vmatpush2.msra.mxu0 0.0
    %845 = vmatprep.subr.mxu0 0.0
    %846 = vmatpush2.msra.mxu0 0.0
    %847 = vmatprep.subr.mxu0 0.0
    %848 = vmatpush2.msra.mxu0 0.0
    %849 = vmatprep.subr.mxu0 0.0
    %850 = vmatpush2.msra.mxu0 0.0
    %851 = vmatprep.subr.mxu0 0.0
    %852 = vmatpush2.msra.mxu0 0.0
    %853 = vmatprep.subr.mxu0 0.0
    %854 = vmatpush2.msra.mxu0 0.0
    %855 = vmatprep.mubr.f32.mxu0 0.0
    %856 = vmatmul.mubr.f32.gmra.mxu0 %v322
    %v857 = vpop.f32.mrf.mxu0
    %v858 = vadd.f32 %v703, %v857
    %v859 = vpop.f32.mrf.mxu0
    %860 = vmatprep.mubr.f32.mxu0 0.0
    %861 = vmatmul.mubr.f32.gmra.mxu0 %v325
    %v862 = vpop.f32.mrf.mxu0
    %v863 = vadd.f32 %v708, %v862
    %v864 = vpop.f32.mrf.mxu0
    %865 = vdwg.mxu0
    %866 = vmatprep.subr.mxu0 0.0
    %867 = vmatpush1.msra.mxu0 0.0
    %868 = vmatprep.subr.mxu0 0.0
    %869 = vmatpush1.msra.mxu0 0.0
    %870 = vmatprep.subr.mxu0 0.0
    %871 = vmatpush1.msra.mxu0 0.0
    %872 = vmatprep.subr.mxu0 0.0
    %873 = vmatpush1.msra.mxu0 0.0
    %874 = vmatprep.subr.mxu0 0.0
    %875 = vmatpush1.msra.mxu0 0.0
    %876 = vmatprep.subr.mxu0 0.0
    %877 = vmatpush1.msra.mxu0 0.0
    %878 = vmatprep.subr.mxu0 0.0
    %879 = vmatpush1.msra.mxu0 0.0
    %880 = vmatprep.subr.mxu0 0.0
    %881 = vmatpush1.msra.mxu0 0.0
    %882 = vmatprep.subr.mxu0 0.0
    %883 = vmatpush1.msra.mxu0 0.0
    %884 = vmatprep.subr.mxu0 0.0
    %885 = vmatpush1.msra.mxu0 0.0
    %886 = vmatprep.subr.mxu0 0.0
    %887 = vmatpush1.msra.mxu0 0.0
    %888 = vmatprep.subr.mxu0 0.0
    %889 = vmatpush1.msra.mxu0 0.0
    %890 = vmatprep.subr.mxu0 0.0
    %891 = vmatpush1.msra.mxu0 0.0
    %892 = vmatprep.subr.mxu0 0.0
    %893 = vmatpush1.msra.mxu0 0.0
    %894 = vmatprep.subr.mxu0 0.0
    %895 = vmatpush1.msra.mxu0 %v788
    %896 = vmatprep.subr.mxu0 0.0
    %897 = vmatpush1.msra.mxu0 %v783
    %898 = vmatprep.subr.mxu0 0.0
    %899 = vmatpush2.msra.mxu0 0.0
    %900 = vmatprep.subr.mxu0 0.0
    %901 = vmatpush2.msra.mxu0 0.0
    %902 = vmatprep.subr.mxu0 0.0
    %903 = vmatpush2.msra.mxu0 0.0
    %904 = vmatprep.subr.mxu0 0.0
    %905 = vmatpush2.msra.mxu0 0.0
    %906 = vmatprep.subr.mxu0 0.0
    %907 = vmatpush2.msra.mxu0 0.0
    %908 = vmatprep.subr.mxu0 0.0
    %909 = vmatpush2.msra.mxu0 0.0
    %910 = vmatprep.subr.mxu0 0.0
    %911 = vmatpush2.msra.mxu0 0.0
    %912 = vmatprep.subr.mxu0 0.0
    %913 = vmatpush2.msra.mxu0 0.0
    %914 = vmatprep.subr.mxu0 0.0
    %915 = vmatpush2.msra.mxu0 0.0
    %916 = vmatprep.subr.mxu0 0.0
    %917 = vmatpush2.msra.mxu0 0.0
    %918 = vmatprep.subr.mxu0 0.0
    %919 = vmatpush2.msra.mxu0 0.0
    %920 = vmatprep.subr.mxu0 0.0
    %921 = vmatpush2.msra.mxu0 0.0
    %922 = vmatprep.subr.mxu0 0.0
    %923 = vmatpush2.msra.mxu0 0.0
    %924 = vmatprep.subr.mxu0 0.0
    %925 = vmatpush2.msra.mxu0 0.0
    %926 = vmatprep.subr.mxu0 0.0
    %927 = vmatpush2.msra.mxu0 0.0
    %928 = vmatprep.subr.mxu0 0.0
    %929 = vmatpush2.msra.mxu0 0.0
    %930 = vmatprep.mubr.f32.mxu0 0.0
    %931 = vmatmul.mubr.f32.gmra.mxu0 %v403
    %v932 = vpop.f32.mrf.mxu0
    %v933 = vadd.f32 0.0, %v932
    %v934 = vpop.f32.mrf.mxu0
    %935 = vmatprep.mubr.f32.mxu0 0.0
    %936 = vmatmul.mubr.f32.gmra.mxu0 %v406
    %v937 = vpop.f32.mrf.mxu0
    %v938 = vadd.f32 0.0, %v937
    %v939 = vpop.f32.mrf.mxu0
    %940 = vdwg.mxu0
    %v941 = vadd.f32 %v858, %v933
    %v942 = vadd.f32 %v863, %v938
    %v943 = vlaneseq
    %v944 = vshrl.u32 %v943, 7
    %v945 = vsub.s32 1, %v944
    %v946 = vrot.slane %v64, %v945
    %v947 = vadd.f32 %v941, %v946
    %v948 = vadd.f32 %v942, %v946
    %v949 = vmul.f32 %v947, 0.5
    %v950 = vmul.f32 %v948, 0.5
    %v951 = vmul.f32 %v947, 0.70710677
    %v952 = vmul.f32 %v948, 0.70710677
    %vm953 = vcmp.ge.f32.partialorder %v951, 0.0
    %vm954 = vcmp.ge.f32.partialorder %v952, 0.0
    %v955 = vsel %vm953, 1.0, -1.0
    %v956 = vsel %vm954, 1.0, -1.0
    %v957 = vand.u32 2147483647, %v951
    %v958 = vand.u32 2147483647, %v952
    %v959 = vmul.f32 %v957, 0.3275911
    %v960 = vmul.f32 %v958, 0.3275911
    %v961 = vadd.f32 %v959, 1.0
    %v962 = vadd.f32 %v960, 1.0
    %v963 = vrcp.pop %v961
    %v964 = vmul.f32 1.0, %v963
    %v965 = vrcp.pop %v962
    %v966 = vmul.f32 1.0, %v965
    %v967 = vmul.f32 %v964, 1.0614054
    %v968 = vmul.f32 %v966, 1.0614054
    %v969 = vadd.f32 %v967, -1.4531521
    %v970 = vadd.f32 %v968, -1.4531521
    %v971 = vmul.f32 %v969, %v964
    %v972 = vmul.f32 %v970, %v966
    %v973 = vadd.f32 %v971, 1.4214138
    %v974 = vadd.f32 %v972, 1.4214138
    %v975 = vmul.f32 %v973, %v964
    %v976 = vmul.f32 %v974, %v966
    %v977 = vadd.f32 %v975, -0.28449672
    %v978 = vadd.f32 %v976, -0.28449672
    %v979 = vmul.f32 %v977, %v964
    %v980 = vmul.f32 %v978, %v966
    %v981 = vadd.f32 %v979, 0.2548296
    %v982 = vadd.f32 %v980, 0.2548296
    %v983 = vmul.f32 %v981, %v964
    %v984 = vmul.f32 %v982, %v966
    %v985 = vsub.f32 0.0, %v957
    %v986 = vsub.f32 0.0, %v958
    %v987 = vmul.f32 %v985, %v957
    %v988 = vmul.f32 %v986, %v958
    %v989 = vmul.f32 %v987, 1.442695
    %v990 = vpow.pop %v989
    %v991 = vmul.f32 %v988, 1.442695
    %v992 = vpow.pop %v991
    %v993 = vmul.f32 %v983, %v990
    %v994 = vmul.f32 %v984, %v992
    %v995 = vsub.f32 1.0, %v993
    %v996 = vsub.f32 1.0, %v994
    %v997 = vmul.f32 %v955, %v995
    %v998 = vmul.f32 %v956, %v996
    %v999 = vadd.f32 %v997, 1.0
    %v1000 = vadd.f32 %v998, 1.0
    %v1001 = vmul.f32 %v949, %v999
    %v1002 = vmul.f32 %v950, %v1000
    %v1003 = vld [vmem:[%s5] sm:$0xff]
    %v1004 = vld [vmem:[%s5 + $0x8] sm:$0xff]
    %v1005 = vadd.f32 %v1001, %v1003
    %v1006 = vadd.f32 %v1002, %v1004
    %v1007 = vld [vmem:[%s4] sm:$0xff]
    %v1008 = vld [vmem:[%s4 + $0x8] sm:$0xff]
    %v1009 = vld [vmem:[%s4 + $0x10] sm:$0xff]
    %v1010 = vld [vmem:[%s4 + $0x18] sm:$0xff]
    %v1012 = vsel %vm549, %v1005, 0
    %v1015 = vsel %vm549, %v1006, 0
    %1017 = vmatprep.subr.mxu0 0.0
    %1018 = vmatpush1.msra.mxu0 0.0
    %1019 = vmatprep.subr.mxu0 0.0
    %1020 = vmatpush1.msra.mxu0 0.0
    %1021 = vmatprep.subr.mxu0 0.0
    %1022 = vmatpush1.msra.mxu0 0.0
    %1023 = vmatprep.subr.mxu0 0.0
    %1024 = vmatpush1.msra.mxu0 0.0
    %1025 = vmatprep.subr.mxu0 0.0
    %1026 = vmatpush1.msra.mxu0 0.0
    %1027 = vmatprep.subr.mxu0 0.0
    %1028 = vmatpush1.msra.mxu0 0.0
    %1029 = vmatprep.subr.mxu0 0.0
    %1030 = vmatpush1.msra.mxu0 0.0
    %1031 = vmatprep.subr.mxu0 0.0
    %1032 = vmatpush1.msra.mxu0 0.0
    %1033 = vmatprep.subr.mxu0 0.0
    %1034 = vmatpush1.msra.mxu0 0.0
    %1035 = vmatprep.subr.mxu0 0.0
    %1036 = vmatpush1.msra.mxu0 0.0
    %1037 = vmatprep.subr.mxu0 0.0
    %1038 = vmatpush1.msra.mxu0 0.0
    %1039 = vmatprep.subr.mxu0 0.0
    %1040 = vmatpush1.msra.mxu0 0.0
    %1041 = vmatprep.subr.mxu0 0.0
    %1042 = vmatpush1.msra.mxu0 %v1010
    %1043 = vmatprep.subr.mxu0 0.0
    %1044 = vmatpush1.msra.mxu0 %v1009
    %1045 = vmatprep.subr.mxu0 0.0
    %1046 = vmatpush1.msra.mxu0 %v1008
    %1047 = vmatprep.subr.mxu0 0.0
    %1048 = vmatpush1.msra.mxu0 %v1007
    %1049 = vmatprep.subr.mxu0 0.0
    %1050 = vmatpush2.msra.mxu0 0.0
    %1051 = vmatprep.subr.mxu0 0.0
    %1052 = vmatpush2.msra.mxu0 0.0
    %1053 = vmatprep.subr.mxu0 0.0
    %1054 = vmatpush2.msra.mxu0 0.0
    %1055 = vmatprep.subr.mxu0 0.0
    %1056 = vmatpush2.msra.mxu0 0.0
    %1057 = vmatprep.subr.mxu0 0.0
    %1058 = vmatpush2.msra.mxu0 0.0
    %1059 = vmatprep.subr.mxu0 0.0
    %1060 = vmatpush2.msra.mxu0 0.0
    %1061 = vmatprep.subr.mxu0 0.0
    %1062 = vmatpush2.msra.mxu0 0.0
    %1063 = vmatprep.subr.mxu0 0.0
    %1064 = vmatpush2.msra.mxu0 0.0
    %1065 = vmatprep.subr.mxu0 0.0
    %1066 = vmatpush2.msra.mxu0 0.0
    %1067 = vmatprep.subr.mxu0 0.0
    %1068 = vmatpush2.msra.mxu0 0.0
    %1069 = vmatprep.subr.mxu0 0.0
    %1070 = vmatpush2.msra.mxu0 0.0
    %1071 = vmatprep.subr.mxu0 0.0
    %1072 = vmatpush2.msra.mxu0 0.0
    %1073 = vmatprep.subr.mxu0 0.0
    %1074 = vmatpush2.msra.mxu0 0.0
    %1075 = vmatprep.subr.mxu0 0.0
    %1076 = vmatpush2.msra.mxu0 0.0
    %1077 = vmatprep.subr.mxu0 0.0
    %1078 = vmatpush2.msra.mxu0 0.0
    %1079 = vmatprep.subr.mxu0 0.0
    %1080 = vmatpush2.msra.mxu0 0.0
    %1081 = vmatprep.mubr.f32.mxu0 0.0
    %1082 = vmatmul.mubr.f32.gmra.mxu0 %v1012
    %v1083 = vpop.f32.mrf.mxu0
    %v1084 = vadd.f32 0.0, %v1083
    %v1085 = vpop.f32.mrf.mxu0
    %1086 = vmatprep.mubr.f32.mxu0 0.0
    %1087 = vmatmul.mubr.f32.gmra.mxu0 %v1015
    %v1088 = vpop.f32.mrf.mxu0
    %v1089 = vadd.f32 0.0, %v1088
    %v1090 = vpop.f32.mrf.mxu0
    %1091 = vdwg.mxu0
    %s1092 = scalar_lea.vmem %s4, 32
    %v1093 = vld [vmem:[%s1092] sm:$0xff]
    %v1094 = vld [vmem:[%s1092 + $0x8] sm:$0xff]
    %v1095 = vld [vmem:[%s1092 + $0x10] sm:$0xff]
    %v1096 = vld [vmem:[%s1092 + $0x18] sm:$0xff]
    %1097 = vmatprep.subr.mxu0 0.0
    %1098 = vmatpush1.msra.mxu0 0.0
    %1099 = vmatprep.subr.mxu0 0.0
    %1100 = vmatpush1.msra.mxu0 0.0
    %1101 = vmatprep.subr.mxu0 0.0
    %1102 = vmatpush1.msra.mxu0 0.0
    %1103 = vmatprep.subr.mxu0 0.0
    %1104 = vmatpush1.msra.mxu0 0.0
    %1105 = vmatprep.subr.mxu0 0.0
    %1106 = vmatpush1.msra.mxu0 0.0
    %1107 = vmatprep.subr.mxu0 0.0
    %1108 = vmatpush1.msra.mxu0 0.0
    %1109 = vmatprep.subr.mxu0 0.0
    %1110 = vmatpush1.msra.mxu0 0.0
    %1111 = vmatprep.subr.mxu0 0.0
    %1112 = vmatpush1.msra.mxu0 0.0
    %1113 = vmatprep.subr.mxu0 0.0
    %1114 = vmatpush1.msra.mxu0 0.0
    %1115 = vmatprep.subr.mxu0 0.0
    %1116 = vmatpush1.msra.mxu0 0.0
    %1117 = vmatprep.subr.mxu0 0.0
    %1118 = vmatpush1.msra.mxu0 0.0
    %1119 = vmatprep.subr.mxu0 0.0
    %1120 = vmatpush1.msra.mxu0 0.0
    %1121 = vmatprep.subr.mxu0 0.0
    %1122 = vmatpush1.msra.mxu0 %v1096
    %1123 = vmatprep.subr.mxu0 0.0
    %1124 = vmatpush1.msra.mxu0 %v1095
    %1125 = vmatprep.subr.mxu0 0.0
    %1126 = vmatpush1.msra.mxu0 %v1094
    %1127 = vmatprep.subr.mxu0 0.0
    %1128 = vmatpush1.msra.mxu0 %v1093
    %1129 = vmatprep.subr.mxu0 0.0
    %1130 = vmatpush2.msra.mxu0 0.0
    %1131 = vmatprep.subr.mxu0 0.0
    %1132 = vmatpush2.msra.mxu0 0.0
    %1133 = vmatprep.subr.mxu0 0.0
    %1134 = vmatpush2.msra.mxu0 0.0
    %1135 = vmatprep.subr.mxu0 0.0
    %1136 = vmatpush2.msra.mxu0 0.0
    %1137 = vmatprep.subr.mxu0 0.0
    %1138 = vmatpush2.msra.mxu0 0.0
    %1139 = vmatprep.subr.mxu0 0.0
    %1140 = vmatpush2.msra.mxu0 0.0
    %1141 = vmatprep.subr.mxu0 0.0
    %1142 = vmatpush2.msra.mxu0 0.0
    %1143 = vmatprep.subr.mxu0 0.0
    %1144 = vmatpush2.msra.mxu0 0.0
    %1145 = vmatprep.subr.mxu0 0.0
    %1146 = vmatpush2.msra.mxu0 0.0
    %1147 = vmatprep.subr.mxu0 0.0
    %1148 = vmatpush2.msra.mxu0 0.0
    %1149 = vmatprep.subr.mxu0 0.0
    %1150 = vmatpush2.msra.mxu0 0.0
    %1151 = vmatprep.subr.mxu0 0.0
    %1152 = vmatpush2.msra.mxu0 0.0
    %1153 = vmatprep.subr.mxu0 0.0
    %1154 = vmatpush2.msra.mxu0 0.0
    %1155 = vmatprep.subr.mxu0 0.0
    %1156 = vmatpush2.msra.mxu0 0.0
    %1157 = vmatprep.subr.mxu0 0.0
    %1158 = vmatpush2.msra.mxu0 0.0
    %1159 = vmatprep.subr.mxu0 0.0
    %1160 = vmatpush2.msra.mxu0 0.0
    %1161 = vmatprep.mubr.f32.mxu0 0.0
    %1162 = vmatmul.mubr.f32.gmra.mxu0 %v1012
    %v1163 = vpop.f32.mrf.mxu0
    %v1164 = vadd.f32 0.0, %v1163
    %v1165 = vpop.f32.mrf.mxu0
    %1166 = vmatprep.mubr.f32.mxu0 0.0
    %1167 = vmatmul.mubr.f32.gmra.mxu0 %v1015
    %v1168 = vpop.f32.mrf.mxu0
    %v1169 = vadd.f32 0.0, %v1168
    %v1170 = vpop.f32.mrf.mxu0
    %1171 = vdwg.mxu0
    %s1172 = scalar_lea.vmem %s4, 64
    %v1173 = vld [vmem:[%s1172] sm:$0xff]
    %v1174 = vld [vmem:[%s1172 + $0x8] sm:$0xff]
    %v1175 = vld [vmem:[%s1172 + $0x10] sm:$0xff]
    %v1176 = vld [vmem:[%s1172 + $0x18] sm:$0xff]
    %1177 = vmatprep.subr.mxu0 0.0
    %1178 = vmatpush1.msra.mxu0 0.0
    %1179 = vmatprep.subr.mxu0 0.0
    %1180 = vmatpush1.msra.mxu0 0.0
    %1181 = vmatprep.subr.mxu0 0.0
    %1182 = vmatpush1.msra.mxu0 0.0
    %1183 = vmatprep.subr.mxu0 0.0
    %1184 = vmatpush1.msra.mxu0 0.0
    %1185 = vmatprep.subr.mxu0 0.0
    %1186 = vmatpush1.msra.mxu0 0.0
    %1187 = vmatprep.subr.mxu0 0.0
    %1188 = vmatpush1.msra.mxu0 0.0
    %1189 = vmatprep.subr.mxu0 0.0
    %1190 = vmatpush1.msra.mxu0 0.0
    %1191 = vmatprep.subr.mxu0 0.0
    %1192 = vmatpush1.msra.mxu0 0.0
    %1193 = vmatprep.subr.mxu0 0.0
    %1194 = vmatpush1.msra.mxu0 0.0
    %1195 = vmatprep.subr.mxu0 0.0
    %1196 = vmatpush1.msra.mxu0 0.0
    %1197 = vmatprep.subr.mxu0 0.0
    %1198 = vmatpush1.msra.mxu0 0.0
    %1199 = vmatprep.subr.mxu0 0.0
    %1200 = vmatpush1.msra.mxu0 0.0
    %1201 = vmatprep.subr.mxu0 0.0
    %1202 = vmatpush1.msra.mxu0 %v1176
    %1203 = vmatprep.subr.mxu0 0.0
    %1204 = vmatpush1.msra.mxu0 %v1175
    %1205 = vmatprep.subr.mxu0 0.0
    %1206 = vmatpush1.msra.mxu0 %v1174
    %1207 = vmatprep.subr.mxu0 0.0
    %1208 = vmatpush1.msra.mxu0 %v1173
    %1209 = vmatprep.subr.mxu0 0.0
    %1210 = vmatpush2.msra.mxu0 0.0
    %1211 = vmatprep.subr.mxu0 0.0
    %1212 = vmatpush2.msra.mxu0 0.0
    %1213 = vmatprep.subr.mxu0 0.0
    %1214 = vmatpush2.msra.mxu0 0.0
    %1215 = vmatprep.subr.mxu0 0.0
    %1216 = vmatpush2.msra.mxu0 0.0
    %1217 = vmatprep.subr.mxu0 0.0
    %1218 = vmatpush2.msra.mxu0 0.0
    %1219 = vmatprep.subr.mxu0 0.0
    %1220 = vmatpush2.msra.mxu0 0.0
    %1221 = vmatprep.subr.mxu0 0.0
    %1222 = vmatpush2.msra.mxu0 0.0
    %1223 = vmatprep.subr.mxu0 0.0
    %1224 = vmatpush2.msra.mxu0 0.0
    %1225 = vmatprep.subr.mxu0 0.0
    %1226 = vmatpush2.msra.mxu0 0.0
    %1227 = vmatprep.subr.mxu0 0.0
    %1228 = vmatpush2.msra.mxu0 0.0
    %1229 = vmatprep.subr.mxu0 0.0
    %1230 = vmatpush2.msra.mxu0 0.0
    %1231 = vmatprep.subr.mxu0 0.0
    %1232 = vmatpush2.msra.mxu0 0.0
    %1233 = vmatprep.subr.mxu0 0.0
    %1234 = vmatpush2.msra.mxu0 0.0
    %1235 = vmatprep.subr.mxu0 0.0
    %1236 = vmatpush2.msra.mxu0 0.0
    %1237 = vmatprep.subr.mxu0 0.0
    %1238 = vmatpush2.msra.mxu0 0.0
    %1239 = vmatprep.subr.mxu0 0.0
    %1240 = vmatpush2.msra.mxu0 0.0
    %1241 = vmatprep.mubr.f32.mxu0 0.0
    %1242 = vmatmul.mubr.f32.gmra.mxu0 %v1012
    %v1243 = vpop.f32.mrf.mxu0
    %v1244 = vadd.f32 0.0, %v1243
    %v1245 = vpop.f32.mrf.mxu0
    %1246 = vmatprep.mubr.f32.mxu0 0.0
    %1247 = vmatmul.mubr.f32.gmra.mxu0 %v1015
    %v1248 = vpop.f32.mrf.mxu0
    %v1249 = vadd.f32 0.0, %v1248
    %v1250 = vpop.f32.mrf.mxu0
    %1251 = vdwg.mxu0
    %v1252 = vld [vmem:[%s8] sm:$0xff]
    %v1253 = vld [vmem:[%s8 + $0x8] sm:$0xff]
    %v1254 = vld [vmem:[%s8 + $0x10] sm:$0xff]
    %v1255 = vld [vmem:[%s8 + $0x18] sm:$0xff]
    %v1256 = vld [vmem:[%s8 + $0x20] sm:$0xff]
    %v1257 = vld [vmem:[%s8 + $0x28] sm:$0xff]
    %v1258 = vld [vmem:[%s8 + $0x30] sm:$0xff]
    %v1259 = vld [vmem:[%s8 + $0x38] sm:$0xff]
    %v1260 = vld [vmem:[%s8 + $0x40] sm:$0xff]
    %v1261 = vld [vmem:[%s8 + $0x48] sm:$0xff]
    %v1262 = vld [vmem:[%s8 + $0x50] sm:$0xff]
    %v1263 = vld [vmem:[%s8 + $0x58] sm:$0xff]
    %v1264 = vld [vmem:[%s8 + $0x60] sm:$0xff]
    %v1265 = vld [vmem:[%s8 + $0x68] sm:$0xff]
    %v1266 = vld [vmem:[%s8 + $0x70] sm:$0xff]
    %v1267 = vld [vmem:[%s8 + $0x78] sm:$0xff]
    %v1268 = vld [vmem:[%s9] sm:$0xff]
    %v1269 = vld [vmem:[%s9 + $0x8] sm:$0xff]
    %v1270 = vld [vmem:[%s9 + $0x10] sm:$0xff]
    %v1271 = vld [vmem:[%s9 + $0x18] sm:$0xff]
    %v1272 = vld [vmem:[%s9 + $0x20] sm:$0xff]
    %v1273 = vld [vmem:[%s9 + $0x28] sm:$0xff]
    %v1274 = vld [vmem:[%s9 + $0x30] sm:$0xff]
    %v1275 = vld [vmem:[%s9 + $0x38] sm:$0xff]
    %v1276 = vld [vmem:[%s9 + $0x40] sm:$0xff]
    %v1277 = vld [vmem:[%s9 + $0x48] sm:$0xff]
    %v1278 = vld [vmem:[%s9 + $0x50] sm:$0xff]
    %v1279 = vld [vmem:[%s9 + $0x58] sm:$0xff]
    %v1280 = vld [vmem:[%s9 + $0x60] sm:$0xff]
    %v1281 = vld [vmem:[%s9 + $0x68] sm:$0xff]
    %v1282 = vld [vmem:[%s9 + $0x70] sm:$0xff]
    %v1283 = vld [vmem:[%s9 + $0x78] sm:$0xff]
    %v1285 = vsel %vm320, %v1268, 0
    %v1288 = vsel %vm320, %v1269, 0
    %v1291 = vsel %vm320, %v1270, 0
    %v1294 = vsel %vm320, %v1271, 0
    %v1297 = vsel %vm320, %v1272, 0
    %v1300 = vsel %vm320, %v1273, 0
    %v1303 = vsel %vm320, %v1274, 0
    %v1306 = vsel %vm320, %v1275, 0
    %v1309 = vsel %vm320, %v1276, 0
    %v1312 = vsel %vm320, %v1277, 0
    %v1315 = vsel %vm320, %v1278, 0
    %v1318 = vsel %vm320, %v1279, 0
    %v1321 = vsel %vm320, %v1280, 0
    %v1324 = vsel %vm320, %v1281, 0
    %v1327 = vsel %vm320, %v1282, 0
    %v1330 = vsel %vm320, %v1283, 0
    %1332 = vmatprep.subr.mxu0 0.0
    %1333 = vmatpush1.msra.mxu0 0.0
    %1334 = vmatprep.subr.mxu0 0.0
    %1335 = vmatpush1.msra.mxu0 0.0
    %1336 = vmatprep.subr.mxu0 0.0
    %1337 = vmatpush1.msra.mxu0 0.0
    %1338 = vmatprep.subr.mxu0 0.0
    %1339 = vmatpush1.msra.mxu0 0.0
    %1340 = vmatprep.subr.mxu0 0.0
    %1341 = vmatpush1.msra.mxu0 0.0
    %1342 = vmatprep.subr.mxu0 0.0
    %1343 = vmatpush1.msra.mxu0 0.0
    %1344 = vmatprep.subr.mxu0 0.0
    %1345 = vmatpush1.msra.mxu0 0.0
    %1346 = vmatprep.subr.mxu0 0.0
    %1347 = vmatpush1.msra.mxu0 0.0
    %1348 = vmatprep.subr.mxu0 0.0
    %1349 = vmatpush1.msra.mxu0 0.0
    %1350 = vmatprep.subr.mxu0 0.0
    %1351 = vmatpush1.msra.mxu0 0.0
    %1352 = vmatprep.subr.mxu0 0.0
    %1353 = vmatpush1.msra.mxu0 0.0
    %1354 = vmatprep.subr.mxu0 0.0
    %1355 = vmatpush1.msra.mxu0 0.0
    %1356 = vmatprep.subr.mxu0 0.0
    %1357 = vmatpush1.msra.mxu0 0.0
    %1358 = vmatprep.subr.mxu0 0.0
    %1359 = vmatpush1.msra.mxu0 0.0
    %1360 = vmatprep.subr.mxu0 0.0
    %1361 = vmatpush1.msra.mxu0 %v1089
    %1362 = vmatprep.subr.mxu0 0.0
    %1363 = vmatpush1.msra.mxu0 %v1084
    %1364 = vmatprep.subr.mxu0 0.0
    %1365 = vmatpush2.msra.mxu0 0.0
    %1366 = vmatprep.subr.mxu0 0.0
    %1367 = vmatpush2.msra.mxu0 0.0
    %1368 = vmatprep.subr.mxu0 0.0
    %1369 = vmatpush2.msra.mxu0 0.0
    %1370 = vmatprep.subr.mxu0 0.0
    %1371 = vmatpush2.msra.mxu0 0.0
    %1372 = vmatprep.subr.mxu0 0.0
    %1373 = vmatpush2.msra.mxu0 0.0
    %1374 = vmatprep.subr.mxu0 0.0
    %1375 = vmatpush2.msra.mxu0 0.0
    %1376 = vmatprep.subr.mxu0 0.0
    %1377 = vmatpush2.msra.mxu0 0.0
    %1378 = vmatprep.subr.mxu0 0.0
    %1379 = vmatpush2.msra.mxu0 0.0
    %1380 = vmatprep.subr.mxu0 0.0
    %1381 = vmatpush2.msra.mxu0 0.0
    %1382 = vmatprep.subr.mxu0 0.0
    %1383 = vmatpush2.msra.mxu0 0.0
    %1384 = vmatprep.subr.mxu0 0.0
    %1385 = vmatpush2.msra.mxu0 0.0
    %1386 = vmatprep.subr.mxu0 0.0
    %1387 = vmatpush2.msra.mxu0 0.0
    %1388 = vmatprep.subr.mxu0 0.0
    %1389 = vmatpush2.msra.mxu0 0.0
    %1390 = vmatprep.subr.mxu0 0.0
    %1391 = vmatpush2.msra.mxu0 0.0
    %1392 = vmatprep.subr.mxu0 0.0
    %1393 = vmatpush2.msra.mxu0 0.0
    %1394 = vmatprep.subr.mxu0 0.0
    %1395 = vmatpush2.msra.mxu0 0.0
    %1396 = vmatprep.mubr.f32.mxu0 0.0
    %1397 = vmatmul.mubr.f32.gmra.mxu0 %v1285
    %v1398 = vpop.f32.mrf.mxu0
    %v1399 = vadd.f32 0.0, %v1398
    %v1400 = vpop.f32.mrf.mxu0
    %1401 = vmatprep.mubr.f32.mxu0 0.0
    %1402 = vmatmul.mubr.f32.gmra.mxu0 %v1288
    %v1403 = vpop.f32.mrf.mxu0
    %v1404 = vadd.f32 0.0, %v1403
    %v1405 = vpop.f32.mrf.mxu0
    %1406 = vmatprep.mubr.f32.mxu0 0.0
    %1407 = vmatmul.mubr.f32.gmra.mxu0 %v1291
    %v1408 = vpop.f32.mrf.mxu0
    %v1409 = vadd.f32 0.0, %v1408
    %v1410 = vpop.f32.mrf.mxu0
    %1411 = vmatprep.mubr.f32.mxu0 0.0
    %1412 = vmatmul.mubr.f32.gmra.mxu0 %v1294
    %v1413 = vpop.f32.mrf.mxu0
    %v1414 = vadd.f32 0.0, %v1413
    %v1415 = vpop.f32.mrf.mxu0
    %1416 = vmatprep.mubr.f32.mxu0 0.0
    %1417 = vmatmul.mubr.f32.gmra.mxu0 %v1297
    %v1418 = vpop.f32.mrf.mxu0
    %v1419 = vadd.f32 0.0, %v1418
    %v1420 = vpop.f32.mrf.mxu0
    %1421 = vmatprep.mubr.f32.mxu0 0.0
    %1422 = vmatmul.mubr.f32.gmra.mxu0 %v1300
    %v1423 = vpop.f32.mrf.mxu0
    %v1424 = vadd.f32 0.0, %v1423
    %v1425 = vpop.f32.mrf.mxu0
    %1426 = vmatprep.mubr.f32.mxu0 0.0
    %1427 = vmatmul.mubr.f32.gmra.mxu0 %v1303
    %v1428 = vpop.f32.mrf.mxu0
    %v1429 = vadd.f32 0.0, %v1428
    %v1430 = vpop.f32.mrf.mxu0
    %1431 = vmatprep.mubr.f32.mxu0 0.0
    %1432 = vmatmul.mubr.f32.gmra.mxu0 %v1306
    %v1433 = vpop.f32.mrf.mxu0
    %v1434 = vadd.f32 0.0, %v1433
    %v1435 = vpop.f32.mrf.mxu0
    %1436 = vmatprep.mubr.f32.mxu0 0.0
    %1437 = vmatmul.mubr.f32.gmra.mxu0 %v1309
    %v1438 = vpop.f32.mrf.mxu0
    %v1439 = vadd.f32 0.0, %v1438
    %v1440 = vpop.f32.mrf.mxu0
    %1441 = vmatprep.mubr.f32.mxu0 0.0
    %1442 = vmatmul.mubr.f32.gmra.mxu0 %v1312
    %v1443 = vpop.f32.mrf.mxu0
    %v1444 = vadd.f32 0.0, %v1443
    %v1445 = vpop.f32.mrf.mxu0
    %1446 = vmatprep.mubr.f32.mxu0 0.0
    %1447 = vmatmul.mubr.f32.gmra.mxu0 %v1315
    %v1448 = vpop.f32.mrf.mxu0
    %v1449 = vadd.f32 0.0, %v1448
    %v1450 = vpop.f32.mrf.mxu0
    %1451 = vmatprep.mubr.f32.mxu0 0.0
    %1452 = vmatmul.mubr.f32.gmra.mxu0 %v1318
    %v1453 = vpop.f32.mrf.mxu0
    %v1454 = vadd.f32 0.0, %v1453
    %v1455 = vpop.f32.mrf.mxu0
    %1456 = vmatprep.mubr.f32.mxu0 0.0
    %1457 = vmatmul.mubr.f32.gmra.mxu0 %v1321
    %v1458 = vpop.f32.mrf.mxu0
    %v1459 = vadd.f32 0.0, %v1458
    %v1460 = vpop.f32.mrf.mxu0
    %1461 = vmatprep.mubr.f32.mxu0 0.0
    %1462 = vmatmul.mubr.f32.gmra.mxu0 %v1324
    %v1463 = vpop.f32.mrf.mxu0
    %v1464 = vadd.f32 0.0, %v1463
    %v1465 = vpop.f32.mrf.mxu0
    %1466 = vmatprep.mubr.f32.mxu0 0.0
    %1467 = vmatmul.mubr.f32.gmra.mxu0 %v1327
    %v1468 = vpop.f32.mrf.mxu0
    %v1469 = vadd.f32 0.0, %v1468
    %v1470 = vpop.f32.mrf.mxu0
    %1471 = vmatprep.mubr.f32.mxu0 0.0
    %1472 = vmatmul.mubr.f32.gmra.mxu0 %v1330
    %v1473 = vpop.f32.mrf.mxu0
    %v1474 = vadd.f32 0.0, %v1473
    %v1475 = vpop.f32.mrf.mxu0
    %1476 = vdwg.mxu0
    %v1477 = vmul.f32 %v1399, %v1252
    %v1478 = vmul.f32 %v1404, %v1253
    %v1479 = vmul.f32 %v1409, %v1254
    %v1480 = vmul.f32 %v1414, %v1255
    %v1481 = vmul.f32 %v1419, %v1256
    %v1482 = vmul.f32 %v1424, %v1257
    %v1483 = vmul.f32 %v1429, %v1258
    %v1484 = vmul.f32 %v1434, %v1259
    %v1485 = vmul.f32 %v1439, %v1260
    %v1486 = vmul.f32 %v1444, %v1261
    %v1487 = vmul.f32 %v1449, %v1262
    %v1488 = vmul.f32 %v1454, %v1263
    %v1489 = vmul.f32 %v1459, %v1264
    %v1490 = vmul.f32 %v1464, %v1265
    %v1491 = vmul.f32 %v1469, %v1266
    %v1492 = vmul.f32 %v1474, %v1267
    %v1493 = vld [vmem:[%s6] sm:$0xff]
    %v1494 = vld [vmem:[%s6 + $0x8] sm:$0xff]
    %v1495 = vld [vmem:[%s6 + $0x10] sm:$0xff]
    %v1496 = vld [vmem:[%s6 + $0x18] sm:$0xff]
    %v1497 = vld [vmem:[%s6 + $0x20] sm:$0xff]
    %v1498 = vld [vmem:[%s6 + $0x28] sm:$0xff]
    %v1499 = vld [vmem:[%s6 + $0x30] sm:$0xff]
    %v1500 = vld [vmem:[%s6 + $0x38] sm:$0xff]
    %v1501 = vld [vmem:[%s6 + $0x40] sm:$0xff]
    %v1502 = vld [vmem:[%s6 + $0x48] sm:$0xff]
    %v1503 = vld [vmem:[%s6 + $0x50] sm:$0xff]
    %v1504 = vld [vmem:[%s6 + $0x58] sm:$0xff]
    %v1505 = vld [vmem:[%s6 + $0x60] sm:$0xff]
    %v1506 = vld [vmem:[%s6 + $0x68] sm:$0xff]
    %v1507 = vld [vmem:[%s6 + $0x70] sm:$0xff]
    %v1508 = vld [vmem:[%s6 + $0x78] sm:$0xff]
    %v1510 = vsel %vm549, %v1477, 0
    %v1513 = vsel %vm549, %v1478, 0
    %v1516 = vsel %vm549, %v1479, 0
    %v1519 = vsel %vm549, %v1480, 0
    %v1522 = vsel %vm549, %v1481, 0
    %v1525 = vsel %vm549, %v1482, 0
    %v1528 = vsel %vm549, %v1483, 0
    %v1531 = vsel %vm549, %v1484, 0
    %v1534 = vsel %vm549, %v1485, 0
    %v1537 = vsel %vm549, %v1486, 0
    %v1540 = vsel %vm549, %v1487, 0
    %v1543 = vsel %vm549, %v1488, 0
    %v1546 = vsel %vm549, %v1489, 0
    %v1549 = vsel %vm549, %v1490, 0
    %v1552 = vsel %vm549, %v1491, 0
    %v1555 = vsel %vm549, %v1492, 0
    %v1558 = vsel %vm549, %v1164, 0
    %v1561 = vsel %vm549, %v1169, 0
    %1563 = vmatprep.subr.mxu0 0.0
    %1564 = vmatpush1.xpose.msra.mxu0 0.0
    %1565 = vmatprep.subr.mxu0 0.0
    %1566 = vmatpush1.xpose.msra.mxu0 0.0
    %1567 = vmatprep.subr.mxu0 0.0
    %1568 = vmatpush1.xpose.msra.mxu0 0.0
    %1569 = vmatprep.subr.mxu0 0.0
    %1570 = vmatpush1.xpose.msra.mxu0 0.0
    %1571 = vmatprep.subr.mxu0 0.0
    %1572 = vmatpush1.xpose.msra.mxu0 0.0
    %1573 = vmatprep.subr.mxu0 0.0
    %1574 = vmatpush1.xpose.msra.mxu0 0.0
    %1575 = vmatprep.subr.mxu0 0.0
    %1576 = vmatpush1.xpose.msra.mxu0 0.0
    %1577 = vmatprep.subr.mxu0 0.0
    %1578 = vmatpush1.xpose.msra.mxu0 0.0
    %1579 = vmatprep.subr.mxu0 0.0
    %1580 = vmatpush1.xpose.msra.mxu0 0.0
    %1581 = vmatprep.subr.mxu0 0.0
    %1582 = vmatpush1.xpose.msra.mxu0 0.0
    %1583 = vmatprep.subr.mxu0 0.0
    %1584 = vmatpush1.xpose.msra.mxu0 0.0
    %1585 = vmatprep.subr.mxu0 0.0
    %1586 = vmatpush1.xpose.msra.mxu0 0.0
    %1587 = vmatprep.subr.mxu0 0.0
    %1588 = vmatpush1.xpose.msra.mxu0 0.0
    %1589 = vmatprep.subr.mxu0 0.0
    %1590 = vmatpush1.xpose.msra.mxu0 0.0
    %1591 = vmatprep.subr.mxu0 0.0
    %1592 = vmatpush1.xpose.msra.mxu0 %v1561
    %1593 = vmatprep.subr.mxu0 0.0
    %1594 = vmatpush1.xpose.msra.mxu0 %v1558
    %1595 = vmatprep.subr.mxu0 0.0
    %1596 = vmatpush2.xpose.msra.mxu0 0.0
    %1597 = vmatprep.subr.mxu0 0.0
    %1598 = vmatpush2.xpose.msra.mxu0 0.0
    %1599 = vmatprep.subr.mxu0 0.0
    %1600 = vmatpush2.xpose.msra.mxu0 0.0
    %1601 = vmatprep.subr.mxu0 0.0
    %1602 = vmatpush2.xpose.msra.mxu0 0.0
    %1603 = vmatprep.subr.mxu0 0.0
    %1604 = vmatpush2.xpose.msra.mxu0 0.0
    %1605 = vmatprep.subr.mxu0 0.0
    %1606 = vmatpush2.xpose.msra.mxu0 0.0
    %1607 = vmatprep.subr.mxu0 0.0
    %1608 = vmatpush2.xpose.msra.mxu0 0.0
    %1609 = vmatprep.subr.mxu0 0.0
    %1610 = vmatpush2.xpose.msra.mxu0 0.0
    %1611 = vmatprep.subr.mxu0 0.0
    %1612 = vmatpush2.xpose.msra.mxu0 0.0
    %1613 = vmatprep.subr.mxu0 0.0
    %1614 = vmatpush2.xpose.msra.mxu0 0.0
    %1615 = vmatprep.subr.mxu0 0.0
    %1616 = vmatpush2.xpose.msra.mxu0 0.0
    %1617 = vmatprep.subr.mxu0 0.0
    %1618 = vmatpush2.xpose.msra.mxu0 0.0
    %1619 = vmatprep.subr.mxu0 0.0
    %1620 = vmatpush2.xpose.msra.mxu0 0.0
    %1621 = vmatprep.subr.mxu0 0.0
    %1622 = vmatpush2.xpose.msra.mxu0 0.0
    %1623 = vmatprep.subr.mxu0 0.0
    %1624 = vmatpush2.xpose.msra.mxu0 0.0
    %1625 = vmatprep.subr.mxu0 0.0
    %1626 = vmatpush2.xpose.msra.mxu0 0.0
    %1627 = vmatprep.mubr.f32.mxu0 0.0
    %1628 = vmatmul.mubr.f32.gmra.mxu0 %v1510
    %v1629 = vpop.f32.mrf.mxu0
    %v1630 = vadd.f32 %v1493, %v1629
    %v1631 = vpop.f32.mrf.mxu0
    %1632 = vmatprep.mubr.f32.mxu0 0.0
    %1633 = vmatmul.mubr.f32.gmra.mxu0 %v1513
    %v1634 = vpop.f32.mrf.mxu0
    %v1635 = vadd.f32 %v1494, %v1634
    %v1636 = vpop.f32.mrf.mxu0
    %1637 = vmatprep.mubr.f32.mxu0 0.0
    %1638 = vmatmul.mubr.f32.gmra.mxu0 %v1516
    %v1639 = vpop.f32.mrf.mxu0
    %v1640 = vadd.f32 %v1495, %v1639
    %v1641 = vpop.f32.mrf.mxu0
    %1642 = vmatprep.mubr.f32.mxu0 0.0
    %1643 = vmatmul.mubr.f32.gmra.mxu0 %v1519
    %v1644 = vpop.f32.mrf.mxu0
    %v1645 = vadd.f32 %v1496, %v1644
    %v1646 = vpop.f32.mrf.mxu0
    %1647 = vmatprep.mubr.f32.mxu0 0.0
    %1648 = vmatmul.mubr.f32.gmra.mxu0 %v1522
    %v1649 = vpop.f32.mrf.mxu0
    %v1650 = vadd.f32 %v1497, %v1649
    %v1651 = vpop.f32.mrf.mxu0
    %1652 = vmatprep.mubr.f32.mxu0 0.0
    %1653 = vmatmul.mubr.f32.gmra.mxu0 %v1525
    %v1654 = vpop.f32.mrf.mxu0
    %v1655 = vadd.f32 %v1498, %v1654
    %v1656 = vpop.f32.mrf.mxu0
    %1657 = vmatprep.mubr.f32.mxu0 0.0
    %1658 = vmatmul.mubr.f32.gmra.mxu0 %v1528
    %v1659 = vpop.f32.mrf.mxu0
    %v1660 = vadd.f32 %v1499, %v1659
    %v1661 = vpop.f32.mrf.mxu0
    %1662 = vmatprep.mubr.f32.mxu0 0.0
    %1663 = vmatmul.mubr.f32.gmra.mxu0 %v1531
    %v1664 = vpop.f32.mrf.mxu0
    %v1665 = vadd.f32 %v1500, %v1664
    %v1666 = vpop.f32.mrf.mxu0
    %1667 = vmatprep.mubr.f32.mxu0 0.0
    %1668 = vmatmul.mubr.f32.gmra.mxu0 %v1534
    %v1669 = vpop.f32.mrf.mxu0
    %v1670 = vadd.f32 %v1501, %v1669
    %v1671 = vpop.f32.mrf.mxu0
    %1672 = vmatprep.mubr.f32.mxu0 0.0
    %1673 = vmatmul.mubr.f32.gmra.mxu0 %v1537
    %v1674 = vpop.f32.mrf.mxu0
    %v1675 = vadd.f32 %v1502, %v1674
    %v1676 = vpop.f32.mrf.mxu0
    %1677 = vmatprep.mubr.f32.mxu0 0.0
    %1678 = vmatmul.mubr.f32.gmra.mxu0 %v1540
    %v1679 = vpop.f32.mrf.mxu0
    %v1680 = vadd.f32 %v1503, %v1679
    %v1681 = vpop.f32.mrf.mxu0
    %1682 = vmatprep.mubr.f32.mxu0 0.0
    %1683 = vmatmul.mubr.f32.gmra.mxu0 %v1543
    %v1684 = vpop.f32.mrf.mxu0
    %v1685 = vadd.f32 %v1504, %v1684
    %v1686 = vpop.f32.mrf.mxu0
    %1687 = vmatprep.mubr.f32.mxu0 0.0
    %1688 = vmatmul.mubr.f32.gmra.mxu0 %v1546
    %v1689 = vpop.f32.mrf.mxu0
    %v1690 = vadd.f32 %v1505, %v1689
    %v1691 = vpop.f32.mrf.mxu0
    %1692 = vmatprep.mubr.f32.mxu0 0.0
    %1693 = vmatmul.mubr.f32.gmra.mxu0 %v1549
    %v1694 = vpop.f32.mrf.mxu0
    %v1695 = vadd.f32 %v1506, %v1694
    %v1696 = vpop.f32.mrf.mxu0
    %1697 = vmatprep.mubr.f32.mxu0 0.0
    %1698 = vmatmul.mubr.f32.gmra.mxu0 %v1552
    %v1699 = vpop.f32.mrf.mxu0
    %v1700 = vadd.f32 %v1507, %v1699
    %v1701 = vpop.f32.mrf.mxu0
    %1702 = vmatprep.mubr.f32.mxu0 0.0
    %1703 = vmatmul.mubr.f32.gmra.mxu0 %v1555
    %v1704 = vpop.f32.mrf.mxu0
    %v1705 = vadd.f32 %v1508, %v1704
    %v1706 = vpop.f32.mrf.mxu0
    %1707 = vdwg.mxu0
    %v1708 = vsel %vm320, %v1630, -inf
    %1709 = vmax.xlane.f32.xlu0 %v1708
    %v1710 = vpop.xlane.xlu0 %1709
    %v1711 = vsel %vm320, %v1635, -inf
    %1712 = vmax.xlane.f32.xlu0 %v1711
    %v1713 = vpop.xlane.xlu0 %1712
    %v1714 = vsel %vm320, %v1640, -inf
    %1715 = vmax.xlane.f32.xlu0 %v1714
    %v1716 = vpop.xlane.xlu0 %1715
    %v1717 = vsel %vm320, %v1645, -inf
    %1718 = vmax.xlane.f32.xlu0 %v1717
    %v1719 = vpop.xlane.xlu0 %1718
    %v1720 = vsel %vm320, %v1650, -inf
    %1721 = vmax.xlane.f32.xlu0 %v1720
    %v1722 = vpop.xlane.xlu0 %1721
    %v1723 = vsel %vm320, %v1655, -inf
    %1724 = vmax.xlane.f32.xlu0 %v1723
    %v1725 = vpop.xlane.xlu0 %1724
    %v1726 = vsel %vm320, %v1660, -inf
    %1727 = vmax.xlane.f32.xlu0 %v1726
    %v1728 = vpop.xlane.xlu0 %1727
    %v1729 = vsel %vm320, %v1665, -inf
    %1730 = vmax.xlane.f32.xlu0 %v1729
    %v1731 = vpop.xlane.xlu0 %1730
    %v1732 = vsel %vm320, %v1670, -inf
    %1733 = vmax.xlane.f32.xlu0 %v1732
    %v1734 = vpop.xlane.xlu0 %1733
    %v1735 = vsel %vm320, %v1675, -inf
    %1736 = vmax.xlane.f32.xlu0 %v1735
    %v1737 = vpop.xlane.xlu0 %1736
    %v1738 = vsel %vm320, %v1680, -inf
    %1739 = vmax.xlane.f32.xlu0 %v1738
    %v1740 = vpop.xlane.xlu0 %1739
    %v1741 = vsel %vm320, %v1685, -inf
    %1742 = vmax.xlane.f32.xlu0 %v1741
    %v1743 = vpop.xlane.xlu0 %1742
    %v1744 = vsel %vm320, %v1690, -inf
    %1745 = vmax.xlane.f32.xlu0 %v1744
    %v1746 = vpop.xlane.xlu0 %1745
    %v1747 = vsel %vm320, %v1695, -inf
    %1748 = vmax.xlane.f32.xlu0 %v1747
    %v1749 = vpop.xlane.xlu0 %1748
    %v1750 = vsel %vm320, %v1700, -inf
    %1751 = vmax.xlane.f32.xlu0 %v1750
    %v1752 = vpop.xlane.xlu0 %1751
    %v1753 = vsel %vm320, %v1705, -inf
    %1754 = vmax.xlane.f32.xlu0 %v1753
    %v1755 = vpop.xlane.xlu0 %1754
    %v1756 = vsub.f32 %v1630, %v1710
    %v1757 = vsub.f32 %v1635, %v1713
    %v1758 = vsub.f32 %v1640, %v1716
    %v1759 = vsub.f32 %v1645, %v1719
    %v1760 = vsub.f32 %v1650, %v1722
    %v1761 = vsub.f32 %v1655, %v1725
    %v1762 = vsub.f32 %v1660, %v1728
    %v1763 = vsub.f32 %v1665, %v1731
    %v1764 = vsub.f32 %v1670, %v1734
    %v1765 = vsub.f32 %v1675, %v1737
    %v1766 = vsub.f32 %v1680, %v1740
    %v1767 = vsub.f32 %v1685, %v1743
    %v1768 = vsub.f32 %v1690, %v1746
    %v1769 = vsub.f32 %v1695, %v1749
    %v1770 = vsub.f32 %v1700, %v1752
    %v1771 = vsub.f32 %v1705, %v1755
    %v1772 = vmul.f32 %v1756, 1.442695
    %v1773 = vpow.pop %v1772
    %v1774 = vmul.f32 %v1757, 1.442695
    %v1775 = vpow.pop %v1774
    %v1776 = vmul.f32 %v1758, 1.442695
    %v1777 = vpow.pop %v1776
    %v1778 = vmul.f32 %v1759, 1.442695
    %v1779 = vpow.pop %v1778
    %v1780 = vmul.f32 %v1760, 1.442695
    %v1781 = vpow.pop %v1780
    %v1782 = vmul.f32 %v1761, 1.442695
    %v1783 = vpow.pop %v1782
    %v1784 = vmul.f32 %v1762, 1.442695
    %v1785 = vpow.pop %v1784
    %v1786 = vmul.f32 %v1763, 1.442695
    %v1787 = vpow.pop %v1786
    %v1788 = vmul.f32 %v1764, 1.442695
    %v1789 = vpow.pop %v1788
    %v1790 = vmul.f32 %v1765, 1.442695
    %v1791 = vpow.pop %v1790
    %v1792 = vmul.f32 %v1766, 1.442695
    %v1793 = vpow.pop %v1792
    %v1794 = vmul.f32 %v1767, 1.442695
    %v1795 = vpow.pop %v1794
    %v1796 = vmul.f32 %v1768, 1.442695
    %v1797 = vpow.pop %v1796
    %v1798 = vmul.f32 %v1769, 1.442695
    %v1799 = vpow.pop %v1798
    %v1800 = vmul.f32 %v1770, 1.442695
    %v1801 = vpow.pop %v1800
    %v1802 = vmul.f32 %v1771, 1.442695
    %v1803 = vpow.pop %v1802
    %v1804 = vsel %vm320, %v1773, 0.0
    %1805 = vadd.xlane.f32.xlu0 %v1804
    %v1806 = vpop.xlane.xlu0 %1805
    %v1807 = vsel %vm320, %v1775, 0.0
    %1808 = vadd.xlane.f32.xlu0 %v1807
    %v1809 = vpop.xlane.xlu0 %1808
    %v1810 = vsel %vm320, %v1777, 0.0
    %1811 = vadd.xlane.f32.xlu0 %v1810
    %v1812 = vpop.xlane.xlu0 %1811
    %v1813 = vsel %vm320, %v1779, 0.0
    %1814 = vadd.xlane.f32.xlu0 %v1813
    %v1815 = vpop.xlane.xlu0 %1814
    %v1816 = vsel %vm320, %v1781, 0.0
    %1817 = vadd.xlane.f32.xlu0 %v1816
    %v1818 = vpop.xlane.xlu0 %1817
    %v1819 = vsel %vm320, %v1783, 0.0
    %1820 = vadd.xlane.f32.xlu0 %v1819
    %v1821 = vpop.xlane.xlu0 %1820
    %v1822 = vsel %vm320, %v1785, 0.0
    %1823 = vadd.xlane.f32.xlu0 %v1822
    %v1824 = vpop.xlane.xlu0 %1823
    %v1825 = vsel %vm320, %v1787, 0.0
    %1826 = vadd.xlane.f32.xlu0 %v1825
    %v1827 = vpop.xlane.xlu0 %1826
    %v1828 = vsel %vm320, %v1789, 0.0
    %1829 = vadd.xlane.f32.xlu0 %v1828
    %v1830 = vpop.xlane.xlu0 %1829
    %v1831 = vsel %vm320, %v1791, 0.0
    %1832 = vadd.xlane.f32.xlu0 %v1831
    %v1833 = vpop.xlane.xlu0 %1832
    %v1834 = vsel %vm320, %v1793, 0.0
    %1835 = vadd.xlane.f32.xlu0 %v1834
    %v1836 = vpop.xlane.xlu0 %1835
    %v1837 = vsel %vm320, %v1795, 0.0
    %1838 = vadd.xlane.f32.xlu0 %v1837
    %v1839 = vpop.xlane.xlu0 %1838
    %v1840 = vsel %vm320, %v1797, 0.0
    %1841 = vadd.xlane.f32.xlu0 %v1840
    %v1842 = vpop.xlane.xlu0 %1841
    %v1843 = vsel %vm320, %v1799, 0.0
    %1844 = vadd.xlane.f32.xlu0 %v1843
    %v1845 = vpop.xlane.xlu0 %1844
    %v1846 = vsel %vm320, %v1801, 0.0
    %1847 = vadd.xlane.f32.xlu0 %v1846
    %v1848 = vpop.xlane.xlu0 %1847
    %v1849 = vsel %vm320, %v1803, 0.0
    %1850 = vadd.xlane.f32.xlu0 %v1849
    %v1851 = vpop.xlane.xlu0 %1850
    %v1852 = vrcp.pop %v1806
    %v1853 = vrcp.pop %v1809
    %v1854 = vrcp.pop %v1812
    %v1855 = vrcp.pop %v1815
    %v1856 = vrcp.pop %v1818
    %v1857 = vrcp.pop %v1821
    %v1858 = vrcp.pop %v1824
    %v1859 = vrcp.pop %v1827
    %v1860 = vrcp.pop %v1830
    %v1861 = vrcp.pop %v1833
    %v1862 = vrcp.pop %v1836
    %v1863 = vrcp.pop %v1839
    %v1864 = vrcp.pop %v1842
    %v1865 = vrcp.pop %v1845
    %v1866 = vrcp.pop %v1848
    %v1867 = vrcp.pop %v1851
    %v1868 = vmul.f32 %v1773, %v1852
    %v1869 = vmul.f32 %v1775, %v1853
    %v1870 = vmul.f32 %v1777, %v1854
    %v1871 = vmul.f32 %v1779, %v1855
    %v1872 = vmul.f32 %v1781, %v1856
    %v1873 = vmul.f32 %v1783, %v1857
    %v1874 = vmul.f32 %v1785, %v1858
    %v1875 = vmul.f32 %v1787, %v1859
    %v1876 = vmul.f32 %v1789, %v1860
    %v1877 = vmul.f32 %v1791, %v1861
    %v1878 = vmul.f32 %v1793, %v1862
    %v1879 = vmul.f32 %v1795, %v1863
    %v1880 = vmul.f32 %v1797, %v1864
    %v1881 = vmul.f32 %v1799, %v1865
    %v1882 = vmul.f32 %v1801, %v1866
    %v1883 = vmul.f32 %v1803, %v1867
    %v1884 = vld [vmem:[%s7] sm:$0xff]
    %v1885 = vld [vmem:[%s7 + $0x8] sm:$0xff]
    %v1886 = vld [vmem:[%s7 + $0x10] sm:$0xff]
    %v1887 = vld [vmem:[%s7 + $0x18] sm:$0xff]
    %v1888 = vld [vmem:[%s7 + $0x20] sm:$0xff]
    %v1889 = vld [vmem:[%s7 + $0x28] sm:$0xff]
    %v1890 = vld [vmem:[%s7 + $0x30] sm:$0xff]
    %v1891 = vld [vmem:[%s7 + $0x38] sm:$0xff]
    %v1892 = vld [vmem:[%s7 + $0x40] sm:$0xff]
    %v1893 = vld [vmem:[%s7 + $0x48] sm:$0xff]
    %v1894 = vld [vmem:[%s7 + $0x50] sm:$0xff]
    %v1895 = vld [vmem:[%s7 + $0x58] sm:$0xff]
    %v1896 = vld [vmem:[%s7 + $0x60] sm:$0xff]
    %v1897 = vld [vmem:[%s7 + $0x68] sm:$0xff]
    %v1898 = vld [vmem:[%s7 + $0x70] sm:$0xff]
    %v1899 = vld [vmem:[%s7 + $0x78] sm:$0xff]
    %v1900 = vadd.f32 %v1868, %v1884
    %v1901 = vadd.f32 %v1869, %v1885
    %v1902 = vadd.f32 %v1870, %v1886
    %v1903 = vadd.f32 %v1871, %v1887
    %v1904 = vadd.f32 %v1872, %v1888
    %v1905 = vadd.f32 %v1873, %v1889
    %v1906 = vadd.f32 %v1874, %v1890
    %v1907 = vadd.f32 %v1875, %v1891
    %v1908 = vadd.f32 %v1876, %v1892
    %v1909 = vadd.f32 %v1877, %v1893
    %v1910 = vadd.f32 %v1878, %v1894
    %v1911 = vadd.f32 %v1879, %v1895
    %v1912 = vadd.f32 %v1880, %v1896
    %v1913 = vadd.f32 %v1881, %v1897
    %v1914 = vadd.f32 %v1882, %v1898
    %v1915 = vadd.f32 %v1883, %v1899
    %v1917 = vsel %vm320, %v1900, 0
    %v1920 = vsel %vm320, %v1901, 0
    %v1923 = vsel %vm320, %v1902, 0
    %v1926 = vsel %vm320, %v1903, 0
    %v1929 = vsel %vm320, %v1904, 0
    %v1932 = vsel %vm320, %v1905, 0
    %v1935 = vsel %vm320, %v1906, 0
    %v1938 = vsel %vm320, %v1907, 0
    %v1941 = vsel %vm320, %v1908, 0
    %v1944 = vsel %vm320, %v1909, 0
    %v1947 = vsel %vm320, %v1910, 0
    %v1950 = vsel %vm320, %v1911, 0
    %v1953 = vsel %vm320, %v1912, 0
    %v1956 = vsel %vm320, %v1913, 0
    %v1959 = vsel %vm320, %v1914, 0
    %v1962 = vsel %vm320, %v1915, 0
    %1964 = vmatprep.subr.mxu0 0.0
    %1965 = vmatpush1.msra.mxu0 0.0
    %1966 = vmatprep.subr.mxu0 0.0
    %1967 = vmatpush1.msra.mxu0 0.0
    %1968 = vmatprep.subr.mxu0 0.0
    %1969 = vmatpush1.msra.mxu0 0.0
    %1970 = vmatprep.subr.mxu0 0.0
    %1971 = vmatpush1.msra.mxu0 0.0
    %1972 = vmatprep.subr.mxu0 0.0
    %1973 = vmatpush1.msra.mxu0 0.0
    %1974 = vmatprep.subr.mxu0 0.0
    %1975 = vmatpush1.msra.mxu0 0.0
    %1976 = vmatprep.subr.mxu0 0.0
    %1977 = vmatpush1.msra.mxu0 0.0
    %1978 = vmatprep.subr.mxu0 0.0
    %1979 = vmatpush1.msra.mxu0 0.0
    %1980 = vmatprep.subr.mxu0 0.0
    %1981 = vmatpush1.msra.mxu0 0.0
    %1982 = vmatprep.subr.mxu0 0.0
    %1983 = vmatpush1.msra.mxu0 0.0
    %1984 = vmatprep.subr.mxu0 0.0
    %1985 = vmatpush1.msra.mxu0 0.0
    %1986 = vmatprep.subr.mxu0 0.0
    %1987 = vmatpush1.msra.mxu0 0.0
    %1988 = vmatprep.subr.mxu0 0.0
    %1989 = vmatpush1.msra.mxu0 0.0
    %1990 = vmatprep.subr.mxu0 0.0
    %1991 = vmatpush1.msra.mxu0 0.0
    %1992 = vmatprep.subr.mxu0 0.0
    %1993 = vmatpush1.msra.mxu0 %v1249
    %1994 = vmatprep.subr.mxu0 0.0
    %1995 = vmatpush1.msra.mxu0 %v1244
    %1996 = vmatprep.subr.mxu0 0.0
    %1997 = vmatpush2.msra.mxu0 0.0
    %1998 = vmatprep.subr.mxu0 0.0
    %1999 = vmatpush2.msra.mxu0 0.0
    %2000 = vmatprep.subr.mxu0 0.0
    %2001 = vmatpush2.msra.mxu0 0.0
    %2002 = vmatprep.subr.mxu0 0.0
    %2003 = vmatpush2.msra.mxu0 0.0
    %2004 = vmatprep.subr.mxu0 0.0
    %2005 = vmatpush2.msra.mxu0 0.0
    %2006 = vmatprep.subr.mxu0 0.0
    %2007 = vmatpush2.msra.mxu0 0.0
    %2008 = vmatprep.subr.mxu0 0.0
    %2009 = vmatpush2.msra.mxu0 0.0
    %2010 = vmatprep.subr.mxu0 0.0
    %2011 = vmatpush2.msra.mxu0 0.0
    %2012 = vmatprep.subr.mxu0 0.0
    %2013 = vmatpush2.msra.mxu0 0.0
    %2014 = vmatprep.subr.mxu0 0.0
    %2015 = vmatpush2.msra.mxu0 0.0
    %2016 = vmatprep.subr.mxu0 0.0
    %2017 = vmatpush2.msra.mxu0 0.0
    %2018 = vmatprep.subr.mxu0 0.0
    %2019 = vmatpush2.msra.mxu0 0.0
    %2020 = vmatprep.subr.mxu0 0.0
    %2021 = vmatpush2.msra.mxu0 0.0
    %2022 = vmatprep.subr.mxu0 0.0
    %2023 = vmatpush2.msra.mxu0 0.0
    %2024 = vmatprep.subr.mxu0 0.0
    %2025 = vmatpush2.msra.mxu0 0.0
    %2026 = vmatprep.subr.mxu0 0.0
    %2027 = vmatpush2.msra.mxu0 0.0
    %2028 = vmatprep.mubr.f32.mxu0 0.0
    %2029 = vmatmul.mubr.f32.gmra.mxu0 %v1917
    %v2030 = vpop.f32.mrf.mxu0
    %v2031 = vadd.f32 0.0, %v2030
    %v2032 = vpop.f32.mrf.mxu0
    %2033 = vmatprep.mubr.f32.mxu0 0.0
    %2034 = vmatmul.mubr.f32.gmra.mxu0 %v1920
    %v2035 = vpop.f32.mrf.mxu0
    %v2036 = vadd.f32 0.0, %v2035
    %v2037 = vpop.f32.mrf.mxu0
    %2038 = vmatprep.mubr.f32.mxu0 0.0
    %2039 = vmatmul.mubr.f32.gmra.mxu0 %v1923
    %v2040 = vpop.f32.mrf.mxu0
    %v2041 = vadd.f32 0.0, %v2040
    %v2042 = vpop.f32.mrf.mxu0
    %2043 = vmatprep.mubr.f32.mxu0 0.0
    %2044 = vmatmul.mubr.f32.gmra.mxu0 %v1926
    %v2045 = vpop.f32.mrf.mxu0
    %v2046 = vadd.f32 0.0, %v2045
    %v2047 = vpop.f32.mrf.mxu0
    %2048 = vmatprep.mubr.f32.mxu0 0.0
    %2049 = vmatmul.mubr.f32.gmra.mxu0 %v1929
    %v2050 = vpop.f32.mrf.mxu0
    %v2051 = vadd.f32 0.0, %v2050
    %v2052 = vpop.f32.mrf.mxu0
    %2053 = vmatprep.mubr.f32.mxu0 0.0
    %2054 = vmatmul.mubr.f32.gmra.mxu0 %v1932
    %v2055 = vpop.f32.mrf.mxu0
    %v2056 = vadd.f32 0.0, %v2055
    %v2057 = vpop.f32.mrf.mxu0
    %2058 = vmatprep.mubr.f32.mxu0 0.0
    %2059 = vmatmul.mubr.f32.gmra.mxu0 %v1935
    %v2060 = vpop.f32.mrf.mxu0
    %v2061 = vadd.f32 0.0, %v2060
    %v2062 = vpop.f32.mrf.mxu0
    %2063 = vmatprep.mubr.f32.mxu0 0.0
    %2064 = vmatmul.mubr.f32.gmra.mxu0 %v1938
    %v2065 = vpop.f32.mrf.mxu0
    %v2066 = vadd.f32 0.0, %v2065
    %v2067 = vpop.f32.mrf.mxu0
    %2068 = vmatprep.mubr.f32.mxu0 0.0
    %2069 = vmatmul.mubr.f32.gmra.mxu0 %v1941
    %v2070 = vpop.f32.mrf.mxu0
    %v2071 = vadd.f32 0.0, %v2070
    %v2072 = vpop.f32.mrf.mxu0
    %2073 = vmatprep.mubr.f32.mxu0 0.0
    %2074 = vmatmul.mubr.f32.gmra.mxu0 %v1944
    %v2075 = vpop.f32.mrf.mxu0
    %v2076 = vadd.f32 0.0, %v2075
    %v2077 = vpop.f32.mrf.mxu0
    %2078 = vmatprep.mubr.f32.mxu0 0.0
    %2079 = vmatmul.mubr.f32.gmra.mxu0 %v1947
    %v2080 = vpop.f32.mrf.mxu0
    %v2081 = vadd.f32 0.0, %v2080
    %v2082 = vpop.f32.mrf.mxu0
    %2083 = vmatprep.mubr.f32.mxu0 0.0
    %2084 = vmatmul.mubr.f32.gmra.mxu0 %v1950
    %v2085 = vpop.f32.mrf.mxu0
    %v2086 = vadd.f32 0.0, %v2085
    %v2087 = vpop.f32.mrf.mxu0
    %2088 = vmatprep.mubr.f32.mxu0 0.0
    %2089 = vmatmul.mubr.f32.gmra.mxu0 %v1953
    %v2090 = vpop.f32.mrf.mxu0
    %v2091 = vadd.f32 0.0, %v2090
    %v2092 = vpop.f32.mrf.mxu0
    %2093 = vmatprep.mubr.f32.mxu0 0.0
    %2094 = vmatmul.mubr.f32.gmra.mxu0 %v1956
    %v2095 = vpop.f32.mrf.mxu0
    %v2096 = vadd.f32 0.0, %v2095
    %v2097 = vpop.f32.mrf.mxu0
    %2098 = vmatprep.mubr.f32.mxu0 0.0
    %2099 = vmatmul.mubr.f32.gmra.mxu0 %v1959
    %v2100 = vpop.f32.mrf.mxu0
    %v2101 = vadd.f32 0.0, %v2100
    %v2102 = vpop.f32.mrf.mxu0
    %2103 = vmatprep.mubr.f32.mxu0 0.0
    %2104 = vmatmul.mubr.f32.gmra.mxu0 %v1962
    %v2105 = vpop.f32.mrf.mxu0
    %v2106 = vadd.f32 0.0, %v2105
    %v2107 = vpop.f32.mrf.mxu0
    %2108 = vdwg.mxu0
    %v2109 = vld [vmem:[%s10] sm:$0xff]
    %v2110 = vld [vmem:[%s10 + $0x8] sm:$0xff]
    %v2111 = vmul.f32 %v2031, %v1252
    %v2112 = vmul.f32 %v2036, %v1253
    %v2113 = vmul.f32 %v2041, %v1254
    %v2114 = vmul.f32 %v2046, %v1255
    %v2115 = vmul.f32 %v2051, %v1256
    %v2116 = vmul.f32 %v2056, %v1257
    %v2117 = vmul.f32 %v2061, %v1258
    %v2118 = vmul.f32 %v2066, %v1259
    %v2119 = vmul.f32 %v2071, %v1260
    %v2120 = vmul.f32 %v2076, %v1261
    %v2121 = vmul.f32 %v2081, %v1262
    %v2122 = vmul.f32 %v2086, %v1263
    %v2123 = vmul.f32 %v2091, %v1264
    %v2124 = vmul.f32 %v2096, %v1265
    %v2125 = vmul.f32 %v2101, %v1266
    %v2126 = vmul.f32 %v2106, %v1267
    %2127 = vmatprep.subr.mxu0 0.0
    %2128 = vmatpush1.msra.mxu0 %v2126
    %2129 = vmatprep.subr.mxu0 0.0
    %2130 = vmatpush1.msra.mxu0 %v2125
    %2131 = vmatprep.subr.mxu0 0.0
    %2132 = vmatpush1.msra.mxu0 %v2124
    %2133 = vmatprep.subr.mxu0 0.0
    %2134 = vmatpush1.msra.mxu0 %v2123
    %2135 = vmatprep.subr.mxu0 0.0
    %2136 = vmatpush1.msra.mxu0 %v2122
    %2137 = vmatprep.subr.mxu0 0.0
    %2138 = vmatpush1.msra.mxu0 %v2121
    %2139 = vmatprep.subr.mxu0 0.0
    %2140 = vmatpush1.msra.mxu0 %v2120
    %2141 = vmatprep.subr.mxu0 0.0
    %2142 = vmatpush1.msra.mxu0 %v2119
    %2143 = vmatprep.subr.mxu0 0.0
    %2144 = vmatpush1.msra.mxu0 %v2118
    %2145 = vmatprep.subr.mxu0 0.0
    %2146 = vmatpush1.msra.mxu0 %v2117
    %2147 = vmatprep.subr.mxu0 0.0
    %2148 = vmatpush1.msra.mxu0 %v2116
    %2149 = vmatprep.subr.mxu0 0.0
    %2150 = vmatpush1.msra.mxu0 %v2115
    %2151 = vmatprep.subr.mxu0 0.0
    %2152 = vmatpush1.msra.mxu0 %v2114
    %2153 = vmatprep.subr.mxu0 0.0
    %2154 = vmatpush1.msra.mxu0 %v2113
    %2155 = vmatprep.subr.mxu0 0.0
    %2156 = vmatpush1.msra.mxu0 %v2112
    %2157 = vmatprep.subr.mxu0 0.0
    %2158 = vmatpush1.msra.mxu0 %v2111
    %2159 = vmatprep.subr.mxu0 0.0
    %2160 = vmatpush2.msra.mxu0 0.0
    %2161 = vmatprep.subr.mxu0 0.0
    %2162 = vmatpush2.msra.mxu0 0.0
    %2163 = vmatprep.subr.mxu0 0.0
    %2164 = vmatpush2.msra.mxu0 0.0
    %2165 = vmatprep.subr.mxu0 0.0
    %2166 = vmatpush2.msra.mxu0 0.0
    %2167 = vmatprep.subr.mxu0 0.0
    %2168 = vmatpush2.msra.mxu0 0.0
    %2169 = vmatprep.subr.mxu0 0.0
    %2170 = vmatpush2.msra.mxu0 0.0
    %2171 = vmatprep.subr.mxu0 0.0
    %2172 = vmatpush2.msra.mxu0 0.0
    %2173 = vmatprep.subr.mxu0 0.0
    %2174 = vmatpush2.msra.mxu0 0.0
    %2175 = vmatprep.subr.mxu0 0.0
    %2176 = vmatpush2.msra.mxu0 0.0
    %2177 = vmatprep.subr.mxu0 0.0
    %2178 = vmatpush2.msra.mxu0 0.0
    %2179 = vmatprep.subr.mxu0 0.0
    %2180 = vmatpush2.msra.mxu0 0.0
    %2181 = vmatprep.subr.mxu0 0.0
    %2182 = vmatpush2.msra.mxu0 0.0
    %2183 = vmatprep.subr.mxu0 0.0
    %2184 = vmatpush2.msra.mxu0 0.0
    %2185 = vmatprep.subr.mxu0 0.0
    %2186 = vmatpush2.msra.mxu0 0.0
    %2187 = vmatprep.subr.mxu0 0.0
    %2188 = vmatpush2.msra.mxu0 0.0
    %2189 = vmatprep.subr.mxu0 0.0
    %2190 = vmatpush2.msra.mxu0 0.0
    %2191 = vmatprep.mubr.f32.mxu0 0.0
    %2192 = vmatmul.mubr.f32.gmra.mxu0 %v2109
    %v2193 = vpop.f32.mrf.mxu0
    %v2194 = vadd.f32 0.0, %v2193
    %v2195 = vpop.f32.mrf.mxu0
    %2196 = vmatprep.mubr.f32.mxu0 0.0
    %2197 = vmatmul.mubr.f32.gmra.mxu0 %v2110
    %v2198 = vpop.f32.mrf.mxu0
    %v2199 = vadd.f32 0.0, %v2198
    %v2200 = vpop.f32.mrf.mxu0
    %2201 = vdwg.mxu0
    %v2202 = vsel %vm549, %v2194, 0.0
    %2203 = vadd.xlane.f32.xlu0 %v2202
    %v2204 = vpop.xlane.xlu0 %2203
    %v2205 = vsel %vm549, %v2199, 0.0
    %2206 = vadd.xlane.f32.xlu0 %v2205
    %v2207 = vpop.xlane.xlu0 %2206
    %v2208 = vrcp.pop 32.0
    %v2209 = vmul.f32 %v2204, %v2208
    %v2210 = vmul.f32 %v2207, %v2208
    %v2211 = vsub.f32 %v2194, %v2209
    %v2212 = vsub.f32 %v2199, %v2210
    %v2213 = vmul.f32 %v2211, %v2211
    %v2214 = vmul.f32 %v2212, %v2212
    %v2215 = vsel %vm549, %v2213, 0.0
    %2216 = vadd.xlane.f32.xlu0 %v2215
    %v2217 = vpop.xlane.xlu0 %2216
    %v2218 = vsel %vm549, %v2214, 0.0
    %2219 = vadd.xlane.f32.xlu0 %v2218
    %v2220 = vpop.xlane.xlu0 %2219
    %v2221 = vmul.f32 %v2217, %v2208
    %v2222 = vmul.f32 %v2220, %v2208
    %v2223 = vadd.f32 %v2221, 1e-05
    %v2224 = vadd.f32 %v2222, 1e-05
    %v2225 = vrsqrt.pop %v2223
    %v2226 = vrsqrt.pop %v2224
    %v2227 = vmul.f32 %v2211, %v2225
    %v2228 = vmul.f32 %v2212, %v2226
    %v2229 = vlaneseq
    %v2230 = vshrl.u32 %v2229, 7
    %v2231 = vsub.s32 2, %v2230
    %v2232 = vrot.slane %v64, %v2231
    %v2233 = vmul.f32 %v2227, %v2232
    %v2234 = vmul.f32 %v2228, %v2232
    %v2235 = vlaneseq
    %v2236 = vshrl.u32 %v2235, 7
    %v2237 = vsub.s32 3, %v2236
    %v2238 = vrot.slane %v64, %v2237
    %v2239 = vadd.f32 %v2233, %v2238
    %v2240 = vadd.f32 %v2234, %v2238
    %v2241 = vadd.f32 %v1001, %v2239
    %v2242 = vadd.f32 %v1002, %v2240
    %v2243 = vsel %vm549, %v2241, 0.0
    %2244 = vadd.xlane.f32.xlu0 %v2243
    %v2245 = vpop.xlane.xlu0 %2244
    %v2246 = vsel %vm549, %v2242, 0.0
    %2247 = vadd.xlane.f32.xlu0 %v2246
    %v2248 = vpop.xlane.xlu0 %2247
    %v2249 = vmul.f32 %v2245, %v2208
    %v2250 = vmul.f32 %v2248, %v2208
    %v2251 = vsub.f32 %v2241, %v2249
    %v2252 = vsub.f32 %v2242, %v2250
    %v2253 = vmul.f32 %v2251, %v2251
    %v2254 = vmul.f32 %v2252, %v2252
    %v2255 = vsel %vm549, %v2253, 0.0
    %2256 = vadd.xlane.f32.xlu0 %v2255
    %v2257 = vpop.xlane.xlu0 %2256
    %v2258 = vsel %vm549, %v2254, 0.0
    %2259 = vadd.xlane.f32.xlu0 %v2258
    %v2260 = vpop.xlane.xlu0 %2259
    %v2261 = vmul.f32 %v2257, %v2208
    %v2262 = vmul.f32 %v2260, %v2208
    %v2263 = vadd.f32 %v2261, 1e-05
    %v2264 = vadd.f32 %v2262, 1e-05
    %v2265 = vrsqrt.pop %v2263
    %v2266 = vrsqrt.pop %v2264
    %v2267 = vmul.f32 %v2251, %v2265
    %v2268 = vmul.f32 %v2252, %v2266
    %v2269 = vlaneseq
    %v2270 = vshrl.u32 %v2269, 7
    %v2271 = vsub.s32 4, %v2270
    %v2272 = vrot.slane %v64, %v2271
    %v2273 = vmul.f32 %v2267, %v2272
    %v2274 = vmul.f32 %v2268, %v2272
    %v2275 = vlaneseq
    %v2276 = vshrl.u32 %v2275, 7
    %v2277 = vsub.s32 5, %v2276
    %v2278 = vrot.slane %v64, %v2277
    %v2279 = vadd.f32 %v2273, %v2278
    %v2280 = vadd.f32 %v2274, %v2278
    %v2281 = vld [vmem:[%s12] sm:$0xff]
    %v2282 = vld [vmem:[%s12 + $0x8] sm:$0xff]
    %v2283 = vld [vmem:[%s12 + $0x10] sm:$0xff]
    %v2284 = vld [vmem:[%s12 + $0x18] sm:$0xff]
    %v2285 = vld [vmem:[%s13] sm:$0x1]
    %v2287 = vlaneseq
    %v2288 = vshrl.u32 %v2287, 7
    %v2289 = vsub.s32 0, %v2288
    %v2290 = vrot.slane %v2285, %v2289
    %v2293 = vsel %vm549, %v2279, 0
    %v2296 = vsel %vm549, %v2280, 0
    %2298 = vmatprep.subr.mxu0 0.0
    %2299 = vmatpush1.msra.mxu0 0.0
    %2300 = vmatprep.subr.mxu0 0.0
    %2301 = vmatpush1.msra.mxu0 0.0
    %2302 = vmatprep.subr.mxu0 0.0
    %2303 = vmatpush1.msra.mxu0 0.0
    %2304 = vmatprep.subr.mxu0 0.0
    %2305 = vmatpush1.msra.mxu0 0.0
    %2306 = vmatprep.subr.mxu0 0.0
    %2307 = vmatpush1.msra.mxu0 0.0
    %2308 = vmatprep.subr.mxu0 0.0
    %2309 = vmatpush1.msra.mxu0 0.0
    %2310 = vmatprep.subr.mxu0 0.0
    %2311 = vmatpush1.msra.mxu0 0.0
    %2312 = vmatprep.subr.mxu0 0.0
    %2313 = vmatpush1.msra.mxu0 0.0
    %2314 = vmatprep.subr.mxu0 0.0
    %2315 = vmatpush1.msra.mxu0 0.0
    %2316 = vmatprep.subr.mxu0 0.0
    %2317 = vmatpush1.msra.mxu0 0.0
    %2318 = vmatprep.subr.mxu0 0.0
    %2319 = vmatpush1.msra.mxu0 0.0
    %2320 = vmatprep.subr.mxu0 0.0
    %2321 = vmatpush1.msra.mxu0 0.0
    %2322 = vmatprep.subr.mxu0 0.0
    %2323 = vmatpush1.msra.mxu0 %v2284
    %2324 = vmatprep.subr.mxu0 0.0
    %2325 = vmatpush1.msra.mxu0 %v2283
    %2326 = vmatprep.subr.mxu0 0.0
    %2327 = vmatpush1.msra.mxu0 %v2282
    %2328 = vmatprep.subr.mxu0 0.0
    %2329 = vmatpush1.msra.mxu0 %v2281
    %2330 = vmatprep.subr.mxu0 0.0
    %2331 = vmatpush2.msra.mxu0 0.0
    %2332 = vmatprep.subr.mxu0 0.0
    %2333 = vmatpush2.msra.mxu0 0.0
    %2334 = vmatprep.subr.mxu0 0.0
    %2335 = vmatpush2.msra.mxu0 0.0
    %2336 = vmatprep.subr.mxu0 0.0
    %2337 = vmatpush2.msra.mxu0 0.0
    %2338 = vmatprep.subr.mxu0 0.0
    %2339 = vmatpush2.msra.mxu0 0.0
    %2340 = vmatprep.subr.mxu0 0.0
    %2341 = vmatpush2.msra.mxu0 0.0
    %2342 = vmatprep.subr.mxu0 0.0
    %2343 = vmatpush2.msra.mxu0 0.0
    %2344 = vmatprep.subr.mxu0 0.0
    %2345 = vmatpush2.msra.mxu0 0.0
    %2346 = vmatprep.subr.mxu0 0.0
    %2347 = vmatpush2.msra.mxu0 0.0
    %2348 = vmatprep.subr.mxu0 0.0
    %2349 = vmatpush2.msra.mxu0 0.0
    %2350 = vmatprep.subr.mxu0 0.0
    %2351 = vmatpush2.msra.mxu0 0.0
    %2352 = vmatprep.subr.mxu0 0.0
    %2353 = vmatpush2.msra.mxu0 0.0
    %2354 = vmatprep.subr.mxu0 0.0
    %2355 = vmatpush2.msra.mxu0 0.0
    %2356 = vmatprep.subr.mxu0 0.0
    %2357 = vmatpush2.msra.mxu0 0.0
    %2358 = vmatprep.subr.mxu0 0.0
    %2359 = vmatpush2.msra.mxu0 0.0
    %2360 = vmatprep.subr.mxu0 0.0
    %2361 = vmatpush2.msra.mxu0 0.0
    %2362 = vmatprep.mubr.f32.mxu0 0.0
    %2363 = vmatmul.mubr.f32.gmra.mxu0 %v2293
    %v2364 = vpop.f32.mrf.mxu0
    %v2365 = vadd.f32 %v2290, %v2364
    %v2366 = vpop.f32.mrf.mxu0
    %2367 = vmatprep.mubr.f32.mxu0 0.0
    %2368 = vmatmul.mubr.f32.gmra.mxu0 %v2296
    %v2369 = vpop.f32.mrf.mxu0
    %v2370 = vadd.f32 %v2290, %v2369
    %v2371 = vpop.f32.mrf.mxu0
    %2372 = vdwg.mxu0
    %v2373 = vmax.f32 %v2365, 0.0
    %v2374 = vmax.f32 %v2370, 0.0
    %v2375 = vld [vmem:[%s14] sm:$0xff]
    %v2376 = vld [vmem:[%s14 + $0x8] sm:$0xff]
    %v2377 = vld [vmem:[%s14 + $0x10] sm:$0xff]
    %v2378 = vld [vmem:[%s14 + $0x18] sm:$0xff]
    %v2379 = vld [vmem:[%s14 + $0x20] sm:$0xff]
    %v2380 = vld [vmem:[%s14 + $0x28] sm:$0xff]
    %v2381 = vld [vmem:[%s14 + $0x30] sm:$0xff]
    %v2382 = vld [vmem:[%s14 + $0x38] sm:$0xff]
    %v2383 = vlaneseq
    %v2384 = vshrl.u32 %v2383, 7
    %v2385 = vsub.s32 6, %v2384
    %v2386 = vrot.slane %v64, %v2385
    %vm2387 = vcmask 523264
    %v2389 = vsel %vm2387, %v2373, 0
    %v2392 = vsel %vm2387, %v2374, 0
    %2394 = vmatprep.subr.mxu0 0.0
    %2395 = vmatpush1.msra.mxu0 0.0
    %2396 = vmatprep.subr.mxu0 0.0
    %2397 = vmatpush1.msra.mxu0 0.0
    %2398 = vmatprep.subr.mxu0 0.0
    %2399 = vmatpush1.msra.mxu0 0.0
    %2400 = vmatprep.subr.mxu0 0.0
    %2401 = vmatpush1.msra.mxu0 0.0
    %2402 = vmatprep.subr.mxu0 0.0
    %2403 = vmatpush1.msra.mxu0 0.0
    %2404 = vmatprep.subr.mxu0 0.0
    %2405 = vmatpush1.msra.mxu0 0.0
    %2406 = vmatprep.subr.mxu0 0.0
    %2407 = vmatpush1.msra.mxu0 0.0
    %2408 = vmatprep.subr.mxu0 0.0
    %2409 = vmatpush1.msra.mxu0 0.0
    %2410 = vmatprep.subr.mxu0 0.0
    %2411 = vmatpush1.msra.mxu0 %v2382
    %2412 = vmatprep.subr.mxu0 0.0
    %2413 = vmatpush1.msra.mxu0 %v2381
    %2414 = vmatprep.subr.mxu0 0.0
    %2415 = vmatpush1.msra.mxu0 %v2380
    %2416 = vmatprep.subr.mxu0 0.0
    %2417 = vmatpush1.msra.mxu0 %v2379
    %2418 = vmatprep.subr.mxu0 0.0
    %2419 = vmatpush1.msra.mxu0 %v2378
    %2420 = vmatprep.subr.mxu0 0.0
    %2421 = vmatpush1.msra.mxu0 %v2377
    %2422 = vmatprep.subr.mxu0 0.0
    %2423 = vmatpush1.msra.mxu0 %v2376
    %2424 = vmatprep.subr.mxu0 0.0
    %2425 = vmatpush1.msra.mxu0 %v2375
    %2426 = vmatprep.subr.mxu0 0.0
    %2427 = vmatpush2.msra.mxu0 0.0
    %2428 = vmatprep.subr.mxu0 0.0
    %2429 = vmatpush2.msra.mxu0 0.0
    %2430 = vmatprep.subr.mxu0 0.0
    %2431 = vmatpush2.msra.mxu0 0.0
    %2432 = vmatprep.subr.mxu0 0.0
    %2433 = vmatpush2.msra.mxu0 0.0
    %2434 = vmatprep.subr.mxu0 0.0
    %2435 = vmatpush2.msra.mxu0 0.0
    %2436 = vmatprep.subr.mxu0 0.0
    %2437 = vmatpush2.msra.mxu0 0.0
    %2438 = vmatprep.subr.mxu0 0.0
    %2439 = vmatpush2.msra.mxu0 0.0
    %2440 = vmatprep.subr.mxu0 0.0
    %2441 = vmatpush2.msra.mxu0 0.0
    %2442 = vmatprep.subr.mxu0 0.0
    %2443 = vmatpush2.msra.mxu0 0.0
    %2444 = vmatprep.subr.mxu0 0.0
    %2445 = vmatpush2.msra.mxu0 0.0
    %2446 = vmatprep.subr.mxu0 0.0
    %2447 = vmatpush2.msra.mxu0 0.0
    %2448 = vmatprep.subr.mxu0 0.0
    %2449 = vmatpush2.msra.mxu0 0.0
    %2450 = vmatprep.subr.mxu0 0.0
    %2451 = vmatpush2.msra.mxu0 0.0
    %2452 = vmatprep.subr.mxu0 0.0
    %2453 = vmatpush2.msra.mxu0 0.0
    %2454 = vmatprep.subr.mxu0 0.0
    %2455 = vmatpush2.msra.mxu0 0.0
    %2456 = vmatprep.subr.mxu0 0.0
    %2457 = vmatpush2.msra.mxu0 0.0
    %2458 = vmatprep.mubr.f32.mxu0 0.0
    %2459 = vmatmul.mubr.f32.gmra.mxu0 %v2389
    %v2460 = vpop.f32.mrf.mxu0
    %v2461 = vadd.f32 %v2386, %v2460
    %v2462 = vpop.f32.mrf.mxu0
    %2463 = vmatprep.mubr.f32.mxu0 0.0
    %2464 = vmatmul.mubr.f32.gmra.mxu0 %v2392
    %v2465 = vpop.f32.mrf.mxu0
    %v2466 = vadd.f32 %v2386, %v2465
    %v2467 = vpop.f32.mrf.mxu0
    %2468 = vdwg.mxu0
    %v2469 = vadd.f32 %v2279, %v2461
    %v2470 = vadd.f32 %v2280, %v2466
    %v2471 = vsel %vm549, %v2469, 0.0
    %2472 = vadd.xlane.f32.xlu0 %v2471
    %v2473 = vpop.xlane.xlu0 %2472
    %v2474 = vsel %vm549, %v2470, 0.0
    %2475 = vadd.xlane.f32.xlu0 %v2474
    %v2476 = vpop.xlane.xlu0 %2475
    %v2477 = vmul.f32 %v2473, %v2208
    %v2478 = vmul.f32 %v2476, %v2208
    %v2479 = vsub.f32 %v2469, %v2477
    %v2480 = vsub.f32 %v2470, %v2478
    %v2481 = vmul.f32 %v2479, %v2479
    %v2482 = vmul.f32 %v2480, %v2480
    %v2483 = vsel %vm549, %v2481, 0.0
    %2484 = vadd.xlane.f32.xlu0 %v2483
    %v2485 = vpop.xlane.xlu0 %2484
    %v2486 = vsel %vm549, %v2482, 0.0
    %2487 = vadd.xlane.f32.xlu0 %v2486
    %v2488 = vpop.xlane.xlu0 %2487
    %v2489 = vmul.f32 %v2485, %v2208
    %v2490 = vmul.f32 %v2488, %v2208
    %v2491 = vadd.f32 %v2489, 1e-05
    %v2492 = vadd.f32 %v2490, 1e-05
    %v2493 = vrsqrt.pop %v2491
    %v2494 = vrsqrt.pop %v2492
    %v2495 = vmul.f32 %v2479, %v2493
    %v2496 = vmul.f32 %v2480, %v2494
    %v2497 = vlaneseq
    %v2498 = vshrl.u32 %v2497, 7
    %v2499 = vsub.s32 7, %v2498
    %v2500 = vrot.slane %v64, %v2499
    %v2501 = vmul.f32 %v2495, %v2500
    %v2502 = vmul.f32 %v2496, %v2500
    %v2503 = vlaneseq
    %v2504 = vshrl.u32 %v2503, 7
    %v2505 = vsub.s32 0, %v2504
    %v2506 = vrot.slane %v65, %v2505
    %v2507 = vadd.f32 %v2501, %v2506
    %v2508 = vadd.f32 %v2502, %v2506
    %2509 = vst.msk [vmem:[%s18] sm:$0xff] %vm549, %v2507
    %2510 = vst.msk [vmem:[%s18 + $0x8] sm:$0xff] %vm549, %v2508
    %v2511 = vld [vmem:[%s15] sm:$0x3]
    %v2513 = vsel %vm320, %v2511, 0
    %2515 = vmatprep.subr.mxu0 0.0
    %2516 = vmatpush1.msra.mxu0 0.0
    %2517 = vmatprep.subr.mxu0 0.0
    %2518 = vmatpush1.msra.mxu0 0.0
    %2519 = vmatprep.subr.mxu0 0.0
    %2520 = vmatpush1.msra.mxu0 0.0
    %2521 = vmatprep.subr.mxu0 0.0
    %2522 = vmatpush1.msra.mxu0 0.0
    %2523 = vmatprep.subr.mxu0 0.0
    %2524 = vmatpush1.msra.mxu0 0.0
    %2525 = vmatprep.subr.mxu0 0.0
    %2526 = vmatpush1.msra.mxu0 0.0
    %2527 = vmatprep.subr.mxu0 0.0
    %2528 = vmatpush1.msra.mxu0 0.0
    %2529 = vmatprep.subr.mxu0 0.0
    %2530 = vmatpush1.msra.mxu0 0.0
    %2531 = vmatprep.subr.mxu0 0.0
    %2532 = vmatpush1.msra.mxu0 0.0
    %2533 = vmatprep.subr.mxu0 0.0
    %2534 = vmatpush1.msra.mxu0 0.0
    %2535 = vmatprep.subr.mxu0 0.0
    %2536 = vmatpush1.msra.mxu0 0.0
    %2537 = vmatprep.subr.mxu0 0.0
    %2538 = vmatpush1.msra.mxu0 0.0
    %2539 = vmatprep.subr.mxu0 0.0
    %2540 = vmatpush1.msra.mxu0 0.0
    %2541 = vmatprep.subr.mxu0 0.0
    %2542 = vmatpush1.msra.mxu0 0.0
    %2543 = vmatprep.subr.mxu0 0.0
    %2544 = vmatpush1.msra.mxu0 %v2508
    %2545 = vmatprep.subr.mxu0 0.0
    %2546 = vmatpush1.msra.mxu0 %v2507
    %2547 = vmatprep.subr.mxu0 0.0
    %2548 = vmatpush2.msra.mxu0 0.0
    %2549 = vmatprep.subr.mxu0 0.0
    %2550 = vmatpush2.msra.mxu0 0.0
    %2551 = vmatprep.subr.mxu0 0.0
    %2552 = vmatpush2.msra.mxu0 0.0
    %2553 = vmatprep.subr.mxu0 0.0
    %2554 = vmatpush2.msra.mxu0 0.0
    %2555 = vmatprep.subr.mxu0 0.0
    %2556 = vmatpush2.msra.mxu0 0.0
    %2557 = vmatprep.subr.mxu0 0.0
    %2558 = vmatpush2.msra.mxu0 0.0
    %2559 = vmatprep.subr.mxu0 0.0
    %2560 = vmatpush2.msra.mxu0 0.0
    %2561 = vmatprep.subr.mxu0 0.0
    %2562 = vmatpush2.msra.mxu0 0.0
    %2563 = vmatprep.subr.mxu0 0.0
    %2564 = vmatpush2.msra.mxu0 0.0
    %2565 = vmatprep.subr.mxu0 0.0
    %2566 = vmatpush2.msra.mxu0 0.0
    %2567 = vmatprep.subr.mxu0 0.0
    %2568 = vmatpush2.msra.mxu0 0.0
    %2569 = vmatprep.subr.mxu0 0.0
    %2570 = vmatpush2.msra.mxu0 0.0
    %2571 = vmatprep.subr.mxu0 0.0
    %2572 = vmatpush2.msra.mxu0 0.0
    %2573 = vmatprep.subr.mxu0 0.0
    %2574 = vmatpush2.msra.mxu0 0.0
    %2575 = vmatprep.subr.mxu0 0.0
    %2576 = vmatpush2.msra.mxu0 0.0
    %2577 = vmatprep.subr.mxu0 0.0
    %2578 = vmatpush2.msra.mxu0 0.0
    %2579 = vmatprep.mubr.f32.mxu0 0.0
    %2580 = vmatmul.mubr.f32.gmra.mxu0 %v2513
    %v2581 = vpop.f32.mrf.mxu0
    %v2582 = vadd.f32 0.0, %v2581
    %v2583 = vpop.f32.mrf.mxu0
    %2584 = vdwg.mxu0
    %vm2585 = vcmask 254976
    %2586 = vst.msk [vmem:[#allocation2] sm:$0x3] %vm2585, %v2582
    %v2587 = vld [vmem:[%s16] sm:$0xff]
    %v2588 = vld [vmem:[%s16 + $0x8] sm:$0xff]
    %v2589 = vld [vmem:[%s16 + $0x10] sm:$0xff]
    %v2590 = vld [vmem:[%s16 + $0x18] sm:$0xff]
    %v2591 = vld [vmem:[%s17] sm:$0x1]
    %v2593 = vlaneseq
    %v2594 = vshrl.u32 %v2593, 7
    %v2595 = vsub.s32 0, %v2594
    %v2596 = vrot.slane %v2591, %v2595
    %v2599 = vsel %vm549, %v2582, 0
    %2601 = vmatprep.subr.mxu0 0.0
    %2602 = vmatpush1.msra.mxu0 0.0
    %2603 = vmatprep.subr.mxu0 0.0
    %2604 = vmatpush1.msra.mxu0 0.0
    %2605 = vmatprep.subr.mxu0 0.0
    %2606 = vmatpush1.msra.mxu0 0.0
    %2607 = vmatprep.subr.mxu0 0.0
    %2608 = vmatpush1.msra.mxu0 0.0
    %2609 = vmatprep.subr.mxu0 0.0
    %2610 = vmatpush1.msra.mxu0 0.0
    %2611 = vmatprep.subr.mxu0 0.0
    %2612 = vmatpush1.msra.mxu0 0.0
    %2613 = vmatprep.subr.mxu0 0.0
    %2614 = vmatpush1.msra.mxu0 0.0
    %2615 = vmatprep.subr.mxu0 0.0
    %2616 = vmatpush1.msra.mxu0 0.0
    %2617 = vmatprep.subr.mxu0 0.0
    %2618 = vmatpush1.msra.mxu0 0.0
    %2619 = vmatprep.subr.mxu0 0.0
    %2620 = vmatpush1.msra.mxu0 0.0
    %2621 = vmatprep.subr.mxu0 0.0
    %2622 = vmatpush1.msra.mxu0 0.0
    %2623 = vmatprep.subr.mxu0 0.0
    %2624 = vmatpush1.msra.mxu0 0.0
    %2625 = vmatprep.subr.mxu0 0.0
    %2626 = vmatpush1.msra.mxu0 %v2590
    %2627 = vmatprep.subr.mxu0 0.0
    %2628 = vmatpush1.msra.mxu0 %v2589
    %2629 = vmatprep.subr.mxu0 0.0
    %2630 = vmatpush1.msra.mxu0 %v2588
    %2631 = vmatprep.subr.mxu0 0.0
    %2632 = vmatpush1.msra.mxu0 %v2587
    %2633 = vmatprep.subr.mxu0 0.0
    %2634 = vmatpush2.msra.mxu0 0.0
    %2635 = vmatprep.subr.mxu0 0.0
    %2636 = vmatpush2.msra.mxu0 0.0
    %2637 = vmatprep.subr.mxu0 0.0
    %2638 = vmatpush2.msra.mxu0 0.0
    %2639 = vmatprep.subr.mxu0 0.0
    %2640 = vmatpush2.msra.mxu0 0.0
    %2641 = vmatprep.subr.mxu0 0.0
    %2642 = vmatpush2.msra.mxu0 0.0
    %2643 = vmatprep.subr.mxu0 0.0
    %2644 = vmatpush2.msra.mxu0 0.0
    %2645 = vmatprep.subr.mxu0 0.0
    %2646 = vmatpush2.msra.mxu0 0.0
    %2647 = vmatprep.subr.mxu0 0.0
    %2648 = vmatpush2.msra.mxu0 0.0
    %2649 = vmatprep.subr.mxu0 0.0
    %2650 = vmatpush2.msra.mxu0 0.0
    %2651 = vmatprep.subr.mxu0 0.0
    %2652 = vmatpush2.msra.mxu0 0.0
    %2653 = vmatprep.subr.mxu0 0.0
    %2654 = vmatpush2.msra.mxu0 0.0
    %2655 = vmatprep.subr.mxu0 0.0
    %2656 = vmatpush2.msra.mxu0 0.0
    %2657 = vmatprep.subr.mxu0 0.0
    %2658 = vmatpush2.msra.mxu0 0.0
    %2659 = vmatprep.subr.mxu0 0.0
    %2660 = vmatpush2.msra.mxu0 0.0
    %2661 = vmatprep.subr.mxu0 0.0
    %2662 = vmatpush2.msra.mxu0 0.0
    %2663 = vmatprep.subr.mxu0 0.0
    %2664 = vmatpush2.msra.mxu0 0.0
    %2665 = vmatprep.mubr.f32.mxu0 0.0
    %2666 = vmatmul.mubr.f32.gmra.mxu0 %v2599
    %v2667 = vpop.f32.mrf.mxu0
    %v2668 = vadd.f32 %v2596, %v2667
    %v2669 = vpop.f32.mrf.mxu0
    %2670 = vdwg.mxu0
    %vm2671 = vcmask 17408
    %2672 = vst.msk [vmem:[#allocation4] sm:$0x3] %vm2671, %v2668
    // Predicated region
    $region74: #{casual_convtran_forward.1} parent=1 // pred_check
      _
    $region75: #{casual_convtran_forward.1} parent=1 // pred_check_branch
      %2674 = sbr.rel (0) target = $region77
    $region76: #{casual_convtran_forward.1} parent=1 // pred_region
      _
    $region77: #{casual_convtran_forward.1} parent=1 // pred_fallthru
      _
    // Predicated region
    $region78: #{casual_convtran_forward.1} parent=1 // pred_check
      _
    $region79: #{casual_convtran_forward.1} parent=1 // pred_check_branch
      %2676 = sbr.rel (0) target = $region81
    $region80: #{casual_convtran_forward.1} parent=1 // pred_region
      %s2678 = ssub.s32 32, 32
      %2679 = vsyncadd [#allocation3], %s2678
      %s2681 = sshll.u32 [#allocation2], 4
      %s2682 = int_to_ptr.vmem [resolvable:$true] %s2681
      %2684 = dma.vmem_to_hbm [thread:$0]  %s2682, 32, %s19, [#allocation3]
    $region81: #{casual_convtran_forward.1} parent=1 // pred_fallthru
      _
    // Predicated region
    $region82: #{casual_convtran_forward.1} parent=1 // pred_check
      _
    $region83: #{casual_convtran_forward.1} parent=1 // pred_check_branch
      %2686 = sbr.rel (0) target = $region85
    $region84: #{casual_convtran_forward.1} parent=1 // pred_region
      %s2688 = ssub.s32 32, 32
      %2689 = vsyncadd [#allocation5], %s2688
      %s2691 = sshll.u32 [#allocation4], 4
      %s2692 = int_to_ptr.vmem [resolvable:$true] %s2691
      %2694 = dma.vmem_to_hbm [thread:$0]  %s2692, 32, %s20, [#allocation5]
    $region85: #{casual_convtran_forward.1} parent=1 // pred_fallthru
      _
    // Predicated region
    $region86: #{casual_convtran_forward.1} parent=1 // pred_check
      _
    $region87: #{casual_convtran_forward.1} parent=1 // pred_check_branch
      %2696 = sbr.rel (0) target = $region89
    $region88: #{casual_convtran_forward.1} parent=1 // pred_region
      _
    $region89: #{casual_convtran_forward.1} parent=1 // pred_fallthru
      _
    // Predicated region
    $region90: #{casual_convtran_forward.1} parent=1 // pred_check
      _
    $region91: #{casual_convtran_forward.1} parent=1 // pred_check_branch
      %2698 = sbr.rel (0) target = $region93
    $region92: #{casual_convtran_forward.1} parent=1 // pred_region
      %2699 = dma.done [#allocation3], 32
    $region93: #{casual_convtran_forward.1} parent=1 // pred_fallthru
      _
    // Predicated region
    $region94: #{casual_convtran_forward.1} parent=1 // pred_check
      _
    $region95: #{casual_convtran_forward.1} parent=1 // pred_check_branch
      %2701 = sbr.rel (0) target = $region97
    $region96: #{casual_convtran_forward.1} parent=1 // pred_region
      %2702 = dma.done [#allocation5], 32
    $region97: #{casual_convtran_forward.1} parent=1 // pred_fallthru
      _
    %2703 = vsyncpa [#allocation3], 1
    %2704 = vsyncpa [#allocation5], 1

</llo_original>
